<compile_context>
chip_gen: v7x
topology: tpu7x:2x2x1
jax: 0.10.0
libtpu: 0.0.40
codegen_flags: <defaults>
</compile_context>

<pallas_src>
import functools

import jax
import jax.numpy as jnp
from jax.experimental import pallas as pl
from jax.experimental.pallas import tpu as pltpu

LN_EPS = 1e-5
NORM_EPS = 1e-12


def _round_up(x, m):
    return ((x + m - 1) // m) * m


def _l2_normalize(x):
    # F.normalize(p=2, dim=-1, eps=1e-12): x / max(||x||, eps)
    # == x * rsqrt(max(||x||^2, eps^2)) -> single EUP rsqrt, no divide.
    ss = jnp.sum(x * x, axis=-1, keepdims=True)
    return x * jax.lax.rsqrt(jnp.maximum(ss, NORM_EPS * NORM_EPS))


def _layer_norm(x, gamma, beta, true_h):
    """LayerNorm over the true H lanes of a (TM, Hp) tile.

    When Hp == true_h the lane mask is statically skipped (no where passes).
    In the padded case gamma/beta are zero in padded lanes, so reusing the
    masked deviation for the final normalize is exact and saves a subtract.
    """
    hp = x.shape[-1]
    inv_h = jnp.float32(1.0 / true_h)
    if hp == true_h:
        mu = jnp.sum(x, axis=-1, keepdims=True) * inv_h
        d = x - mu
        var = jnp.sum(d * d, axis=-1, keepdims=True) * inv_h
        return d * jax.lax.rsqrt(var + LN_EPS) * gamma + beta
    lane = jax.lax.broadcasted_iota(jnp.int32, (1, hp), 1)
    mask = lane < true_h
    xm = jnp.where(mask, x, 0.0)
    mu = jnp.sum(xm, axis=-1, keepdims=True) * inv_h
    d = jnp.where(mask, x - mu, 0.0)
    var = jnp.sum(d * d, axis=-1, keepdims=True) * inv_h
    return d * jax.lax.rsqrt(var + LN_EPS) * gamma + beta


def ocr_encoder_kernel(
    boxes_ref,    # (TM, 4)
    tok_ref,      # (TM, d_tok)   bf16/f32
    rec_ref,      # (TM, d_rec)
    det_ref,      # (TM, d_det)
    wf_tok_ref,   # (d_tok, Hp)   bf16
    wf_rec_ref,   # (d_rec, Hp)   bf16
    wf_det_ref,   # (d_det, Hp)   bf16
    pvec_ref,     # (16, Hp) f32: rows [wb0..wb3, bf, bb, gf, betaf, gb, betab, 0pad x6]
    out_ref,      # (TM, Hp)
    *,
    true_h,
    feat_on_vpu,
):
    pv = pvec_ref[...]
    wb = pv[0:4, :]
    bf = pv[4:5, :]
    bb = pv[5:6, :]
    gf = pv[6:7, :]
    betaf = pv[7:8, :]
    gb = pv[8:9, :]
    betab = pv[9:10, :]

    tok = _l2_normalize(tok_ref[...].astype(jnp.float32))
    rec = _l2_normalize(rec_ref[...].astype(jnp.float32))
    det = _l2_normalize(det_ref[...].astype(jnp.float32))

    if feat_on_vpu:
        # Small-K case: broadcast FMAs on the VPU beat three tiny-K MXU pushes.
        feat = bf
        for src, w_ref in ((tok, wf_tok_ref), (rec, wf_rec_ref), (det, wf_det_ref)):
            w = w_ref[...].astype(jnp.float32)
            for c in range(src.shape[-1]):
                feat = feat + src[:, c:c + 1] * w[c:c + 1, :]
    else:
        # Three bf16 MXU pushes accumulated in f32 (no lane-axis concat).
        feat = jnp.dot(tok.astype(wf_tok_ref.dtype), wf_tok_ref[...],
                       preferred_element_type=jnp.float32)
        feat = feat + jnp.dot(rec.astype(wf_rec_ref.dtype), wf_rec_ref[...],
                              preferred_element_type=jnp.float32)
        feat = feat + jnp.dot(det.astype(wf_det_ref.dtype), wf_det_ref[...],
                              preferred_element_type=jnp.float32)
        feat = feat + bf
    feat = _layer_norm(feat, gf, betaf, true_h)

    # bbox branch on the VPU: 4 broadcast FMAs instead of a K=4 MXU matmul.
    boxes = boxes_ref[...].astype(jnp.float32)
    bbox = bb + boxes[:, 0:1] * wb[0:1, :]
    bbox = bbox + boxes[:, 1:2] * wb[1:2, :]
    bbox = bbox + boxes[:, 2:3] * wb[2:3, :]
    bbox = bbox + boxes[:, 3:4] * wb[3:4, :]
    bbox = _layer_norm(bbox, gb, betab, true_h)

    out_ref[...] = (feat + bbox).astype(out_ref.dtype)


def _choose_row_tiling(n, row_tile):
    """Largest row tile (multiple of 8, <= row_tile) dividing n, preferring
    >= 2 grid steps when n allows (so v7x can use both TensorCores).
    Falls back to padding n to a multiple of 8 only when no divisor exists."""
    def pick(n_eff):
        min_steps = 2 if n_eff >= 16 else 1
        tm = min(row_tile, n_eff)
        tm = max(8, (tm // 8) * 8)
        while tm >= 8:
            if n_eff % tm == 0 and n_eff // tm >= min_steps:
                return tm
            tm -= 8
        return None

    tm = pick(n)
    if tm is not None:
        return tm, n
    n_pad = _round_up(n, 8)
    tm = pick(n_pad)
    if tm is None:
        tm = min(max(8, (row_tile // 8) * 8), n_pad)
        n_pad = _round_up(n_pad, tm)
    return tm, n_pad


def ocr_encoder_forward(ocr_boxes, ocr_token_embeddings, ocr_rec_features,
                        ocr_det_features, params, *, row_tile=512,
                        weight_dtype=jnp.bfloat16, out_dtype=jnp.float32):
    """ocr_boxes: (B,S,4); tok/rec/det: (B,S,*); returns (B,S,H) in out_dtype.

    Row inputs are passed through in their own dtype (supply bf16 for best
    HBM-bandwidth utilisation); all accumulation inside the kernel is f32.
    """
    B, S, _ = ocr_boxes.shape
    N = B * S
    d_tok = ocr_token_embeddings.shape[-1]
    d_rec = ocr_rec_features.shape[-1]
    d_det = ocr_det_features.shape[-1]
    d_tot = d_tok + d_rec + d_det
    H = params["wf"].shape[1]
    Hp = _round_up(H, 128)          # lane-dense output (unmasked vst)

    TM, N_pad = _choose_row_tiling(N, row_tile)
    grid = (N_pad // TM,)
    feat_on_vpu = d_tot <= 64       # tiny-K -> VPU; production dims -> MXU

    def rows2d(x, d):
        x = x.reshape(N, d)         # no dtype up-cast here (ship as provided)
        if N_pad != N:
            x = jnp.pad(x, ((0, N_pad - N), (0, 0)))
        return x

    boxes2 = rows2d(ocr_boxes, 4)
    tok2 = rows2d(ocr_token_embeddings, d_tok)
    rec2 = rows2d(ocr_rec_features, d_rec)
    det2 = rows2d(ocr_det_features, d_det)

    def pad_h(x, dtype):
        x = x.astype(jnp.float32)
        if Hp != H:
            x = jnp.pad(x, ((0, 0), (0, Hp - H)))   # zeros -> padded lanes stay 0
        return x.astype(dtype)

    wf = params["wf"]
    wf_tok = pad_h(wf[:d_tok], weight_dtype)
    wf_rec = pad_h(wf[d_tok:d_tok + d_rec], weight_dtype)
    wf_det = pad_h(wf[d_tok + d_rec:], weight_dtype)

    # Pack the small per-lane parameter tensors into one (16, Hp) f32 input.
    pvec = jnp.concatenate(
        [pad_h(params["wb"], jnp.float32),      # rows 0..3
         pad_h(params["bf"], jnp.float32),      # row 4
         pad_h(params["bb"], jnp.float32),      # row 5
         pad_h(params["gf"], jnp.float32),      # row 6
         pad_h(params["betaf"], jnp.float32),   # row 7
         pad_h(params["gb"], jnp.float32),      # row 8
         pad_h(params["betab"], jnp.float32),   # row 9
         jnp.zeros((6, Hp), jnp.float32)],      # pad to 16 sublanes
        axis=0)

    # --- VMEM budget / compiler params ---------------------------------
    row_bytes = (4 * ocr_boxes.dtype.itemsize
                 + d_tok * ocr_token_embeddings.dtype.itemsize
                 + d_rec * ocr_rec_features.dtype.itemsize
                 + d_det * ocr_det_features.dtype.itemsize)
    w_bytes = d_tot * Hp * jnp.dtype(weight_dtype).itemsize + 16 * Hp * 4
    out_tile_bytes = TM * Hp * jnp.dtype(out_dtype).itemsize
    # rows & output double-buffered, weights single-buffered, ~4 f32 temps.
    vmem_need = 2 * TM * row_bytes + w_bytes + 2 * out_tile_bytes + 4 * TM * Hp * 4
    try:
        vmem_cap = int(getattr(pltpu.get_tpu_info(), "vmem_capacity_bytes",
                               64 * 1024 * 1024))
    except Exception:  # pragma: no cover - info query unavailable
        vmem_cap = 64 * 1024 * 1024
    vmem_limit = int(min(max(2 * vmem_need, 32 * 1024 * 1024),
                         int(0.85 * vmem_cap)))

    flops = 2 * N_pad * (d_tot + 4) * Hp + 16 * N_pad * Hp
    bytes_accessed = (N_pad * row_bytes + w_bytes
                      + N_pad * Hp * jnp.dtype(out_dtype).itemsize)
    cost = pl.CostEstimate(flops=int(flops),
                           transcendentals=int(5 * N_pad),
                           bytes_accessed=int(bytes_accessed))

    kernel_fn = functools.partial(ocr_encoder_kernel, true_h=H,
                                  feat_on_vpu=feat_on_vpu)

    def row_spec(d):
        return pl.BlockSpec((TM, d), lambda i: (i, 0))

    def run(single_buffer_weights):
        if single_buffer_weights and hasattr(pl, "Buffered"):
            # Grid-invariant params: single-buffer -> half the VMEM footprint.
            def const_spec(shape):
                return pl.BlockSpec(shape, lambda i: (0,) * len(shape),
                                    pipeline_mode=pl.Buffered(1))
        else:
            def const_spec(shape):
                return pl.BlockSpec(shape, lambda i: (0,) * len(shape))

        call = pl.pallas_call(
            kernel_fn,
            out_shape=jax.ShapeDtypeStruct((N_pad, Hp), out_dtype),
            grid_spec=pltpu.PrefetchScalarGridSpec(
                num_scalar_prefetch=0,
                grid=grid,
                in_specs=[
                    row_spec(4),
                    row_spec(d_tok),
                    row_spec(d_rec),
                    row_spec(d_det),
                    const_spec(wf_tok.shape),
                    const_spec(wf_rec.shape),
                    const_spec(wf_det.shape),
                    const_spec(pvec.shape),
                ],
                out_specs=pl.BlockSpec((TM, Hp), lambda i: (i, 0)),
            ),
            compiler_params=pltpu.CompilerParams(
                dimension_semantics=("parallel",),
                vmem_limit_bytes=vmem_limit),
            cost_estimate=cost,
        )
        return call(boxes2, tok2, rec2, det2, wf_tok, wf_rec, wf_det, pvec)

    try:
        out = jax.block_until_ready(run(True))
    except Exception:
        # Fallback to default double-buffered params if Buffered(1) is not
        # supported by this jax/Mosaic version.
        out = jax.block_until_ready(run(False))

    if N_pad != N:
        out = out[:N]
    if Hp != H:
        out = out[:, :H]
    return out.reshape(B, S, H)


def reference_forward(ocr_boxes, tok, rec, det, params):
    def l2n(x):
        nrm = jnp.sqrt(jnp.sum(x * x, axis=-1, keepdims=True))
        return x / jnp.maximum(nrm, NORM_EPS)

    def ln(x, g, b):
        mu = jnp.mean(x, axis=-1, keepdims=True)
        var = jnp.mean((x - mu) ** 2, axis=-1, keepdims=True)
        return (x - mu) * jax.lax.rsqrt(var + LN_EPS) * g + b

    tok = l2n(tok)
    rec = l2n(rec)
    det = l2n(det)
    combined = jnp.concatenate([tok, rec, det], axis=-1)
    feat = ln(combined @ params["wf"] + params["bf"][0],
              params["gf"][0], params["betaf"][0])
    bbox = ln(ocr_boxes @ params["wb"] + params["bb"][0],
              params["gb"][0], params["betab"][0])
    return feat + bbox


if __name__ == "__main__":
    key = jax.random.PRNGKey(0)
    B, S = 2, 8
    d_tok, d_rec, d_det = 16, 16, 16
    ocr_in_dim = d_tok + d_rec + d_det
    H = 32

    keys = jax.random.split(key, 12)
    ocr_boxes = jax.random.uniform(keys[0], (B, S, 4), jnp.float32)
    # Row features shipped in bf16 (halves HBM traffic of the big streams).
    tok = jax.random.normal(keys[1], (B, S, d_tok), jnp.float32).astype(jnp.bfloat16)
    rec = jax.random.normal(keys[2], (B, S, d_rec), jnp.float32).astype(jnp.bfloat16)
    det = jax.random.normal(keys[3], (B, S, d_det), jnp.float32).astype(jnp.bfloat16)

    # Deterministic parameter init (PyTorch Linear-ish uniform bounds).
    bound_f = 1.0 / (ocr_in_dim ** 0.5)
    bound_b = 1.0 / (4 ** 0.5)
    params = {
        # stored already transposed: (in, H), so y = x @ W + b
        "wf": jax.random.uniform(keys[4], (ocr_in_dim, H), jnp.float32,
                                 -bound_f, bound_f),
        "bf": jax.random.uniform(keys[5], (1, H), jnp.float32, -bound_f, bound_f),
        "wb": jax.random.uniform(keys[6], (4, H), jnp.float32, -bound_b, bound_b),
        "bb": jax.random.uniform(keys[7], (1, H), jnp.float32, -bound_b, bound_b),
        # LayerNorm affine params (PyTorch default init: gamma=1, beta=0)
        "gf": jnp.ones((1, H), jnp.float32),
        "betaf": jnp.zeros((1, H), jnp.float32),
        "gb": jnp.ones((1, H), jnp.float32),
        "betab": jnp.zeros((1, H), jnp.float32),
    }

    out = ocr_encoder_forward(ocr_boxes, tok, rec, det, params)
    out = jax.block_until_ready(out)
    assert out.shape == (B, S, H)

    # Reference with the same bf16-quantized inputs / Wf (the kernel keeps
    # f32 accumulation, so this comparison is tight).
    tok32 = tok.astype(jnp.float32)
    rec32 = rec.astype(jnp.float32)
    det32 = det.astype(jnp.float32)
    wf_q = params["wf"].astype(jnp.bfloat16).astype(jnp.float32)
    ref = reference_forward(ocr_boxes, tok32, rec32, det32,
                            {**params, "wf": wf_q})
    assert jnp.allclose(out.astype(jnp.float32), ref, atol=5e-3, rtol=5e-3), \
        "mismatch vs reference"

    print("KERNEL_OK")
</pallas_src>

<mosaic_0001>
module attributes {stable_mosaic.version = 11 : i64} {
  func.func @ocr_encoder_kernel(%arg0: i32, %arg1: memref<8x4xf32, #tpu.memory_space<vmem>>, %arg2: memref<8x16xbf16, #tpu.memory_space<vmem>>, %arg3: memref<8x16xbf16, #tpu.memory_space<vmem>>, %arg4: memref<8x16xbf16, #tpu.memory_space<vmem>>, %arg5: memref<16x128xbf16, #tpu.memory_space<vmem>>, %arg6: memref<16x128xbf16, #tpu.memory_space<vmem>>, %arg7: memref<16x128xbf16, #tpu.memory_space<vmem>>, %arg8: memref<16x128xf32, #tpu.memory_space<vmem>>, %arg9: memref<8x128xf32, #tpu.memory_space<vmem>>) attributes {dimension_semantics = [#tpu.dimension_semantics<parallel>], iteration_bounds = array<i64: 2>, scalar_prefetch = 0 : i64, scratch_operands = 0 : i64, tpu.core_type = #tpu.core_type<tc>, window_params = [{transform_indices = @transform_0, window_bounds = array<i64: 8, 4>}, {transform_indices = @transform_1, window_bounds = array<i64: 8, 16>}, {transform_indices = @transform_2, window_bounds = array<i64: 8, 16>}, {transform_indices = @transform_3, window_bounds = array<i64: 8, 16>}, {pipeline_mode = #tpu.pipeline_mode<synchronous>, transform_indices = @transform_4, window_bounds = array<i64: 16, 128>}, {pipeline_mode = #tpu.pipeline_mode<synchronous>, transform_indices = @transform_5, window_bounds = array<i64: 16, 128>}, {pipeline_mode = #tpu.pipeline_mode<synchronous>, transform_indices = @transform_6, window_bounds = array<i64: 16, 128>}, {pipeline_mode = #tpu.pipeline_mode<synchronous>, transform_indices = @transform_7, window_bounds = array<i64: 16, 128>}, {transform_indices = @transform_8, window_bounds = array<i64: 8, 128>}]} {
    %c0 = arith.constant 0 : index
    %c0_0 = arith.constant 0 : index
    %0 = vector.load %arg8[%c0, %c0_0] : memref<16x128xf32, #tpu.memory_space<vmem>>, vector<16x128xf32>
    %1 = vector.extract_strided_slice %0 {offsets = [0, 0], sizes = [4, 128], strides = [1, 1]} : vector<16x128xf32> to vector<4x128xf32>
    %2 = vector.extract_strided_slice %0 {offsets = [4, 0], sizes = [1, 128], strides = [1, 1]} : vector<16x128xf32> to vector<1x128xf32>
    %3 = vector.extract_strided_slice %0 {offsets = [5, 0], sizes = [1, 128], strides = [1, 1]} : vector<16x128xf32> to vector<1x128xf32>
    %4 = vector.extract_strided_slice %0 {offsets = [6, 0], sizes = [1, 128], strides = [1, 1]} : vector<16x128xf32> to vector<1x128xf32>
    %5 = vector.extract_strided_slice %0 {offsets = [7, 0], sizes = [1, 128], strides = [1, 1]} : vector<16x128xf32> to vector<1x128xf32>
    %6 = vector.extract_strided_slice %0 {offsets = [8, 0], sizes = [1, 128], strides = [1, 1]} : vector<16x128xf32> to vector<1x128xf32>
    %7 = vector.extract_strided_slice %0 {offsets = [9, 0], sizes = [1, 128], strides = [1, 1]} : vector<16x128xf32> to vector<1x128xf32>
    %c0_1 = arith.constant 0 : index
    %c0_2 = arith.constant 0 : index
    %8 = vector.load %arg2[%c0_1, %c0_2] : memref<8x16xbf16, #tpu.memory_space<vmem>>, vector<8x16xbf16>
    %9 = arith.extf %8 : vector<8x16xbf16> to vector<8x16xf32>
    %10 = arith.mulf %9, %9 : vector<8x16xf32>
    %cst = arith.constant dense<0.000000e+00> : vector<8xf32>
    %11 = vector.multi_reduction <add>, %10, %cst [1] : vector<8x16xf32> to vector<8xf32>
    %12 = vector.shape_cast %11 : vector<8xf32> to vector<8x1xf32>
    %cst_3 = arith.constant 1.000000e-24 : f32
    %13 = vector.broadcast %cst_3 : f32 to vector<8x1xf32>
    %14 = arith.maximumf %12, %13 : vector<8x1xf32>
    %15 = math.rsqrt %14 : vector<8x1xf32>
    %16 = vector.broadcast %15 : vector<8x1xf32> to vector<8x16xf32>
    %17 = arith.mulf %9, %16 : vector<8x16xf32>
    %c0_4 = arith.constant 0 : index
    %c0_5 = arith.constant 0 : index
    %18 = vector.load %arg3[%c0_4, %c0_5] : memref<8x16xbf16, #tpu.memory_space<vmem>>, vector<8x16xbf16>
    %19 = arith.extf %18 : vector<8x16xbf16> to vector<8x16xf32>
    %20 = arith.mulf %19, %19 : vector<8x16xf32>
    %cst_6 = arith.constant dense<0.000000e+00> : vector<8xf32>
    %21 = vector.multi_reduction <add>, %20, %cst_6 [1] : vector<8x16xf32> to vector<8xf32>
    %22 = vector.shape_cast %21 : vector<8xf32> to vector<8x1xf32>
    %cst_7 = arith.constant 1.000000e-24 : f32
    %23 = vector.broadcast %cst_7 : f32 to vector<8x1xf32>
    %24 = arith.maximumf %22, %23 : vector<8x1xf32>
    %25 = math.rsqrt %24 : vector<8x1xf32>
    %26 = vector.broadcast %25 : vector<8x1xf32> to vector<8x16xf32>
    %27 = arith.mulf %19, %26 : vector<8x16xf32>
    %c0_8 = arith.constant 0 : index
    %c0_9 = arith.constant 0 : index
    %28 = vector.load %arg4[%c0_8, %c0_9] : memref<8x16xbf16, #tpu.memory_space<vmem>>, vector<8x16xbf16>
    %29 = arith.extf %28 : vector<8x16xbf16> to vector<8x16xf32>
    %30 = arith.mulf %29, %29 : vector<8x16xf32>
    %cst_10 = arith.constant dense<0.000000e+00> : vector<8xf32>
    %31 = vector.multi_reduction <add>, %30, %cst_10 [1] : vector<8x16xf32> to vector<8xf32>
    %32 = vector.shape_cast %31 : vector<8xf32> to vector<8x1xf32>
    %cst_11 = arith.constant 1.000000e-24 : f32
    %33 = vector.broadcast %cst_11 : f32 to vector<8x1xf32>
    %34 = arith.maximumf %32, %33 : vector<8x1xf32>
    %35 = math.rsqrt %34 : vector<8x1xf32>
    %36 = vector.broadcast %35 : vector<8x1xf32> to vector<8x16xf32>
    %37 = arith.mulf %29, %36 : vector<8x16xf32>
    %c0_12 = arith.constant 0 : index
    %c0_13 = arith.constant 0 : index
    %38 = vector.load %arg5[%c0_12, %c0_13] : memref<16x128xbf16, #tpu.memory_space<vmem>>, vector<16x128xbf16>
    %39 = arith.extf %38 : vector<16x128xbf16> to vector<16x128xf32>
    %40 = vector.extract_strided_slice %17 {offsets = [0, 0], sizes = [8, 1], strides = [1, 1]} : vector<8x16xf32> to vector<8x1xf32>
    %41 = vector.extract_strided_slice %39 {offsets = [0, 0], sizes = [1, 128], strides = [1, 1]} : vector<16x128xf32> to vector<1x128xf32>
    %42 = vector.broadcast %40 : vector<8x1xf32> to vector<8x128xf32>
    %43 = vector.broadcast %41 : vector<1x128xf32> to vector<8x128xf32>
    %44 = arith.mulf %42, %43 : vector<8x128xf32>
    %45 = vector.broadcast %2 : vector<1x128xf32> to vector<8x128xf32>
    %46 = arith.addf %45, %44 : vector<8x128xf32>
    %47 = vector.extract_strided_slice %17 {offsets = [0, 1], sizes = [8, 1], strides = [1, 1]} : vector<8x16xf32> to vector<8x1xf32>
    %48 = vector.extract_strided_slice %39 {offsets = [1, 0], sizes = [1, 128], strides = [1, 1]} : vector<16x128xf32> to vector<1x128xf32>
    %49 = vector.broadcast %47 : vector<8x1xf32> to vector<8x128xf32>
    %50 = vector.broadcast %48 : vector<1x128xf32> to vector<8x128xf32>
    %51 = arith.mulf %49, %50 : vector<8x128xf32>
    %52 = arith.addf %46, %51 : vector<8x128xf32>
    %53 = vector.extract_strided_slice %17 {offsets = [0, 2], sizes = [8, 1], strides = [1, 1]} : vector<8x16xf32> to vector<8x1xf32>
    %54 = vector.extract_strided_slice %39 {offsets = [2, 0], sizes = [1, 128], strides = [1, 1]} : vector<16x128xf32> to vector<1x128xf32>
    %55 = vector.broadcast %53 : vector<8x1xf32> to vector<8x128xf32>
    %56 = vector.broadcast %54 : vector<1x128xf32> to vector<8x128xf32>
    %57 = arith.mulf %55, %56 : vector<8x128xf32>
    %58 = arith.addf %52, %57 : vector<8x128xf32>
    %59 = vector.extract_strided_slice %17 {offsets = [0, 3], sizes = [8, 1], strides = [1, 1]} : vector<8x16xf32> to vector<8x1xf32>
    %60 = vector.extract_strided_slice %39 {offsets = [3, 0], sizes = [1, 128], strides = [1, 1]} : vector<16x128xf32> to vector<1x128xf32>
    %61 = vector.broadcast %59 : vector<8x1xf32> to vector<8x128xf32>
    %62 = vector.broadcast %60 : vector<1x128xf32> to vector<8x128xf32>
    %63 = arith.mulf %61, %62 : vector<8x128xf32>
    %64 = arith.addf %58, %63 : vector<8x128xf32>
    %65 = vector.extract_strided_slice %17 {offsets = [0, 4], sizes = [8, 1], strides = [1, 1]} : vector<8x16xf32> to vector<8x1xf32>
    %66 = vector.extract_strided_slice %39 {offsets = [4, 0], sizes = [1, 128], strides = [1, 1]} : vector<16x128xf32> to vector<1x128xf32>
    %67 = vector.broadcast %65 : vector<8x1xf32> to vector<8x128xf32>
    %68 = vector.broadcast %66 : vector<1x128xf32> to vector<8x128xf32>
    %69 = arith.mulf %67, %68 : vector<8x128xf32>
    %70 = arith.addf %64, %69 : vector<8x128xf32>
    %71 = vector.extract_strided_slice %17 {offsets = [0, 5], sizes = [8, 1], strides = [1, 1]} : vector<8x16xf32> to vector<8x1xf32>
    %72 = vector.extract_strided_slice %39 {offsets = [5, 0], sizes = [1, 128], strides = [1, 1]} : vector<16x128xf32> to vector<1x128xf32>
    %73 = vector.broadcast %71 : vector<8x1xf32> to vector<8x128xf32>
    %74 = vector.broadcast %72 : vector<1x128xf32> to vector<8x128xf32>
    %75 = arith.mulf %73, %74 : vector<8x128xf32>
    %76 = arith.addf %70, %75 : vector<8x128xf32>
    %77 = vector.extract_strided_slice %17 {offsets = [0, 6], sizes = [8, 1], strides = [1, 1]} : vector<8x16xf32> to vector<8x1xf32>
    %78 = vector.extract_strided_slice %39 {offsets = [6, 0], sizes = [1, 128], strides = [1, 1]} : vector<16x128xf32> to vector<1x128xf32>
    %79 = vector.broadcast %77 : vector<8x1xf32> to vector<8x128xf32>
    %80 = vector.broadcast %78 : vector<1x128xf32> to vector<8x128xf32>
    %81 = arith.mulf %79, %80 : vector<8x128xf32>
    %82 = arith.addf %76, %81 : vector<8x128xf32>
    %83 = vector.extract_strided_slice %17 {offsets = [0, 7], sizes = [8, 1], strides = [1, 1]} : vector<8x16xf32> to vector<8x1xf32>
    %84 = vector.extract_strided_slice %39 {offsets = [7, 0], sizes = [1, 128], strides = [1, 1]} : vector<16x128xf32> to vector<1x128xf32>
    %85 = vector.broadcast %83 : vector<8x1xf32> to vector<8x128xf32>
    %86 = vector.broadcast %84 : vector<1x128xf32> to vector<8x128xf32>
    %87 = arith.mulf %85, %86 : vector<8x128xf32>
    %88 = arith.addf %82, %87 : vector<8x128xf32>
    %89 = vector.extract_strided_slice %17 {offsets = [0, 8], sizes = [8, 1], strides = [1, 1]} : vector<8x16xf32> to vector<8x1xf32>
    %90 = vector.extract_strided_slice %39 {offsets = [8, 0], sizes = [1, 128], strides = [1, 1]} : vector<16x128xf32> to vector<1x128xf32>
    %91 = vector.broadcast %89 : vector<8x1xf32> to vector<8x128xf32>
    %92 = vector.broadcast %90 : vector<1x128xf32> to vector<8x128xf32>
    %93 = arith.mulf %91, %92 : vector<8x128xf32>
    %94 = arith.addf %88, %93 : vector<8x128xf32>
    %95 = vector.extract_strided_slice %17 {offsets = [0, 9], sizes = [8, 1], strides = [1, 1]} : vector<8x16xf32> to vector<8x1xf32>
    %96 = vector.extract_strided_slice %39 {offsets = [9, 0], sizes = [1, 128], strides = [1, 1]} : vector<16x128xf32> to vector<1x128xf32>
    %97 = vector.broadcast %95 : vector<8x1xf32> to vector<8x128xf32>
    %98 = vector.broadcast %96 : vector<1x128xf32> to vector<8x128xf32>
    %99 = arith.mulf %97, %98 : vector<8x128xf32>
    %100 = arith.addf %94, %99 : vector<8x128xf32>
    %101 = vector.extract_strided_slice %17 {offsets = [0, 10], sizes = [8, 1], strides = [1, 1]} : vector<8x16xf32> to vector<8x1xf32>
    %102 = vector.extract_strided_slice %39 {offsets = [10, 0], sizes = [1, 128], strides = [1, 1]} : vector<16x128xf32> to vector<1x128xf32>
    %103 = vector.broadcast %101 : vector<8x1xf32> to vector<8x128xf32>
    %104 = vector.broadcast %102 : vector<1x128xf32> to vector<8x128xf32>
    %105 = arith.mulf %103, %104 : vector<8x128xf32>
    %106 = arith.addf %100, %105 : vector<8x128xf32>
    %107 = vector.extract_strided_slice %17 {offsets = [0, 11], sizes = [8, 1], strides = [1, 1]} : vector<8x16xf32> to vector<8x1xf32>
    %108 = vector.extract_strided_slice %39 {offsets = [11, 0], sizes = [1, 128], strides = [1, 1]} : vector<16x128xf32> to vector<1x128xf32>
    %109 = vector.broadcast %107 : vector<8x1xf32> to vector<8x128xf32>
    %110 = vector.broadcast %108 : vector<1x128xf32> to vector<8x128xf32>
    %111 = arith.mulf %109, %110 : vector<8x128xf32>
    %112 = arith.addf %106, %111 : vector<8x128xf32>
    %113 = vector.extract_strided_slice %17 {offsets = [0, 12], sizes = [8, 1], strides = [1, 1]} : vector<8x16xf32> to vector<8x1xf32>
    %114 = vector.extract_strided_slice %39 {offsets = [12, 0], sizes = [1, 128], strides = [1, 1]} : vector<16x128xf32> to vector<1x128xf32>
    %115 = vector.broadcast %113 : vector<8x1xf32> to vector<8x128xf32>
    %116 = vector.broadcast %114 : vector<1x128xf32> to vector<8x128xf32>
    %117 = arith.mulf %115, %116 : vector<8x128xf32>
    %118 = arith.addf %112, %117 : vector<8x128xf32>
    %119 = vector.extract_strided_slice %17 {offsets = [0, 13], sizes = [8, 1], strides = [1, 1]} : vector<8x16xf32> to vector<8x1xf32>
    %120 = vector.extract_strided_slice %39 {offsets = [13, 0], sizes = [1, 128], strides = [1, 1]} : vector<16x128xf32> to vector<1x128xf32>
    %121 = vector.broadcast %119 : vector<8x1xf32> to vector<8x128xf32>
    %122 = vector.broadcast %120 : vector<1x128xf32> to vector<8x128xf32>
    %123 = arith.mulf %121, %122 : vector<8x128xf32>
    %124 = arith.addf %118, %123 : vector<8x128xf32>
    %125 = vector.extract_strided_slice %17 {offsets = [0, 14], sizes = [8, 1], strides = [1, 1]} : vector<8x16xf32> to vector<8x1xf32>
    %126 = vector.extract_strided_slice %39 {offsets = [14, 0], sizes = [1, 128], strides = [1, 1]} : vector<16x128xf32> to vector<1x128xf32>
    %127 = vector.broadcast %125 : vector<8x1xf32> to vector<8x128xf32>
    %128 = vector.broadcast %126 : vector<1x128xf32> to vector<8x128xf32>
    %129 = arith.mulf %127, %128 : vector<8x128xf32>
    %130 = arith.addf %124, %129 : vector<8x128xf32>
    %131 = vector.extract_strided_slice %17 {offsets = [0, 15], sizes = [8, 1], strides = [1, 1]} : vector<8x16xf32> to vector<8x1xf32>
    %132 = vector.extract_strided_slice %39 {offsets = [15, 0], sizes = [1, 128], strides = [1, 1]} : vector<16x128xf32> to vector<1x128xf32>
    %133 = vector.broadcast %131 : vector<8x1xf32> to vector<8x128xf32>
    %134 = vector.broadcast %132 : vector<1x128xf32> to vector<8x128xf32>
    %135 = arith.mulf %133, %134 : vector<8x128xf32>
    %136 = arith.addf %130, %135 : vector<8x128xf32>
    %c0_14 = arith.constant 0 : index
    %c0_15 = arith.constant 0 : index
    %137 = vector.load %arg6[%c0_14, %c0_15] : memref<16x128xbf16, #tpu.memory_space<vmem>>, vector<16x128xbf16>
    %138 = arith.extf %137 : vector<16x128xbf16> to vector<16x128xf32>
    %139 = vector.extract_strided_slice %27 {offsets = [0, 0], sizes = [8, 1], strides = [1, 1]} : vector<8x16xf32> to vector<8x1xf32>
    %140 = vector.extract_strided_slice %138 {offsets = [0, 0], sizes = [1, 128], strides = [1, 1]} : vector<16x128xf32> to vector<1x128xf32>
    %141 = vector.broadcast %139 : vector<8x1xf32> to vector<8x128xf32>
    %142 = vector.broadcast %140 : vector<1x128xf32> to vector<8x128xf32>
    %143 = arith.mulf %141, %142 : vector<8x128xf32>
    %144 = arith.addf %136, %143 : vector<8x128xf32>
    %145 = vector.extract_strided_slice %27 {offsets = [0, 1], sizes = [8, 1], strides = [1, 1]} : vector<8x16xf32> to vector<8x1xf32>
    %146 = vector.extract_strided_slice %138 {offsets = [1, 0], sizes = [1, 128], strides = [1, 1]} : vector<16x128xf32> to vector<1x128xf32>
    %147 = vector.broadcast %145 : vector<8x1xf32> to vector<8x128xf32>
    %148 = vector.broadcast %146 : vector<1x128xf32> to vector<8x128xf32>
    %149 = arith.mulf %147, %148 : vector<8x128xf32>
    %150 = arith.addf %144, %149 : vector<8x128xf32>
    %151 = vector.extract_strided_slice %27 {offsets = [0, 2], sizes = [8, 1], strides = [1, 1]} : vector<8x16xf32> to vector<8x1xf32>
    %152 = vector.extract_strided_slice %138 {offsets = [2, 0], sizes = [1, 128], strides = [1, 1]} : vector<16x128xf32> to vector<1x128xf32>
    %153 = vector.broadcast %151 : vector<8x1xf32> to vector<8x128xf32>
    %154 = vector.broadcast %152 : vector<1x128xf32> to vector<8x128xf32>
    %155 = arith.mulf %153, %154 : vector<8x128xf32>
    %156 = arith.addf %150, %155 : vector<8x128xf32>
    %157 = vector.extract_strided_slice %27 {offsets = [0, 3], sizes = [8, 1], strides = [1, 1]} : vector<8x16xf32> to vector<8x1xf32>
    %158 = vector.extract_strided_slice %138 {offsets = [3, 0], sizes = [1, 128], strides = [1, 1]} : vector<16x128xf32> to vector<1x128xf32>
    %159 = vector.broadcast %157 : vector<8x1xf32> to vector<8x128xf32>
    %160 = vector.broadcast %158 : vector<1x128xf32> to vector<8x128xf32>
    %161 = arith.mulf %159, %160 : vector<8x128xf32>
    %162 = arith.addf %156, %161 : vector<8x128xf32>
    %163 = vector.extract_strided_slice %27 {offsets = [0, 4], sizes = [8, 1], strides = [1, 1]} : vector<8x16xf32> to vector<8x1xf32>
    %164 = vector.extract_strided_slice %138 {offsets = [4, 0], sizes = [1, 128], strides = [1, 1]} : vector<16x128xf32> to vector<1x128xf32>
    %165 = vector.broadcast %163 : vector<8x1xf32> to vector<8x128xf32>
    %166 = vector.broadcast %164 : vector<1x128xf32> to vector<8x128xf32>
    %167 = arith.mulf %165, %166 : vector<8x128xf32>
    %168 = arith.addf %162, %167 : vector<8x128xf32>
    %169 = vector.extract_strided_slice %27 {offsets = [0, 5], sizes = [8, 1], strides = [1, 1]} : vector<8x16xf32> to vector<8x1xf32>
    %170 = vector.extract_strided_slice %138 {offsets = [5, 0], sizes = [1, 128], strides = [1, 1]} : vector<16x128xf32> to vector<1x128xf32>
    %171 = vector.broadcast %169 : vector<8x1xf32> to vector<8x128xf32>
    %172 = vector.broadcast %170 : vector<1x128xf32> to vector<8x128xf32>
    %173 = arith.mulf %171, %172 : vector<8x128xf32>
    %174 = arith.addf %168, %173 : vector<8x128xf32>
    %175 = vector.extract_strided_slice %27 {offsets = [0, 6], sizes = [8, 1], strides = [1, 1]} : vector<8x16xf32> to vector<8x1xf32>
    %176 = vector.extract_strided_slice %138 {offsets = [6, 0], sizes = [1, 128], strides = [1, 1]} : vector<16x128xf32> to vector<1x128xf32>
    %177 = vector.broadcast %175 : vector<8x1xf32> to vector<8x128xf32>
    %178 = vector.broadcast %176 : vector<1x128xf32> to vector<8x128xf32>
    %179 = arith.mulf %177, %178 : vector<8x128xf32>
    %180 = arith.addf %174, %179 : vector<8x128xf32>
    %181 = vector.extract_strided_slice %27 {offsets = [0, 7], sizes = [8, 1], strides = [1, 1]} : vector<8x16xf32> to vector<8x1xf32>
    %182 = vector.extract_strided_slice %138 {offsets = [7, 0], sizes = [1, 128], strides = [1, 1]} : vector<16x128xf32> to vector<1x128xf32>
    %183 = vector.broadcast %181 : vector<8x1xf32> to vector<8x128xf32>
    %184 = vector.broadcast %182 : vector<1x128xf32> to vector<8x128xf32>
    %185 = arith.mulf %183, %184 : vector<8x128xf32>
    %186 = arith.addf %180, %185 : vector<8x128xf32>
    %187 = vector.extract_strided_slice %27 {offsets = [0, 8], sizes = [8, 1], strides = [1, 1]} : vector<8x16xf32> to vector<8x1xf32>
    %188 = vector.extract_strided_slice %138 {offsets = [8, 0], sizes = [1, 128], strides = [1, 1]} : vector<16x128xf32> to vector<1x128xf32>
    %189 = vector.broadcast %187 : vector<8x1xf32> to vector<8x128xf32>
    %190 = vector.broadcast %188 : vector<1x128xf32> to vector<8x128xf32>
    %191 = arith.mulf %189, %190 : vector<8x128xf32>
    %192 = arith.addf %186, %191 : vector<8x128xf32>
    %193 = vector.extract_strided_slice %27 {offsets = [0, 9], sizes = [8, 1], strides = [1, 1]} : vector<8x16xf32> to vector<8x1xf32>
    %194 = vector.extract_strided_slice %138 {offsets = [9, 0], sizes = [1, 128], strides = [1, 1]} : vector<16x128xf32> to vector<1x128xf32>
    %195 = vector.broadcast %193 : vector<8x1xf32> to vector<8x128xf32>
    %196 = vector.broadcast %194 : vector<1x128xf32> to vector<8x128xf32>
    %197 = arith.mulf %195, %196 : vector<8x128xf32>
    %198 = arith.addf %192, %197 : vector<8x128xf32>
    %199 = vector.extract_strided_slice %27 {offsets = [0, 10], sizes = [8, 1], strides = [1, 1]} : vector<8x16xf32> to vector<8x1xf32>
    %200 = vector.extract_strided_slice %138 {offsets = [10, 0], sizes = [1, 128], strides = [1, 1]} : vector<16x128xf32> to vector<1x128xf32>
    %201 = vector.broadcast %199 : vector<8x1xf32> to vector<8x128xf32>
    %202 = vector.broadcast %200 : vector<1x128xf32> to vector<8x128xf32>
    %203 = arith.mulf %201, %202 : vector<8x128xf32>
    %204 = arith.addf %198, %203 : vector<8x128xf32>
    %205 = vector.extract_strided_slice %27 {offsets = [0, 11], sizes = [8, 1], strides = [1, 1]} : vector<8x16xf32> to vector<8x1xf32>
    %206 = vector.extract_strided_slice %138 {offsets = [11, 0], sizes = [1, 128], strides = [1, 1]} : vector<16x128xf32> to vector<1x128xf32>
    %207 = vector.broadcast %205 : vector<8x1xf32> to vector<8x128xf32>
    %208 = vector.broadcast %206 : vector<1x128xf32> to vector<8x128xf32>
    %209 = arith.mulf %207, %208 : vector<8x128xf32>
    %210 = arith.addf %204, %209 : vector<8x128xf32>
    %211 = vector.extract_strided_slice %27 {offsets = [0, 12], sizes = [8, 1], strides = [1, 1]} : vector<8x16xf32> to vector<8x1xf32>
    %212 = vector.extract_strided_slice %138 {offsets = [12, 0], sizes = [1, 128], strides = [1, 1]} : vector<16x128xf32> to vector<1x128xf32>
    %213 = vector.broadcast %211 : vector<8x1xf32> to vector<8x128xf32>
    %214 = vector.broadcast %212 : vector<1x128xf32> to vector<8x128xf32>
    %215 = arith.mulf %213, %214 : vector<8x128xf32>
    %216 = arith.addf %210, %215 : vector<8x128xf32>
    %217 = vector.extract_strided_slice %27 {offsets = [0, 13], sizes = [8, 1], strides = [1, 1]} : vector<8x16xf32> to vector<8x1xf32>
    %218 = vector.extract_strided_slice %138 {offsets = [13, 0], sizes = [1, 128], strides = [1, 1]} : vector<16x128xf32> to vector<1x128xf32>
    %219 = vector.broadcast %217 : vector<8x1xf32> to vector<8x128xf32>
    %220 = vector.broadcast %218 : vector<1x128xf32> to vector<8x128xf32>
    %221 = arith.mulf %219, %220 : vector<8x128xf32>
    %222 = arith.addf %216, %221 : vector<8x128xf32>
    %223 = vector.extract_strided_slice %27 {offsets = [0, 14], sizes = [8, 1], strides = [1, 1]} : vector<8x16xf32> to vector<8x1xf32>
    %224 = vector.extract_strided_slice %138 {offsets = [14, 0], sizes = [1, 128], strides = [1, 1]} : vector<16x128xf32> to vector<1x128xf32>
    %225 = vector.broadcast %223 : vector<8x1xf32> to vector<8x128xf32>
    %226 = vector.broadcast %224 : vector<1x128xf32> to vector<8x128xf32>
    %227 = arith.mulf %225, %226 : vector<8x128xf32>
    %228 = arith.addf %222, %227 : vector<8x128xf32>
    %229 = vector.extract_strided_slice %27 {offsets = [0, 15], sizes = [8, 1], strides = [1, 1]} : vector<8x16xf32> to vector<8x1xf32>
    %230 = vector.extract_strided_slice %138 {offsets = [15, 0], sizes = [1, 128], strides = [1, 1]} : vector<16x128xf32> to vector<1x128xf32>
    %231 = vector.broadcast %229 : vector<8x1xf32> to vector<8x128xf32>
    %232 = vector.broadcast %230 : vector<1x128xf32> to vector<8x128xf32>
    %233 = arith.mulf %231, %232 : vector<8x128xf32>
    %234 = arith.addf %228, %233 : vector<8x128xf32>
    %c0_16 = arith.constant 0 : index
    %c0_17 = arith.constant 0 : index
    %235 = vector.load %arg7[%c0_16, %c0_17] : memref<16x128xbf16, #tpu.memory_space<vmem>>, vector<16x128xbf16>
    %236 = arith.extf %235 : vector<16x128xbf16> to vector<16x128xf32>
    %237 = vector.extract_strided_slice %37 {offsets = [0, 0], sizes = [8, 1], strides = [1, 1]} : vector<8x16xf32> to vector<8x1xf32>
    %238 = vector.extract_strided_slice %236 {offsets = [0, 0], sizes = [1, 128], strides = [1, 1]} : vector<16x128xf32> to vector<1x128xf32>
    %239 = vector.broadcast %237 : vector<8x1xf32> to vector<8x128xf32>
    %240 = vector.broadcast %238 : vector<1x128xf32> to vector<8x128xf32>
    %241 = arith.mulf %239, %240 : vector<8x128xf32>
    %242 = arith.addf %234, %241 : vector<8x128xf32>
    %243 = vector.extract_strided_slice %37 {offsets = [0, 1], sizes = [8, 1], strides = [1, 1]} : vector<8x16xf32> to vector<8x1xf32>
    %244 = vector.extract_strided_slice %236 {offsets = [1, 0], sizes = [1, 128], strides = [1, 1]} : vector<16x128xf32> to vector<1x128xf32>
    %245 = vector.broadcast %243 : vector<8x1xf32> to vector<8x128xf32>
    %246 = vector.broadcast %244 : vector<1x128xf32> to vector<8x128xf32>
    %247 = arith.mulf %245, %246 : vector<8x128xf32>
    %248 = arith.addf %242, %247 : vector<8x128xf32>
    %249 = vector.extract_strided_slice %37 {offsets = [0, 2], sizes = [8, 1], strides = [1, 1]} : vector<8x16xf32> to vector<8x1xf32>
    %250 = vector.extract_strided_slice %236 {offsets = [2, 0], sizes = [1, 128], strides = [1, 1]} : vector<16x128xf32> to vector<1x128xf32>
    %251 = vector.broadcast %249 : vector<8x1xf32> to vector<8x128xf32>
    %252 = vector.broadcast %250 : vector<1x128xf32> to vector<8x128xf32>
    %253 = arith.mulf %251, %252 : vector<8x128xf32>
    %254 = arith.addf %248, %253 : vector<8x128xf32>
    %255 = vector.extract_strided_slice %37 {offsets = [0, 3], sizes = [8, 1], strides = [1, 1]} : vector<8x16xf32> to vector<8x1xf32>
    %256 = vector.extract_strided_slice %236 {offsets = [3, 0], sizes = [1, 128], strides = [1, 1]} : vector<16x128xf32> to vector<1x128xf32>
    %257 = vector.broadcast %255 : vector<8x1xf32> to vector<8x128xf32>
    %258 = vector.broadcast %256 : vector<1x128xf32> to vector<8x128xf32>
    %259 = arith.mulf %257, %258 : vector<8x128xf32>
    %260 = arith.addf %254, %259 : vector<8x128xf32>
    %261 = vector.extract_strided_slice %37 {offsets = [0, 4], sizes = [8, 1], strides = [1, 1]} : vector<8x16xf32> to vector<8x1xf32>
    %262 = vector.extract_strided_slice %236 {offsets = [4, 0], sizes = [1, 128], strides = [1, 1]} : vector<16x128xf32> to vector<1x128xf32>
    %263 = vector.broadcast %261 : vector<8x1xf32> to vector<8x128xf32>
    %264 = vector.broadcast %262 : vector<1x128xf32> to vector<8x128xf32>
    %265 = arith.mulf %263, %264 : vector<8x128xf32>
    %266 = arith.addf %260, %265 : vector<8x128xf32>
    %267 = vector.extract_strided_slice %37 {offsets = [0, 5], sizes = [8, 1], strides = [1, 1]} : vector<8x16xf32> to vector<8x1xf32>
    %268 = vector.extract_strided_slice %236 {offsets = [5, 0], sizes = [1, 128], strides = [1, 1]} : vector<16x128xf32> to vector<1x128xf32>
    %269 = vector.broadcast %267 : vector<8x1xf32> to vector<8x128xf32>
    %270 = vector.broadcast %268 : vector<1x128xf32> to vector<8x128xf32>
    %271 = arith.mulf %269, %270 : vector<8x128xf32>
    %272 = arith.addf %266, %271 : vector<8x128xf32>
    %273 = vector.extract_strided_slice %37 {offsets = [0, 6], sizes = [8, 1], strides = [1, 1]} : vector<8x16xf32> to vector<8x1xf32>
    %274 = vector.extract_strided_slice %236 {offsets = [6, 0], sizes = [1, 128], strides = [1, 1]} : vector<16x128xf32> to vector<1x128xf32>
    %275 = vector.broadcast %273 : vector<8x1xf32> to vector<8x128xf32>
    %276 = vector.broadcast %274 : vector<1x128xf32> to vector<8x128xf32>
    %277 = arith.mulf %275, %276 : vector<8x128xf32>
    %278 = arith.addf %272, %277 : vector<8x128xf32>
    %279 = vector.extract_strided_slice %37 {offsets = [0, 7], sizes = [8, 1], strides = [1, 1]} : vector<8x16xf32> to vector<8x1xf32>
    %280 = vector.extract_strided_slice %236 {offsets = [7, 0], sizes = [1, 128], strides = [1, 1]} : vector<16x128xf32> to vector<1x128xf32>
    %281 = vector.broadcast %279 : vector<8x1xf32> to vector<8x128xf32>
    %282 = vector.broadcast %280 : vector<1x128xf32> to vector<8x128xf32>
    %283 = arith.mulf %281, %282 : vector<8x128xf32>
    %284 = arith.addf %278, %283 : vector<8x128xf32>
    %285 = vector.extract_strided_slice %37 {offsets = [0, 8], sizes = [8, 1], strides = [1, 1]} : vector<8x16xf32> to vector<8x1xf32>
    %286 = vector.extract_strided_slice %236 {offsets = [8, 0], sizes = [1, 128], strides = [1, 1]} : vector<16x128xf32> to vector<1x128xf32>
    %287 = vector.broadcast %285 : vector<8x1xf32> to vector<8x128xf32>
    %288 = vector.broadcast %286 : vector<1x128xf32> to vector<8x128xf32>
    %289 = arith.mulf %287, %288 : vector<8x128xf32>
    %290 = arith.addf %284, %289 : vector<8x128xf32>
    %291 = vector.extract_strided_slice %37 {offsets = [0, 9], sizes = [8, 1], strides = [1, 1]} : vector<8x16xf32> to vector<8x1xf32>
    %292 = vector.extract_strided_slice %236 {offsets = [9, 0], sizes = [1, 128], strides = [1, 1]} : vector<16x128xf32> to vector<1x128xf32>
    %293 = vector.broadcast %291 : vector<8x1xf32> to vector<8x128xf32>
    %294 = vector.broadcast %292 : vector<1x128xf32> to vector<8x128xf32>
    %295 = arith.mulf %293, %294 : vector<8x128xf32>
    %296 = arith.addf %290, %295 : vector<8x128xf32>
    %297 = vector.extract_strided_slice %37 {offsets = [0, 10], sizes = [8, 1], strides = [1, 1]} : vector<8x16xf32> to vector<8x1xf32>
    %298 = vector.extract_strided_slice %236 {offsets = [10, 0], sizes = [1, 128], strides = [1, 1]} : vector<16x128xf32> to vector<1x128xf32>
    %299 = vector.broadcast %297 : vector<8x1xf32> to vector<8x128xf32>
    %300 = vector.broadcast %298 : vector<1x128xf32> to vector<8x128xf32>
    %301 = arith.mulf %299, %300 : vector<8x128xf32>
    %302 = arith.addf %296, %301 : vector<8x128xf32>
    %303 = vector.extract_strided_slice %37 {offsets = [0, 11], sizes = [8, 1], strides = [1, 1]} : vector<8x16xf32> to vector<8x1xf32>
    %304 = vector.extract_strided_slice %236 {offsets = [11, 0], sizes = [1, 128], strides = [1, 1]} : vector<16x128xf32> to vector<1x128xf32>
    %305 = vector.broadcast %303 : vector<8x1xf32> to vector<8x128xf32>
    %306 = vector.broadcast %304 : vector<1x128xf32> to vector<8x128xf32>
    %307 = arith.mulf %305, %306 : vector<8x128xf32>
    %308 = arith.addf %302, %307 : vector<8x128xf32>
    %309 = vector.extract_strided_slice %37 {offsets = [0, 12], sizes = [8, 1], strides = [1, 1]} : vector<8x16xf32> to vector<8x1xf32>
    %310 = vector.extract_strided_slice %236 {offsets = [12, 0], sizes = [1, 128], strides = [1, 1]} : vector<16x128xf32> to vector<1x128xf32>
    %311 = vector.broadcast %309 : vector<8x1xf32> to vector<8x128xf32>
    %312 = vector.broadcast %310 : vector<1x128xf32> to vector<8x128xf32>
    %313 = arith.mulf %311, %312 : vector<8x128xf32>
    %314 = arith.addf %308, %313 : vector<8x128xf32>
    %315 = vector.extract_strided_slice %37 {offsets = [0, 13], sizes = [8, 1], strides = [1, 1]} : vector<8x16xf32> to vector<8x1xf32>
    %316 = vector.extract_strided_slice %236 {offsets = [13, 0], sizes = [1, 128], strides = [1, 1]} : vector<16x128xf32> to vector<1x128xf32>
    %317 = vector.broadcast %315 : vector<8x1xf32> to vector<8x128xf32>
    %318 = vector.broadcast %316 : vector<1x128xf32> to vector<8x128xf32>
    %319 = arith.mulf %317, %318 : vector<8x128xf32>
    %320 = arith.addf %314, %319 : vector<8x128xf32>
    %321 = vector.extract_strided_slice %37 {offsets = [0, 14], sizes = [8, 1], strides = [1, 1]} : vector<8x16xf32> to vector<8x1xf32>
    %322 = vector.extract_strided_slice %236 {offsets = [14, 0], sizes = [1, 128], strides = [1, 1]} : vector<16x128xf32> to vector<1x128xf32>
    %323 = vector.broadcast %321 : vector<8x1xf32> to vector<8x128xf32>
    %324 = vector.broadcast %322 : vector<1x128xf32> to vector<8x128xf32>
    %325 = arith.mulf %323, %324 : vector<8x128xf32>
    %326 = arith.addf %320, %325 : vector<8x128xf32>
    %327 = vector.extract_strided_slice %37 {offsets = [0, 15], sizes = [8, 1], strides = [1, 1]} : vector<8x16xf32> to vector<8x1xf32>
    %328 = vector.extract_strided_slice %236 {offsets = [15, 0], sizes = [1, 128], strides = [1, 1]} : vector<16x128xf32> to vector<1x128xf32>
    %329 = vector.broadcast %327 : vector<8x1xf32> to vector<8x128xf32>
    %330 = vector.broadcast %328 : vector<1x128xf32> to vector<8x128xf32>
    %331 = arith.mulf %329, %330 : vector<8x128xf32>
    %332 = arith.addf %326, %331 : vector<8x128xf32>
    %333 = tpu.iota {dimensions = array<i32: 1>} : vector<1x128xi32>
    %c32_i32 = arith.constant 32 : i32
    %334 = vector.broadcast %c32_i32 : i32 to vector<1x128xi32>
    %335 = arith.cmpi slt, %333, %334 : vector<1x128xi32>
    %cst_18 = arith.constant 0.000000e+00 : f32
    %336 = vector.shape_cast %335 : vector<1x128xi1> to vector<1x128xi1>
    %337 = vector.broadcast %336 : vector<1x128xi1> to vector<8x128xi1>
    %338 = vector.broadcast %cst_18 : f32 to vector<8x128xf32>
    %339 = arith.select %337, %332, %338 : vector<8x128xi1>, vector<8x128xf32>
    %cst_19 = arith.constant dense<0.000000e+00> : vector<8xf32>
    %340 = vector.multi_reduction <add>, %339, %cst_19 [1] : vector<8x128xf32> to vector<8xf32>
    %341 = vector.shape_cast %340 : vector<8xf32> to vector<8x1xf32>
    %cst_20 = arith.constant 3.125000e-02 : f32
    %342 = vector.broadcast %cst_20 : f32 to vector<8x1xf32>
    %343 = arith.mulf %341, %342 : vector<8x1xf32>
    %344 = vector.broadcast %343 : vector<8x1xf32> to vector<8x128xf32>
    %345 = arith.subf %332, %344 : vector<8x128xf32>
    %cst_21 = arith.constant 0.000000e+00 : f32
    %346 = vector.shape_cast %335 : vector<1x128xi1> to vector<1x128xi1>
    %347 = vector.broadcast %346 : vector<1x128xi1> to vector<8x128xi1>
    %348 = vector.broadcast %cst_21 : f32 to vector<8x128xf32>
    %349 = arith.select %347, %345, %348 : vector<8x128xi1>, vector<8x128xf32>
    %350 = arith.mulf %349, %349 : vector<8x128xf32>
    %cst_22 = arith.constant dense<0.000000e+00> : vector<8xf32>
    %351 = vector.multi_reduction <add>, %350, %cst_22 [1] : vector<8x128xf32> to vector<8xf32>
    %352 = vector.shape_cast %351 : vector<8xf32> to vector<8x1xf32>
    %cst_23 = arith.constant 3.125000e-02 : f32
    %353 = vector.broadcast %cst_23 : f32 to vector<8x1xf32>
    %354 = arith.mulf %352, %353 : vector<8x1xf32>
    %cst_24 = arith.constant 9.99999974E-6 : f32
    %355 = vector.broadcast %cst_24 : f32 to vector<8x1xf32>
    %356 = arith.addf %354, %355 : vector<8x1xf32>
    %357 = math.rsqrt %356 : vector<8x1xf32>
    %358 = vector.broadcast %357 : vector<8x1xf32> to vector<8x128xf32>
    %359 = arith.mulf %349, %358 : vector<8x128xf32>
    %360 = vector.broadcast %4 : vector<1x128xf32> to vector<8x128xf32>
    %361 = arith.mulf %359, %360 : vector<8x128xf32>
    %362 = vector.broadcast %5 : vector<1x128xf32> to vector<8x128xf32>
    %363 = arith.addf %361, %362 : vector<8x128xf32>
    %c0_25 = arith.constant 0 : index
    %c0_26 = arith.constant 0 : index
    %364 = vector.load %arg1[%c0_25, %c0_26] : memref<8x4xf32, #tpu.memory_space<vmem>>, vector<8x4xf32>
    %365 = vector.extract_strided_slice %364 {offsets = [0, 0], sizes = [8, 1], strides = [1, 1]} : vector<8x4xf32> to vector<8x1xf32>
    %366 = vector.extract_strided_slice %1 {offsets = [0, 0], sizes = [1, 128], strides = [1, 1]} : vector<4x128xf32> to vector<1x128xf32>
    %367 = vector.broadcast %365 : vector<8x1xf32> to vector<8x128xf32>
    %368 = vector.broadcast %366 : vector<1x128xf32> to vector<8x128xf32>
    %369 = arith.mulf %367, %368 : vector<8x128xf32>
    %370 = vector.broadcast %3 : vector<1x128xf32> to vector<8x128xf32>
    %371 = arith.addf %370, %369 : vector<8x128xf32>
    %372 = vector.extract_strided_slice %364 {offsets = [0, 1], sizes = [8, 1], strides = [1, 1]} : vector<8x4xf32> to vector<8x1xf32>
    %373 = vector.extract_strided_slice %1 {offsets = [1, 0], sizes = [1, 128], strides = [1, 1]} : vector<4x128xf32> to vector<1x128xf32>
    %374 = vector.broadcast %372 : vector<8x1xf32> to vector<8x128xf32>
    %375 = vector.broadcast %373 : vector<1x128xf32> to vector<8x128xf32>
    %376 = arith.mulf %374, %375 : vector<8x128xf32>
    %377 = arith.addf %371, %376 : vector<8x128xf32>
    %378 = vector.extract_strided_slice %364 {offsets = [0, 2], sizes = [8, 1], strides = [1, 1]} : vector<8x4xf32> to vector<8x1xf32>
    %379 = vector.extract_strided_slice %1 {offsets = [2, 0], sizes = [1, 128], strides = [1, 1]} : vector<4x128xf32> to vector<1x128xf32>
    %380 = vector.broadcast %378 : vector<8x1xf32> to vector<8x128xf32>
    %381 = vector.broadcast %379 : vector<1x128xf32> to vector<8x128xf32>
    %382 = arith.mulf %380, %381 : vector<8x128xf32>
    %383 = arith.addf %377, %382 : vector<8x128xf32>
    %384 = vector.extract_strided_slice %364 {offsets = [0, 3], sizes = [8, 1], strides = [1, 1]} : vector<8x4xf32> to vector<8x1xf32>
    %385 = vector.extract_strided_slice %1 {offsets = [3, 0], sizes = [1, 128], strides = [1, 1]} : vector<4x128xf32> to vector<1x128xf32>
    %386 = vector.broadcast %384 : vector<8x1xf32> to vector<8x128xf32>
    %387 = vector.broadcast %385 : vector<1x128xf32> to vector<8x128xf32>
    %388 = arith.mulf %386, %387 : vector<8x128xf32>
    %389 = arith.addf %383, %388 : vector<8x128xf32>
    %390 = tpu.iota {dimensions = array<i32: 1>} : vector<1x128xi32>
    %c32_i32_27 = arith.constant 32 : i32
    %391 = vector.broadcast %c32_i32_27 : i32 to vector<1x128xi32>
    %392 = arith.cmpi slt, %390, %391 : vector<1x128xi32>
    %cst_28 = arith.constant 0.000000e+00 : f32
    %393 = vector.shape_cast %392 : vector<1x128xi1> to vector<1x128xi1>
    %394 = vector.broadcast %393 : vector<1x128xi1> to vector<8x128xi1>
    %395 = vector.broadcast %cst_28 : f32 to vector<8x128xf32>
    %396 = arith.select %394, %389, %395 : vector<8x128xi1>, vector<8x128xf32>
    %cst_29 = arith.constant dense<0.000000e+00> : vector<8xf32>
    %397 = vector.multi_reduction <add>, %396, %cst_29 [1] : vector<8x128xf32> to vector<8xf32>
    %398 = vector.shape_cast %397 : vector<8xf32> to vector<8x1xf32>
    %cst_30 = arith.constant 3.125000e-02 : f32
    %399 = vector.broadcast %cst_30 : f32 to vector<8x1xf32>
    %400 = arith.mulf %398, %399 : vector<8x1xf32>
    %401 = vector.broadcast %400 : vector<8x1xf32> to vector<8x128xf32>
    %402 = arith.subf %389, %401 : vector<8x128xf32>
    %cst_31 = arith.constant 0.000000e+00 : f32
    %403 = vector.shape_cast %392 : vector<1x128xi1> to vector<1x128xi1>
    %404 = vector.broadcast %403 : vector<1x128xi1> to vector<8x128xi1>
    %405 = vector.broadcast %cst_31 : f32 to vector<8x128xf32>
    %406 = arith.select %404, %402, %405 : vector<8x128xi1>, vector<8x128xf32>
    %407 = arith.mulf %406, %406 : vector<8x128xf32>
    %cst_32 = arith.constant dense<0.000000e+00> : vector<8xf32>
    %408 = vector.multi_reduction <add>, %407, %cst_32 [1] : vector<8x128xf32> to vector<8xf32>
    %409 = vector.shape_cast %408 : vector<8xf32> to vector<8x1xf32>
    %cst_33 = arith.constant 3.125000e-02 : f32
    %410 = vector.broadcast %cst_33 : f32 to vector<8x1xf32>
    %411 = arith.mulf %409, %410 : vector<8x1xf32>
    %cst_34 = arith.constant 9.99999974E-6 : f32
    %412 = vector.broadcast %cst_34 : f32 to vector<8x1xf32>
    %413 = arith.addf %411, %412 : vector<8x1xf32>
    %414 = math.rsqrt %413 : vector<8x1xf32>
    %415 = vector.broadcast %414 : vector<8x1xf32> to vector<8x128xf32>
    %416 = arith.mulf %406, %415 : vector<8x128xf32>
    %417 = vector.broadcast %6 : vector<1x128xf32> to vector<8x128xf32>
    %418 = arith.mulf %416, %417 : vector<8x128xf32>
    %419 = vector.broadcast %7 : vector<1x128xf32> to vector<8x128xf32>
    %420 = arith.addf %418, %419 : vector<8x128xf32>
    %421 = arith.addf %363, %420 : vector<8x128xf32>
    %c0_35 = arith.constant 0 : index
    %c0_36 = arith.constant 0 : index
    %422 = vector.load %arg9[%c0_35, %c0_36] : memref<8x128xf32, #tpu.memory_space<vmem>>, vector<8x128xf32>
    tpu.vector_store %arg9[%c0_35, %c0_36], %421 {strides = array<i32>} : memref<8x128xf32, #tpu.memory_space<vmem>>, vector<8x128xf32>,
    return
  }
  func.func @transform_0(%arg0: i32) -> (i32, i32) {
    %c0_i32 = arith.constant 0 : i32
    %c0_i32_0 = arith.constant 0 : i32
    return %arg0, %c0_i32 : i32, i32
  }
  func.func @transform_1(%arg0: i32) -> (i32, i32) {
    %c0_i32 = arith.constant 0 : i32
    %c0_i32_0 = arith.constant 0 : i32
    return %arg0, %c0_i32 : i32, i32
  }
  func.func @transform_2(%arg0: i32) -> (i32, i32) {
    %c0_i32 = arith.constant 0 : i32
    %c0_i32_0 = arith.constant 0 : i32
    return %arg0, %c0_i32 : i32, i32
  }
  func.func @transform_3(%arg0: i32) -> (i32, i32) {
    %c0_i32 = arith.constant 0 : i32
    %c0_i32_0 = arith.constant 0 : i32
    return %arg0, %c0_i32 : i32, i32
  }
  func.func @transform_4(%arg0: i32) -> (i32, i32) {
    %c0_i32 = arith.constant 0 : i32
    %c0_i32_0 = arith.constant 0 : i32
    %c0_i32_1 = arith.constant 0 : i32
    return %c0_i32, %c0_i32_0 : i32, i32
  }
  func.func @transform_5(%arg0: i32) -> (i32, i32) {
    %c0_i32 = arith.constant 0 : i32
    %c0_i32_0 = arith.constant 0 : i32
    %c0_i32_1 = arith.constant 0 : i32
    return %c0_i32, %c0_i32_0 : i32, i32
  }
  func.func @transform_6(%arg0: i32) -> (i32, i32) {
    %c0_i32 = arith.constant 0 : i32
    %c0_i32_0 = arith.constant 0 : i32
    %c0_i32_1 = arith.constant 0 : i32
    return %c0_i32, %c0_i32_0 : i32, i32
  }
  func.func @transform_7(%arg0: i32) -> (i32, i32) {
    %c0_i32 = arith.constant 0 : i32
    %c0_i32_0 = arith.constant 0 : i32
    %c0_i32_1 = arith.constant 0 : i32
    return %c0_i32, %c0_i32_0 : i32, i32
  }
  func.func @transform_8(%arg0: i32) -> (i32, i32) {
    %c0_i32 = arith.constant 0 : i32
    %c0_i32_0 = arith.constant 0 : i32
    return %arg0, %c0_i32 : i32, i32
  }
}

module attributes {stable_mosaic.version = 11 : i64} {
  func.func @ocr_encoder_kernel(%arg0: i32, %arg1: memref<8x4xf32, #tpu.memory_space<vmem>>, %arg2: memref<8x16xbf16, #tpu.memory_space<vmem>>, %arg3: memref<8x16xbf16, #tpu.memory_space<vmem>>, %arg4: memref<8x16xbf16, #tpu.memory_space<vmem>>, %arg5: memref<16x128xbf16, #tpu.memory_space<vmem>>, %arg6: memref<16x128xbf16, #tpu.memory_space<vmem>>, %arg7: memref<16x128xbf16, #tpu.memory_space<vmem>>, %arg8: memref<16x128xf32, #tpu.memory_space<vmem>>, %arg9: memref<8x128xf32, #tpu.memory_space<vmem>>) attributes {dimension_semantics = [#tpu.dimension_semantics<parallel>], iteration_bounds = array<i64: 2>, scalar_prefetch = 0 : i64, scratch_operands = 0 : i64, tpu.core_type = #tpu.core_type<tc>, window_params = [{transform_indices = @transform_0, window_bounds = array<i64: 8, 4>}, {transform_indices = @transform_1, window_bounds = array<i64: 8, 16>}, {transform_indices = @transform_2, window_bounds = array<i64: 8, 16>}, {transform_indices = @transform_3, window_bounds = array<i64: 8, 16>}, {pipeline_mode = #tpu.pipeline_mode<synchronous>, transform_indices = @transform_4, window_bounds = array<i64: 16, 128>}, {pipeline_mode = #tpu.pipeline_mode<synchronous>, transform_indices = @transform_5, window_bounds = array<i64: 16, 128>}, {pipeline_mode = #tpu.pipeline_mode<synchronous>, transform_indices = @transform_6, window_bounds = array<i64: 16, 128>}, {pipeline_mode = #tpu.pipeline_mode<synchronous>, transform_indices = @transform_7, window_bounds = array<i64: 16, 128>}, {transform_indices = @transform_8, window_bounds = array<i64: 8, 128>}]} {
    %c0 = arith.constant 0 : index
    %c0_0 = arith.constant 0 : index
    %0 = vector.load %arg8[%c0, %c0_0] : memref<16x128xf32, #tpu.memory_space<vmem>>, vector<16x128xf32>
    %1 = vector.extract_strided_slice %0 {offsets = [0, 0], sizes = [4, 128], strides = [1, 1]} : vector<16x128xf32> to vector<4x128xf32>
    %2 = vector.extract_strided_slice %0 {offsets = [4, 0], sizes = [1, 128], strides = [1, 1]} : vector<16x128xf32> to vector<1x128xf32>
    %3 = vector.extract_strided_slice %0 {offsets = [5, 0], sizes = [1, 128], strides = [1, 1]} : vector<16x128xf32> to vector<1x128xf32>
    %4 = vector.extract_strided_slice %0 {offsets = [6, 0], sizes = [1, 128], strides = [1, 1]} : vector<16x128xf32> to vector<1x128xf32>
    %5 = vector.extract_strided_slice %0 {offsets = [7, 0], sizes = [1, 128], strides = [1, 1]} : vector<16x128xf32> to vector<1x128xf32>
    %6 = vector.extract_strided_slice %0 {offsets = [8, 0], sizes = [1, 128], strides = [1, 1]} : vector<16x128xf32> to vector<1x128xf32>
    %7 = vector.extract_strided_slice %0 {offsets = [9, 0], sizes = [1, 128], strides = [1, 1]} : vector<16x128xf32> to vector<1x128xf32>
    %c0_1 = arith.constant 0 : index
    %c0_2 = arith.constant 0 : index
    %8 = vector.load %arg2[%c0_1, %c0_2] : memref<8x16xbf16, #tpu.memory_space<vmem>>, vector<8x16xbf16>
    %9 = arith.extf %8 : vector<8x16xbf16> to vector<8x16xf32>
    %10 = arith.mulf %9, %9 : vector<8x16xf32>
    %cst = arith.constant dense<0.000000e+00> : vector<8xf32>
    %11 = vector.multi_reduction <add>, %10, %cst [1] : vector<8x16xf32> to vector<8xf32>
    %12 = vector.shape_cast %11 : vector<8xf32> to vector<8x1xf32>
    %cst_3 = arith.constant 1.000000e-24 : f32
    %13 = vector.broadcast %cst_3 : f32 to vector<8x1xf32>
    %14 = arith.maximumf %12, %13 : vector<8x1xf32>
    %15 = math.rsqrt %14 : vector<8x1xf32>
    %16 = vector.broadcast %15 : vector<8x1xf32> to vector<8x16xf32>
    %17 = arith.mulf %9, %16 : vector<8x16xf32>
    %c0_4 = arith.constant 0 : index
    %c0_5 = arith.constant 0 : index
    %18 = vector.load %arg3[%c0_4, %c0_5] : memref<8x16xbf16, #tpu.memory_space<vmem>>, vector<8x16xbf16>
    %19 = arith.extf %18 : vector<8x16xbf16> to vector<8x16xf32>
    %20 = arith.mulf %19, %19 : vector<8x16xf32>
    %cst_6 = arith.constant dense<0.000000e+00> : vector<8xf32>
    %21 = vector.multi_reduction <add>, %20, %cst_6 [1] : vector<8x16xf32> to vector<8xf32>
    %22 = vector.shape_cast %21 : vector<8xf32> to vector<8x1xf32>
    %cst_7 = arith.constant 1.000000e-24 : f32
    %23 = vector.broadcast %cst_7 : f32 to vector<8x1xf32>
    %24 = arith.maximumf %22, %23 : vector<8x1xf32>
    %25 = math.rsqrt %24 : vector<8x1xf32>
    %26 = vector.broadcast %25 : vector<8x1xf32> to vector<8x16xf32>
    %27 = arith.mulf %19, %26 : vector<8x16xf32>
    %c0_8 = arith.constant 0 : index
    %c0_9 = arith.constant 0 : index
    %28 = vector.load %arg4[%c0_8, %c0_9] : memref<8x16xbf16, #tpu.memory_space<vmem>>, vector<8x16xbf16>
    %29 = arith.extf %28 : vector<8x16xbf16> to vector<8x16xf32>
    %30 = arith.mulf %29, %29 : vector<8x16xf32>
    %cst_10 = arith.constant dense<0.000000e+00> : vector<8xf32>
    %31 = vector.multi_reduction <add>, %30, %cst_10 [1] : vector<8x16xf32> to vector<8xf32>
    %32 = vector.shape_cast %31 : vector<8xf32> to vector<8x1xf32>
    %cst_11 = arith.constant 1.000000e-24 : f32
    %33 = vector.broadcast %cst_11 : f32 to vector<8x1xf32>
    %34 = arith.maximumf %32, %33 : vector<8x1xf32>
    %35 = math.rsqrt %34 : vector<8x1xf32>
    %36 = vector.broadcast %35 : vector<8x1xf32> to vector<8x16xf32>
    %37 = arith.mulf %29, %36 : vector<8x16xf32>
    %c0_12 = arith.constant 0 : index
    %c0_13 = arith.constant 0 : index
    %38 = vector.load %arg5[%c0_12, %c0_13] : memref<16x128xbf16, #tpu.memory_space<vmem>>, vector<16x128xbf16>
    %39 = arith.extf %38 : vector<16x128xbf16> to vector<16x128xf32>
    %40 = vector.extract_strided_slice %17 {offsets = [0, 0], sizes = [8, 1], strides = [1, 1]} : vector<8x16xf32> to vector<8x1xf32>
    %41 = vector.extract_strided_slice %39 {offsets = [0, 0], sizes = [1, 128], strides = [1, 1]} : vector<16x128xf32> to vector<1x128xf32>
    %42 = vector.broadcast %40 : vector<8x1xf32> to vector<8x128xf32>
    %43 = vector.broadcast %41 : vector<1x128xf32> to vector<8x128xf32>
    %44 = arith.mulf %42, %43 : vector<8x128xf32>
    %45 = vector.broadcast %2 : vector<1x128xf32> to vector<8x128xf32>
    %46 = arith.addf %45, %44 : vector<8x128xf32>
    %47 = vector.extract_strided_slice %17 {offsets = [0, 1], sizes = [8, 1], strides = [1, 1]} : vector<8x16xf32> to vector<8x1xf32>
    %48 = vector.extract_strided_slice %39 {offsets = [1, 0], sizes = [1, 128], strides = [1, 1]} : vector<16x128xf32> to vector<1x128xf32>
    %49 = vector.broadcast %47 : vector<8x1xf32> to vector<8x128xf32>
    %50 = vector.broadcast %48 : vector<1x128xf32> to vector<8x128xf32>
    %51 = arith.mulf %49, %50 : vector<8x128xf32>
    %52 = arith.addf %46, %51 : vector<8x128xf32>
    %53 = vector.extract_strided_slice %17 {offsets = [0, 2], sizes = [8, 1], strides = [1, 1]} : vector<8x16xf32> to vector<8x1xf32>
    %54 = vector.extract_strided_slice %39 {offsets = [2, 0], sizes = [1, 128], strides = [1, 1]} : vector<16x128xf32> to vector<1x128xf32>
    %55 = vector.broadcast %53 : vector<8x1xf32> to vector<8x128xf32>
    %56 = vector.broadcast %54 : vector<1x128xf32> to vector<8x128xf32>
    %57 = arith.mulf %55, %56 : vector<8x128xf32>
    %58 = arith.addf %52, %57 : vector<8x128xf32>
    %59 = vector.extract_strided_slice %17 {offsets = [0, 3], sizes = [8, 1], strides = [1, 1]} : vector<8x16xf32> to vector<8x1xf32>
    %60 = vector.extract_strided_slice %39 {offsets = [3, 0], sizes = [1, 128], strides = [1, 1]} : vector<16x128xf32> to vector<1x128xf32>
    %61 = vector.broadcast %59 : vector<8x1xf32> to vector<8x128xf32>
    %62 = vector.broadcast %60 : vector<1x128xf32> to vector<8x128xf32>
    %63 = arith.mulf %61, %62 : vector<8x128xf32>
    %64 = arith.addf %58, %63 : vector<8x128xf32>
    %65 = vector.extract_strided_slice %17 {offsets = [0, 4], sizes = [8, 1], strides = [1, 1]} : vector<8x16xf32> to vector<8x1xf32>
    %66 = vector.extract_strided_slice %39 {offsets = [4, 0], sizes = [1, 128], strides = [1, 1]} : vector<16x128xf32> to vector<1x128xf32>
    %67 = vector.broadcast %65 : vector<8x1xf32> to vector<8x128xf32>
    %68 = vector.broadcast %66 : vector<1x128xf32> to vector<8x128xf32>
    %69 = arith.mulf %67, %68 : vector<8x128xf32>
    %70 = arith.addf %64, %69 : vector<8x128xf32>
    %71 = vector.extract_strided_slice %17 {offsets = [0, 5], sizes = [8, 1], strides = [1, 1]} : vector<8x16xf32> to vector<8x1xf32>
    %72 = vector.extract_strided_slice %39 {offsets = [5, 0], sizes = [1, 128], strides = [1, 1]} : vector<16x128xf32> to vector<1x128xf32>
    %73 = vector.broadcast %71 : vector<8x1xf32> to vector<8x128xf32>
    %74 = vector.broadcast %72 : vector<1x128xf32> to vector<8x128xf32>
    %75 = arith.mulf %73, %74 : vector<8x128xf32>
    %76 = arith.addf %70, %75 : vector<8x128xf32>
    %77 = vector.extract_strided_slice %17 {offsets = [0, 6], sizes = [8, 1], strides = [1, 1]} : vector<8x16xf32> to vector<8x1xf32>
    %78 = vector.extract_strided_slice %39 {offsets = [6, 0], sizes = [1, 128], strides = [1, 1]} : vector<16x128xf32> to vector<1x128xf32>
    %79 = vector.broadcast %77 : vector<8x1xf32> to vector<8x128xf32>
    %80 = vector.broadcast %78 : vector<1x128xf32> to vector<8x128xf32>
    %81 = arith.mulf %79, %80 : vector<8x128xf32>
    %82 = arith.addf %76, %81 : vector<8x128xf32>
    %83 = vector.extract_strided_slice %17 {offsets = [0, 7], sizes = [8, 1], strides = [1, 1]} : vector<8x16xf32> to vector<8x1xf32>
    %84 = vector.extract_strided_slice %39 {offsets = [7, 0], sizes = [1, 128], strides = [1, 1]} : vector<16x128xf32> to vector<1x128xf32>
    %85 = vector.broadcast %83 : vector<8x1xf32> to vector<8x128xf32>
    %86 = vector.broadcast %84 : vector<1x128xf32> to vector<8x128xf32>
    %87 = arith.mulf %85, %86 : vector<8x128xf32>
    %88 = arith.addf %82, %87 : vector<8x128xf32>
    %89 = vector.extract_strided_slice %17 {offsets = [0, 8], sizes = [8, 1], strides = [1, 1]} : vector<8x16xf32> to vector<8x1xf32>
    %90 = vector.extract_strided_slice %39 {offsets = [8, 0], sizes = [1, 128], strides = [1, 1]} : vector<16x128xf32> to vector<1x128xf32>
    %91 = vector.broadcast %89 : vector<8x1xf32> to vector<8x128xf32>
    %92 = vector.broadcast %90 : vector<1x128xf32> to vector<8x128xf32>
    %93 = arith.mulf %91, %92 : vector<8x128xf32>
    %94 = arith.addf %88, %93 : vector<8x128xf32>
    %95 = vector.extract_strided_slice %17 {offsets = [0, 9], sizes = [8, 1], strides = [1, 1]} : vector<8x16xf32> to vector<8x1xf32>
    %96 = vector.extract_strided_slice %39 {offsets = [9, 0], sizes = [1, 128], strides = [1, 1]} : vector<16x128xf32> to vector<1x128xf32>
    %97 = vector.broadcast %95 : vector<8x1xf32> to vector<8x128xf32>
    %98 = vector.broadcast %96 : vector<1x128xf32> to vector<8x128xf32>
    %99 = arith.mulf %97, %98 : vector<8x128xf32>
    %100 = arith.addf %94, %99 : vector<8x128xf32>
    %101 = vector.extract_strided_slice %17 {offsets = [0, 10], sizes = [8, 1], strides = [1, 1]} : vector<8x16xf32> to vector<8x1xf32>
    %102 = vector.extract_strided_slice %39 {offsets = [10, 0], sizes = [1, 128], strides = [1, 1]} : vector<16x128xf32> to vector<1x128xf32>
    %103 = vector.broadcast %101 : vector<8x1xf32> to vector<8x128xf32>
    %104 = vector.broadcast %102 : vector<1x128xf32> to vector<8x128xf32>
    %105 = arith.mulf %103, %104 : vector<8x128xf32>
    %106 = arith.addf %100, %105 : vector<8x128xf32>
    %107 = vector.extract_strided_slice %17 {offsets = [0, 11], sizes = [8, 1], strides = [1, 1]} : vector<8x16xf32> to vector<8x1xf32>
    %108 = vector.extract_strided_slice %39 {offsets = [11, 0], sizes = [1, 128], strides = [1, 1]} : vector<16x128xf32> to vector<1x128xf32>
    %109 = vector.broadcast %107 : vector<8x1xf32> to vector<8x128xf32>
    %110 = vector.broadcast %108 : vector<1x128xf32> to vector<8x128xf32>
    %111 = arith.mulf %109, %110 : vector<8x128xf32>
    %112 = arith.addf %106, %111 : vector<8x128xf32>
    %113 = vector.extract_strided_slice %17 {offsets = [0, 12], sizes = [8, 1], strides = [1, 1]} : vector<8x16xf32> to vector<8x1xf32>
    %114 = vector.extract_strided_slice %39 {offsets = [12, 0], sizes = [1, 128], strides = [1, 1]} : vector<16x128xf32> to vector<1x128xf32>
    %115 = vector.broadcast %113 : vector<8x1xf32> to vector<8x128xf32>
    %116 = vector.broadcast %114 : vector<1x128xf32> to vector<8x128xf32>
    %117 = arith.mulf %115, %116 : vector<8x128xf32>
    %118 = arith.addf %112, %117 : vector<8x128xf32>
    %119 = vector.extract_strided_slice %17 {offsets = [0, 13], sizes = [8, 1], strides = [1, 1]} : vector<8x16xf32> to vector<8x1xf32>
    %120 = vector.extract_strided_slice %39 {offsets = [13, 0], sizes = [1, 128], strides = [1, 1]} : vector<16x128xf32> to vector<1x128xf32>
    %121 = vector.broadcast %119 : vector<8x1xf32> to vector<8x128xf32>
    %122 = vector.broadcast %120 : vector<1x128xf32> to vector<8x128xf32>
    %123 = arith.mulf %121, %122 : vector<8x128xf32>
    %124 = arith.addf %118, %123 : vector<8x128xf32>
    %125 = vector.extract_strided_slice %17 {offsets = [0, 14], sizes = [8, 1], strides = [1, 1]} : vector<8x16xf32> to vector<8x1xf32>
    %126 = vector.extract_strided_slice %39 {offsets = [14, 0], sizes = [1, 128], strides = [1, 1]} : vector<16x128xf32> to vector<1x128xf32>
    %127 = vector.broadcast %125 : vector<8x1xf32> to vector<8x128xf32>
    %128 = vector.broadcast %126 : vector<1x128xf32> to vector<8x128xf32>
    %129 = arith.mulf %127, %128 : vector<8x128xf32>
    %130 = arith.addf %124, %129 : vector<8x128xf32>
    %131 = vector.extract_strided_slice %17 {offsets = [0, 15], sizes = [8, 1], strides = [1, 1]} : vector<8x16xf32> to vector<8x1xf32>
    %132 = vector.extract_strided_slice %39 {offsets = [15, 0], sizes = [1, 128], strides = [1, 1]} : vector<16x128xf32> to vector<1x128xf32>
    %133 = vector.broadcast %131 : vector<8x1xf32> to vector<8x128xf32>
    %134 = vector.broadcast %132 : vector<1x128xf32> to vector<8x128xf32>
    %135 = arith.mulf %133, %134 : vector<8x128xf32>
    %136 = arith.addf %130, %135 : vector<8x128xf32>
    %c0_14 = arith.constant 0 : index
    %c0_15 = arith.constant 0 : index
    %137 = vector.load %arg6[%c0_14, %c0_15] : memref<16x128xbf16, #tpu.memory_space<vmem>>, vector<16x128xbf16>
    %138 = arith.extf %137 : vector<16x128xbf16> to vector<16x128xf32>
    %139 = vector.extract_strided_slice %27 {offsets = [0, 0], sizes = [8, 1], strides = [1, 1]} : vector<8x16xf32> to vector<8x1xf32>
    %140 = vector.extract_strided_slice %138 {offsets = [0, 0], sizes = [1, 128], strides = [1, 1]} : vector<16x128xf32> to vector<1x128xf32>
    %141 = vector.broadcast %139 : vector<8x1xf32> to vector<8x128xf32>
    %142 = vector.broadcast %140 : vector<1x128xf32> to vector<8x128xf32>
    %143 = arith.mulf %141, %142 : vector<8x128xf32>
    %144 = arith.addf %136, %143 : vector<8x128xf32>
    %145 = vector.extract_strided_slice %27 {offsets = [0, 1], sizes = [8, 1], strides = [1, 1]} : vector<8x16xf32> to vector<8x1xf32>
    %146 = vector.extract_strided_slice %138 {offsets = [1, 0], sizes = [1, 128], strides = [1, 1]} : vector<16x128xf32> to vector<1x128xf32>
    %147 = vector.broadcast %145 : vector<8x1xf32> to vector<8x128xf32>
    %148 = vector.broadcast %146 : vector<1x128xf32> to vector<8x128xf32>
    %149 = arith.mulf %147, %148 : vector<8x128xf32>
    %150 = arith.addf %144, %149 : vector<8x128xf32>
    %151 = vector.extract_strided_slice %27 {offsets = [0, 2], sizes = [8, 1], strides = [1, 1]} : vector<8x16xf32> to vector<8x1xf32>
    %152 = vector.extract_strided_slice %138 {offsets = [2, 0], sizes = [1, 128], strides = [1, 1]} : vector<16x128xf32> to vector<1x128xf32>
    %153 = vector.broadcast %151 : vector<8x1xf32> to vector<8x128xf32>
    %154 = vector.broadcast %152 : vector<1x128xf32> to vector<8x128xf32>
    %155 = arith.mulf %153, %154 : vector<8x128xf32>
    %156 = arith.addf %150, %155 : vector<8x128xf32>
    %157 = vector.extract_strided_slice %27 {offsets = [0, 3], sizes = [8, 1], strides = [1, 1]} : vector<8x16xf32> to vector<8x1xf32>
    %158 = vector.extract_strided_slice %138 {offsets = [3, 0], sizes = [1, 128], strides = [1, 1]} : vector<16x128xf32> to vector<1x128xf32>
    %159 = vector.broadcast %157 : vector<8x1xf32> to vector<8x128xf32>
    %160 = vector.broadcast %158 : vector<1x128xf32> to vector<8x128xf32>
    %161 = arith.mulf %159, %160 : vector<8x128xf32>
    %162 = arith.addf %156, %161 : vector<8x128xf32>
    %163 = vector.extract_strided_slice %27 {offsets = [0, 4], sizes = [8, 1], strides = [1, 1]} : vector<8x16xf32> to vector<8x1xf32>
    %164 = vector.extract_strided_slice %138 {offsets = [4, 0], sizes = [1, 128], strides = [1, 1]} : vector<16x128xf32> to vector<1x128xf32>
    %165 = vector.broadcast %163 : vector<8x1xf32> to vector<8x128xf32>
    %166 = vector.broadcast %164 : vector<1x128xf32> to vector<8x128xf32>
    %167 = arith.mulf %165, %166 : vector<8x128xf32>
    %168 = arith.addf %162, %167 : vector<8x128xf32>
    %169 = vector.extract_strided_slice %27 {offsets = [0, 5], sizes = [8, 1], strides = [1, 1]} : vector<8x16xf32> to vector<8x1xf32>
    %170 = vector.extract_strided_slice %138 {offsets = [5, 0], sizes = [1, 128], strides = [1, 1]} : vector<16x128xf32> to vector<1x128xf32>
    %171 = vector.broadcast %169 : vector<8x1xf32> to vector<8x128xf32>
    %172 = vector.broadcast %170 : vector<1x128xf32> to vector<8x128xf32>
    %173 = arith.mulf %171, %172 : vector<8x128xf32>
    %174 = arith.addf %168, %173 : vector<8x128xf32>
    %175 = vector.extract_strided_slice %27 {offsets = [0, 6], sizes = [8, 1], strides = [1, 1]} : vector<8x16xf32> to vector<8x1xf32>
    %176 = vector.extract_strided_slice %138 {offsets = [6, 0], sizes = [1, 128], strides = [1, 1]} : vector<16x128xf32> to vector<1x128xf32>
    %177 = vector.broadcast %175 : vector<8x1xf32> to vector<8x128xf32>
    %178 = vector.broadcast %176 : vector<1x128xf32> to vector<8x128xf32>
    %179 = arith.mulf %177, %178 : vector<8x128xf32>
    %180 = arith.addf %174, %179 : vector<8x128xf32>
    %181 = vector.extract_strided_slice %27 {offsets = [0, 7], sizes = [8, 1], strides = [1, 1]} : vector<8x16xf32> to vector<8x1xf32>
    %182 = vector.extract_strided_slice %138 {offsets = [7, 0], sizes = [1, 128], strides = [1, 1]} : vector<16x128xf32> to vector<1x128xf32>
    %183 = vector.broadcast %181 : vector<8x1xf32> to vector<8x128xf32>
    %184 = vector.broadcast %182 : vector<1x128xf32> to vector<8x128xf32>
    %185 = arith.mulf %183, %184 : vector<8x128xf32>
    %186 = arith.addf %180, %185 : vector<8x128xf32>
    %187 = vector.extract_strided_slice %27 {offsets = [0, 8], sizes = [8, 1], strides = [1, 1]} : vector<8x16xf32> to vector<8x1xf32>
    %188 = vector.extract_strided_slice %138 {offsets = [8, 0], sizes = [1, 128], strides = [1, 1]} : vector<16x128xf32> to vector<1x128xf32>
    %189 = vector.broadcast %187 : vector<8x1xf32> to vector<8x128xf32>
    %190 = vector.broadcast %188 : vector<1x128xf32> to vector<8x128xf32>
    %191 = arith.mulf %189, %190 : vector<8x128xf32>
    %192 = arith.addf %186, %191 : vector<8x128xf32>
    %193 = vector.extract_strided_slice %27 {offsets = [0, 9], sizes = [8, 1], strides = [1, 1]} : vector<8x16xf32> to vector<8x1xf32>
    %194 = vector.extract_strided_slice %138 {offsets = [9, 0], sizes = [1, 128], strides = [1, 1]} : vector<16x128xf32> to vector<1x128xf32>
    %195 = vector.broadcast %193 : vector<8x1xf32> to vector<8x128xf32>
    %196 = vector.broadcast %194 : vector<1x128xf32> to vector<8x128xf32>
    %197 = arith.mulf %195, %196 : vector<8x128xf32>
    %198 = arith.addf %192, %197 : vector<8x128xf32>
    %199 = vector.extract_strided_slice %27 {offsets = [0, 10], sizes = [8, 1], strides = [1, 1]} : vector<8x16xf32> to vector<8x1xf32>
    %200 = vector.extract_strided_slice %138 {offsets = [10, 0], sizes = [1, 128], strides = [1, 1]} : vector<16x128xf32> to vector<1x128xf32>
    %201 = vector.broadcast %199 : vector<8x1xf32> to vector<8x128xf32>
    %202 = vector.broadcast %200 : vector<1x128xf32> to vector<8x128xf32>
    %203 = arith.mulf %201, %202 : vector<8x128xf32>
    %204 = arith.addf %198, %203 : vector<8x128xf32>
    %205 = vector.extract_strided_slice %27 {offsets = [0, 11], sizes = [8, 1], strides = [1, 1]} : vector<8x16xf32> to vector<8x1xf32>
    %206 = vector.extract_strided_slice %138 {offsets = [11, 0], sizes = [1, 128], strides = [1, 1]} : vector<16x128xf32> to vector<1x128xf32>
    %207 = vector.broadcast %205 : vector<8x1xf32> to vector<8x128xf32>
    %208 = vector.broadcast %206 : vector<1x128xf32> to vector<8x128xf32>
    %209 = arith.mulf %207, %208 : vector<8x128xf32>
    %210 = arith.addf %204, %209 : vector<8x128xf32>
    %211 = vector.extract_strided_slice %27 {offsets = [0, 12], sizes = [8, 1], strides = [1, 1]} : vector<8x16xf32> to vector<8x1xf32>
    %212 = vector.extract_strided_slice %138 {offsets = [12, 0], sizes = [1, 128], strides = [1, 1]} : vector<16x128xf32> to vector<1x128xf32>
    %213 = vector.broadcast %211 : vector<8x1xf32> to vector<8x128xf32>
    %214 = vector.broadcast %212 : vector<1x128xf32> to vector<8x128xf32>
    %215 = arith.mulf %213, %214 : vector<8x128xf32>
    %216 = arith.addf %210, %215 : vector<8x128xf32>
    %217 = vector.extract_strided_slice %27 {offsets = [0, 13], sizes = [8, 1], strides = [1, 1]} : vector<8x16xf32> to vector<8x1xf32>
    %218 = vector.extract_strided_slice %138 {offsets = [13, 0], sizes = [1, 128], strides = [1, 1]} : vector<16x128xf32> to vector<1x128xf32>
    %219 = vector.broadcast %217 : vector<8x1xf32> to vector<8x128xf32>
    %220 = vector.broadcast %218 : vector<1x128xf32> to vector<8x128xf32>
    %221 = arith.mulf %219, %220 : vector<8x128xf32>
    %222 = arith.addf %216, %221 : vector<8x128xf32>
    %223 = vector.extract_strided_slice %27 {offsets = [0, 14], sizes = [8, 1], strides = [1, 1]} : vector<8x16xf32> to vector<8x1xf32>
    %224 = vector.extract_strided_slice %138 {offsets = [14, 0], sizes = [1, 128], strides = [1, 1]} : vector<16x128xf32> to vector<1x128xf32>
    %225 = vector.broadcast %223 : vector<8x1xf32> to vector<8x128xf32>
    %226 = vector.broadcast %224 : vector<1x128xf32> to vector<8x128xf32>
    %227 = arith.mulf %225, %226 : vector<8x128xf32>
    %228 = arith.addf %222, %227 : vector<8x128xf32>
    %229 = vector.extract_strided_slice %27 {offsets = [0, 15], sizes = [8, 1], strides = [1, 1]} : vector<8x16xf32> to vector<8x1xf32>
    %230 = vector.extract_strided_slice %138 {offsets = [15, 0], sizes = [1, 128], strides = [1, 1]} : vector<16x128xf32> to vector<1x128xf32>
    %231 = vector.broadcast %229 : vector<8x1xf32> to vector<8x128xf32>
    %232 = vector.broadcast %230 : vector<1x128xf32> to vector<8x128xf32>
    %233 = arith.mulf %231, %232 : vector<8x128xf32>
    %234 = arith.addf %228, %233 : vector<8x128xf32>
    %c0_16 = arith.constant 0 : index
    %c0_17 = arith.constant 0 : index
    %235 = vector.load %arg7[%c0_16, %c0_17] : memref<16x128xbf16, #tpu.memory_space<vmem>>, vector<16x128xbf16>
    %236 = arith.extf %235 : vector<16x128xbf16> to vector<16x128xf32>
    %237 = vector.extract_strided_slice %37 {offsets = [0, 0], sizes = [8, 1], strides = [1, 1]} : vector<8x16xf32> to vector<8x1xf32>
    %238 = vector.extract_strided_slice %236 {offsets = [0, 0], sizes = [1, 128], strides = [1, 1]} : vector<16x128xf32> to vector<1x128xf32>
    %239 = vector.broadcast %237 : vector<8x1xf32> to vector<8x128xf32>
    %240 = vector.broadcast %238 : vector<1x128xf32> to vector<8x128xf32>
    %241 = arith.mulf %239, %240 : vector<8x128xf32>
    %242 = arith.addf %234, %241 : vector<8x128xf32>
    %243 = vector.extract_strided_slice %37 {offsets = [0, 1], sizes = [8, 1], strides = [1, 1]} : vector<8x16xf32> to vector<8x1xf32>
    %244 = vector.extract_strided_slice %236 {offsets = [1, 0], sizes = [1, 128], strides = [1, 1]} : vector<16x128xf32> to vector<1x128xf32>
    %245 = vector.broadcast %243 : vector<8x1xf32> to vector<8x128xf32>
    %246 = vector.broadcast %244 : vector<1x128xf32> to vector<8x128xf32>
    %247 = arith.mulf %245, %246 : vector<8x128xf32>
    %248 = arith.addf %242, %247 : vector<8x128xf32>
    %249 = vector.extract_strided_slice %37 {offsets = [0, 2], sizes = [8, 1], strides = [1, 1]} : vector<8x16xf32> to vector<8x1xf32>
    %250 = vector.extract_strided_slice %236 {offsets = [2, 0], sizes = [1, 128], strides = [1, 1]} : vector<16x128xf32> to vector<1x128xf32>
    %251 = vector.broadcast %249 : vector<8x1xf32> to vector<8x128xf32>
    %252 = vector.broadcast %250 : vector<1x128xf32> to vector<8x128xf32>
    %253 = arith.mulf %251, %252 : vector<8x128xf32>
    %254 = arith.addf %248, %253 : vector<8x128xf32>
    %255 = vector.extract_strided_slice %37 {offsets = [0, 3], sizes = [8, 1], strides = [1, 1]} : vector<8x16xf32> to vector<8x1xf32>
    %256 = vector.extract_strided_slice %236 {offsets = [3, 0], sizes = [1, 128], strides = [1, 1]} : vector<16x128xf32> to vector<1x128xf32>
    %257 = vector.broadcast %255 : vector<8x1xf32> to vector<8x128xf32>
    %258 = vector.broadcast %256 : vector<1x128xf32> to vector<8x128xf32>
    %259 = arith.mulf %257, %258 : vector<8x128xf32>
    %260 = arith.addf %254, %259 : vector<8x128xf32>
    %261 = vector.extract_strided_slice %37 {offsets = [0, 4], sizes = [8, 1], strides = [1, 1]} : vector<8x16xf32> to vector<8x1xf32>
    %262 = vector.extract_strided_slice %236 {offsets = [4, 0], sizes = [1, 128], strides = [1, 1]} : vector<16x128xf32> to vector<1x128xf32>
    %263 = vector.broadcast %261 : vector<8x1xf32> to vector<8x128xf32>
    %264 = vector.broadcast %262 : vector<1x128xf32> to vector<8x128xf32>
    %265 = arith.mulf %263, %264 : vector<8x128xf32>
    %266 = arith.addf %260, %265 : vector<8x128xf32>
    %267 = vector.extract_strided_slice %37 {offsets = [0, 5], sizes = [8, 1], strides = [1, 1]} : vector<8x16xf32> to vector<8x1xf32>
    %268 = vector.extract_strided_slice %236 {offsets = [5, 0], sizes = [1, 128], strides = [1, 1]} : vector<16x128xf32> to vector<1x128xf32>
    %269 = vector.broadcast %267 : vector<8x1xf32> to vector<8x128xf32>
    %270 = vector.broadcast %268 : vector<1x128xf32> to vector<8x128xf32>
    %271 = arith.mulf %269, %270 : vector<8x128xf32>
    %272 = arith.addf %266, %271 : vector<8x128xf32>
    %273 = vector.extract_strided_slice %37 {offsets = [0, 6], sizes = [8, 1], strides = [1, 1]} : vector<8x16xf32> to vector<8x1xf32>
    %274 = vector.extract_strided_slice %236 {offsets = [6, 0], sizes = [1, 128], strides = [1, 1]} : vector<16x128xf32> to vector<1x128xf32>
    %275 = vector.broadcast %273 : vector<8x1xf32> to vector<8x128xf32>
    %276 = vector.broadcast %274 : vector<1x128xf32> to vector<8x128xf32>
    %277 = arith.mulf %275, %276 : vector<8x128xf32>
    %278 = arith.addf %272, %277 : vector<8x128xf32>
    %279 = vector.extract_strided_slice %37 {offsets = [0, 7], sizes = [8, 1], strides = [1, 1]} : vector<8x16xf32> to vector<8x1xf32>
    %280 = vector.extract_strided_slice %236 {offsets = [7, 0], sizes = [1, 128], strides = [1, 1]} : vector<16x128xf32> to vector<1x128xf32>
    %281 = vector.broadcast %279 : vector<8x1xf32> to vector<8x128xf32>
    %282 = vector.broadcast %280 : vector<1x128xf32> to vector<8x128xf32>
    %283 = arith.mulf %281, %282 : vector<8x128xf32>
    %284 = arith.addf %278, %283 : vector<8x128xf32>
    %285 = vector.extract_strided_slice %37 {offsets = [0, 8], sizes = [8, 1], strides = [1, 1]} : vector<8x16xf32> to vector<8x1xf32>
    %286 = vector.extract_strided_slice %236 {offsets = [8, 0], sizes = [1, 128], strides = [1, 1]} : vector<16x128xf32> to vector<1x128xf32>
    %287 = vector.broadcast %285 : vector<8x1xf32> to vector<8x128xf32>
    %288 = vector.broadcast %286 : vector<1x128xf32> to vector<8x128xf32>
    %289 = arith.mulf %287, %288 : vector<8x128xf32>
    %290 = arith.addf %284, %289 : vector<8x128xf32>
    %291 = vector.extract_strided_slice %37 {offsets = [0, 9], sizes = [8, 1], strides = [1, 1]} : vector<8x16xf32> to vector<8x1xf32>
    %292 = vector.extract_strided_slice %236 {offsets = [9, 0], sizes = [1, 128], strides = [1, 1]} : vector<16x128xf32> to vector<1x128xf32>
    %293 = vector.broadcast %291 : vector<8x1xf32> to vector<8x128xf32>
    %294 = vector.broadcast %292 : vector<1x128xf32> to vector<8x128xf32>
    %295 = arith.mulf %293, %294 : vector<8x128xf32>
    %296 = arith.addf %290, %295 : vector<8x128xf32>
    %297 = vector.extract_strided_slice %37 {offsets = [0, 10], sizes = [8, 1], strides = [1, 1]} : vector<8x16xf32> to vector<8x1xf32>
    %298 = vector.extract_strided_slice %236 {offsets = [10, 0], sizes = [1, 128], strides = [1, 1]} : vector<16x128xf32> to vector<1x128xf32>
    %299 = vector.broadcast %297 : vector<8x1xf32> to vector<8x128xf32>
    %300 = vector.broadcast %298 : vector<1x128xf32> to vector<8x128xf32>
    %301 = arith.mulf %299, %300 : vector<8x128xf32>
    %302 = arith.addf %296, %301 : vector<8x128xf32>
    %303 = vector.extract_strided_slice %37 {offsets = [0, 11], sizes = [8, 1], strides = [1, 1]} : vector<8x16xf32> to vector<8x1xf32>
    %304 = vector.extract_strided_slice %236 {offsets = [11, 0], sizes = [1, 128], strides = [1, 1]} : vector<16x128xf32> to vector<1x128xf32>
    %305 = vector.broadcast %303 : vector<8x1xf32> to vector<8x128xf32>
    %306 = vector.broadcast %304 : vector<1x128xf32> to vector<8x128xf32>
    %307 = arith.mulf %305, %306 : vector<8x128xf32>
    %308 = arith.addf %302, %307 : vector<8x128xf32>
    %309 = vector.extract_strided_slice %37 {offsets = [0, 12], sizes = [8, 1], strides = [1, 1]} : vector<8x16xf32> to vector<8x1xf32>
    %310 = vector.extract_strided_slice %236 {offsets = [12, 0], sizes = [1, 128], strides = [1, 1]} : vector<16x128xf32> to vector<1x128xf32>
    %311 = vector.broadcast %309 : vector<8x1xf32> to vector<8x128xf32>
    %312 = vector.broadcast %310 : vector<1x128xf32> to vector<8x128xf32>
    %313 = arith.mulf %311, %312 : vector<8x128xf32>
    %314 = arith.addf %308, %313 : vector<8x128xf32>
    %315 = vector.extract_strided_slice %37 {offsets = [0, 13], sizes = [8, 1], strides = [1, 1]} : vector<8x16xf32> to vector<8x1xf32>
    %316 = vector.extract_strided_slice %236 {offsets = [13, 0], sizes = [1, 128], strides = [1, 1]} : vector<16x128xf32> to vector<1x128xf32>
    %317 = vector.broadcast %315 : vector<8x1xf32> to vector<8x128xf32>
    %318 = vector.broadcast %316 : vector<1x128xf32> to vector<8x128xf32>
    %319 = arith.mulf %317, %318 : vector<8x128xf32>
    %320 = arith.addf %314, %319 : vector<8x128xf32>
    %321 = vector.extract_strided_slice %37 {offsets = [0, 14], sizes = [8, 1], strides = [1, 1]} : vector<8x16xf32> to vector<8x1xf32>
    %322 = vector.extract_strided_slice %236 {offsets = [14, 0], sizes = [1, 128], strides = [1, 1]} : vector<16x128xf32> to vector<1x128xf32>
    %323 = vector.broadcast %321 : vector<8x1xf32> to vector<8x128xf32>
    %324 = vector.broadcast %322 : vector<1x128xf32> to vector<8x128xf32>
    %325 = arith.mulf %323, %324 : vector<8x128xf32>
    %326 = arith.addf %320, %325 : vector<8x128xf32>
    %327 = vector.extract_strided_slice %37 {offsets = [0, 15], sizes = [8, 1], strides = [1, 1]} : vector<8x16xf32> to vector<8x1xf32>
    %328 = vector.extract_strided_slice %236 {offsets = [15, 0], sizes = [1, 128], strides = [1, 1]} : vector<16x128xf32> to vector<1x128xf32>
    %329 = vector.broadcast %327 : vector<8x1xf32> to vector<8x128xf32>
    %330 = vector.broadcast %328 : vector<1x128xf32> to vector<8x128xf32>
    %331 = arith.mulf %329, %330 : vector<8x128xf32>
    %332 = arith.addf %326, %331 : vector<8x128xf32>
    %333 = tpu.iota {dimensions = array<i32: 1>} : vector<1x128xi32>
    %c32_i32 = arith.constant 32 : i32
    %334 = vector.broadcast %c32_i32 : i32 to vector<1x128xi32>
    %335 = arith.cmpi slt, %333, %334 : vector<1x128xi32>
    %cst_18 = arith.constant 0.000000e+00 : f32
    %336 = vector.shape_cast %335 : vector<1x128xi1> to vector<1x128xi1>
    %337 = vector.broadcast %336 : vector<1x128xi1> to vector<8x128xi1>
    %338 = vector.broadcast %cst_18 : f32 to vector<8x128xf32>
    %339 = arith.select %337, %332, %338 : vector<8x128xi1>, vector<8x128xf32>
    %cst_19 = arith.constant dense<0.000000e+00> : vector<8xf32>
    %340 = vector.multi_reduction <add>, %339, %cst_19 [1] : vector<8x128xf32> to vector<8xf32>
    %341 = vector.shape_cast %340 : vector<8xf32> to vector<8x1xf32>
    %cst_20 = arith.constant 3.125000e-02 : f32
    %342 = vector.broadcast %cst_20 : f32 to vector<8x1xf32>
    %343 = arith.mulf %341, %342 : vector<8x1xf32>
    %344 = vector.broadcast %343 : vector<8x1xf32> to vector<8x128xf32>
    %345 = arith.subf %332, %344 : vector<8x128xf32>
    %cst_21 = arith.constant 0.000000e+00 : f32
    %346 = vector.shape_cast %335 : vector<1x128xi1> to vector<1x128xi1>
    %347 = vector.broadcast %346 : vector<1x128xi1> to vector<8x128xi1>
    %348 = vector.broadcast %cst_21 : f32 to vector<8x128xf32>
    %349 = arith.select %347, %345, %348 : vector<8x128xi1>, vector<8x128xf32>
    %350 = arith.mulf %349, %349 : vector<8x128xf32>
    %cst_22 = arith.constant dense<0.000000e+00> : vector<8xf32>
    %351 = vector.multi_reduction <add>, %350, %cst_22 [1] : vector<8x128xf32> to vector<8xf32>
    %352 = vector.shape_cast %351 : vector<8xf32> to vector<8x1xf32>
    %cst_23 = arith.constant 3.125000e-02 : f32
    %353 = vector.broadcast %cst_23 : f32 to vector<8x1xf32>
    %354 = arith.mulf %352, %353 : vector<8x1xf32>
    %cst_24 = arith.constant 9.99999974E-6 : f32
    %355 = vector.broadcast %cst_24 : f32 to vector<8x1xf32>
    %356 = arith.addf %354, %355 : vector<8x1xf32>
    %357 = math.rsqrt %356 : vector<8x1xf32>
    %358 = vector.broadcast %357 : vector<8x1xf32> to vector<8x128xf32>
    %359 = arith.mulf %349, %358 : vector<8x128xf32>
    %360 = vector.broadcast %4 : vector<1x128xf32> to vector<8x128xf32>
    %361 = arith.mulf %359, %360 : vector<8x128xf32>
    %362 = vector.broadcast %5 : vector<1x128xf32> to vector<8x128xf32>
    %363 = arith.addf %361, %362 : vector<8x128xf32>
    %c0_25 = arith.constant 0 : index
    %c0_26 = arith.constant 0 : index
    %364 = vector.load %arg1[%c0_25, %c0_26] : memref<8x4xf32, #tpu.memory_space<vmem>>, vector<8x4xf32>
    %365 = vector.extract_strided_slice %364 {offsets = [0, 0], sizes = [8, 1], strides = [1, 1]} : vector<8x4xf32> to vector<8x1xf32>
    %366 = vector.extract_strided_slice %1 {offsets = [0, 0], sizes = [1, 128], strides = [1, 1]} : vector<4x128xf32> to vector<1x128xf32>
    %367 = vector.broadcast %365 : vector<8x1xf32> to vector<8x128xf32>
    %368 = vector.broadcast %366 : vector<1x128xf32> to vector<8x128xf32>
    %369 = arith.mulf %367, %368 : vector<8x128xf32>
    %370 = vector.broadcast %3 : vector<1x128xf32> to vector<8x128xf32>
    %371 = arith.addf %370, %369 : vector<8x128xf32>
    %372 = vector.extract_strided_slice %364 {offsets = [0, 1], sizes = [8, 1], strides = [1, 1]} : vector<8x4xf32> to vector<8x1xf32>
    %373 = vector.extract_strided_slice %1 {offsets = [1, 0], sizes = [1, 128], strides = [1, 1]} : vector<4x128xf32> to vector<1x128xf32>
    %374 = vector.broadcast %372 : vector<8x1xf32> to vector<8x128xf32>
    %375 = vector.broadcast %373 : vector<1x128xf32> to vector<8x128xf32>
    %376 = arith.mulf %374, %375 : vector<8x128xf32>
    %377 = arith.addf %371, %376 : vector<8x128xf32>
    %378 = vector.extract_strided_slice %364 {offsets = [0, 2], sizes = [8, 1], strides = [1, 1]} : vector<8x4xf32> to vector<8x1xf32>
    %379 = vector.extract_strided_slice %1 {offsets = [2, 0], sizes = [1, 128], strides = [1, 1]} : vector<4x128xf32> to vector<1x128xf32>
    %380 = vector.broadcast %378 : vector<8x1xf32> to vector<8x128xf32>
    %381 = vector.broadcast %379 : vector<1x128xf32> to vector<8x128xf32>
    %382 = arith.mulf %380, %381 : vector<8x128xf32>
    %383 = arith.addf %377, %382 : vector<8x128xf32>
    %384 = vector.extract_strided_slice %364 {offsets = [0, 3], sizes = [8, 1], strides = [1, 1]} : vector<8x4xf32> to vector<8x1xf32>
    %385 = vector.extract_strided_slice %1 {offsets = [3, 0], sizes = [1, 128], strides = [1, 1]} : vector<4x128xf32> to vector<1x128xf32>
    %386 = vector.broadcast %384 : vector<8x1xf32> to vector<8x128xf32>
    %387 = vector.broadcast %385 : vector<1x128xf32> to vector<8x128xf32>
    %388 = arith.mulf %386, %387 : vector<8x128xf32>
    %389 = arith.addf %383, %388 : vector<8x128xf32>
    %390 = tpu.iota {dimensions = array<i32: 1>} : vector<1x128xi32>
    %c32_i32_27 = arith.constant 32 : i32
    %391 = vector.broadcast %c32_i32_27 : i32 to vector<1x128xi32>
    %392 = arith.cmpi slt, %390, %391 : vector<1x128xi32>
    %cst_28 = arith.constant 0.000000e+00 : f32
    %393 = vector.shape_cast %392 : vector<1x128xi1> to vector<1x128xi1>
    %394 = vector.broadcast %393 : vector<1x128xi1> to vector<8x128xi1>
    %395 = vector.broadcast %cst_28 : f32 to vector<8x128xf32>
    %396 = arith.select %394, %389, %395 : vector<8x128xi1>, vector<8x128xf32>
    %cst_29 = arith.constant dense<0.000000e+00> : vector<8xf32>
    %397 = vector.multi_reduction <add>, %396, %cst_29 [1] : vector<8x128xf32> to vector<8xf32>
    %398 = vector.shape_cast %397 : vector<8xf32> to vector<8x1xf32>
    %cst_30 = arith.constant 3.125000e-02 : f32
    %399 = vector.broadcast %cst_30 : f32 to vector<8x1xf32>
    %400 = arith.mulf %398, %399 : vector<8x1xf32>
    %401 = vector.broadcast %400 : vector<8x1xf32> to vector<8x128xf32>
    %402 = arith.subf %389, %401 : vector<8x128xf32>
    %cst_31 = arith.constant 0.000000e+00 : f32
    %403 = vector.shape_cast %392 : vector<1x128xi1> to vector<1x128xi1>
    %404 = vector.broadcast %403 : vector<1x128xi1> to vector<8x128xi1>
    %405 = vector.broadcast %cst_31 : f32 to vector<8x128xf32>
    %406 = arith.select %404, %402, %405 : vector<8x128xi1>, vector<8x128xf32>
    %407 = arith.mulf %406, %406 : vector<8x128xf32>
    %cst_32 = arith.constant dense<0.000000e+00> : vector<8xf32>
    %408 = vector.multi_reduction <add>, %407, %cst_32 [1] : vector<8x128xf32> to vector<8xf32>
    %409 = vector.shape_cast %408 : vector<8xf32> to vector<8x1xf32>
    %cst_33 = arith.constant 3.125000e-02 : f32
    %410 = vector.broadcast %cst_33 : f32 to vector<8x1xf32>
    %411 = arith.mulf %409, %410 : vector<8x1xf32>
    %cst_34 = arith.constant 9.99999974E-6 : f32
    %412 = vector.broadcast %cst_34 : f32 to vector<8x1xf32>
    %413 = arith.addf %411, %412 : vector<8x1xf32>
    %414 = math.rsqrt %413 : vector<8x1xf32>
    %415 = vector.broadcast %414 : vector<8x1xf32> to vector<8x128xf32>
    %416 = arith.mulf %406, %415 : vector<8x128xf32>
    %417 = vector.broadcast %6 : vector<1x128xf32> to vector<8x128xf32>
    %418 = arith.mulf %416, %417 : vector<8x128xf32>
    %419 = vector.broadcast %7 : vector<1x128xf32> to vector<8x128xf32>
    %420 = arith.addf %418, %419 : vector<8x128xf32>
    %421 = arith.addf %363, %420 : vector<8x128xf32>
    %c0_35 = arith.constant 0 : index
    %c0_36 = arith.constant 0 : index
    %422 = vector.load %arg9[%c0_35, %c0_36] : memref<8x128xf32, #tpu.memory_space<vmem>>, vector<8x128xf32>
    tpu.vector_store %arg9[%c0_35, %c0_36], %421 {strides = array<i32>} : memref<8x128xf32, #tpu.memory_space<vmem>>, vector<8x128xf32>,
    return
  }
  func.func @transform_0(%arg0: i32) -> (i32, i32) {
    %c0_i32 = arith.constant 0 : i32
    %c0_i32_0 = arith.constant 0 : i32
    return %arg0, %c0_i32 : i32, i32
  }
  func.func @transform_1(%arg0: i32) -> (i32, i32) {
    %c0_i32 = arith.constant 0 : i32
    %c0_i32_0 = arith.constant 0 : i32
    return %arg0, %c0_i32 : i32, i32
  }
  func.func @transform_2(%arg0: i32) -> (i32, i32) {
    %c0_i32 = arith.constant 0 : i32
    %c0_i32_0 = arith.constant 0 : i32
    return %arg0, %c0_i32 : i32, i32
  }
  func.func @transform_3(%arg0: i32) -> (i32, i32) {
    %c0_i32 = arith.constant 0 : i32
    %c0_i32_0 = arith.constant 0 : i32
    return %arg0, %c0_i32 : i32, i32
  }
  func.func @transform_4(%arg0: i32) -> (i32, i32) {
    %c0_i32 = arith.constant 0 : i32
    %c0_i32_0 = arith.constant 0 : i32
    %c0_i32_1 = arith.constant 0 : i32
    return %c0_i32, %c0_i32_0 : i32, i32
  }
  func.func @transform_5(%arg0: i32) -> (i32, i32) {
    %c0_i32 = arith.constant 0 : i32
    %c0_i32_0 = arith.constant 0 : i32
    %c0_i32_1 = arith.constant 0 : i32
    return %c0_i32, %c0_i32_0 : i32, i32
  }
  func.func @transform_6(%arg0: i32) -> (i32, i32) {
    %c0_i32 = arith.constant 0 : i32
    %c0_i32_0 = arith.constant 0 : i32
    %c0_i32_1 = arith.constant 0 : i32
    return %c0_i32, %c0_i32_0 : i32, i32
  }
  func.func @transform_7(%arg0: i32) -> (i32, i32) {
    %c0_i32 = arith.constant 0 : i32
    %c0_i32_0 = arith.constant 0 : i32
    %c0_i32_1 = arith.constant 0 : i32
    return %c0_i32, %c0_i32_0 : i32, i32
  }
  func.func @transform_8(%arg0: i32) -> (i32, i32) {
    %c0_i32 = arith.constant 0 : i32
    %c0_i32_0 = arith.constant 0 : i32
    return %arg0, %c0_i32 : i32, i32
  }
}

</mosaic_0001>

<llo_original>
// kernel: tpu_custom_call.1
$region0: #{tpu_custom_call.1}
  #allocation0 [shape = 'u32[]', space=smem, size = 0x4, offset = 0x4, fixed_abs, tag = 'smem constant byte address 0x4 - core index']
  #allocation1 [shape = 'u32[144,128]{1,0:T(1,128)}', space=vmem, size = 0x12000, scoped, tag = 'internal scratch']
  %s0 = inlined_call_operand.vmem [shape: f32[16,4], index: 0, kind: input, shape index: {}]
  %s1 = inlined_call_operand.vmem [shape: bf16[16,16], index: 1, kind: input, shape index: {}]
  %s2 = inlined_call_operand.hbm [shape: bf16[16,16], index: 2, kind: input, shape index: {}]
  %s3 = inlined_call_operand.hbm [shape: bf16[16,16], index: 3, kind: input, shape index: {}]
  %s4 = inlined_call_operand.vmem [shape: bf16[16,128], index: 4, kind: input, shape index: {}]
  %s5 = inlined_call_operand.hbm [shape: bf16[16,128], index: 5, kind: input, shape index: {}]
  %s6 = inlined_call_operand.vmem [shape: bf16[16,128], index: 6, kind: input, shape index: {}]
  %s7 = inlined_call_operand.vmem [shape: f32[16,128], index: 7, kind: input, shape index: {}]
  %s8 = inlined_call_operand.hbm [shape: f32[16,128], index: 8, kind: output, shape index: {}]
  %s9 = sld [smem:[#allocation0]]
  $region77: #{tpu_custom_call.1} parent=0
    _
  %s11 = ssub.s32 1, %s9
  %s12 = scalar_select 0, %s11, %s9
  $region1: #{tpu_custom_call.1} parent=0
    #allocation2 [shape = 'u8[4096]{0}', space=vmem, size = 0x1000, scoped, tag = 'input window, operand 2']
    #allocation3 [shape = 's32[2]{0}', space=sflag, size = 0x8, scoped, tag = 'scoped memory for tpu_custom_call.1']
    #allocation4 [shape = 's32[2]{0}', space=sflag, size = 0x8, scoped, tag = 'scoped memory for tpu_custom_call.1']
    #allocation5 [shape = 'u8[4096]{0}', space=vmem, size = 0x1000, scoped, tag = 'input window, operand 3']
    #allocation6 [shape = 's32[2]{0}', space=sflag, size = 0x8, scoped, tag = 'scoped memory for tpu_custom_call.1']
    #allocation7 [shape = 'u8[4096]{0}', space=vmem, size = 0x1000, scoped, tag = 'input window, operand 5, single buffered']
    #allocation8 [shape = 'u8[8192]{0}', space=vmem, size = 0x2000, scoped, tag = 'output window, operand 0']
    %13 = vsyncpa [#allocation3], 0
    %s14 = scalar_lea.sflag [#allocation3], 1
    %15 = vsyncpa %s14, 0
    %16 = vsyncpa [#allocation6], 0
    %s17 = scalar_lea.sflag [#allocation6], 1
    %18 = vsyncpa %s17, 0
    %19 = vsyncpa [#allocation4], 0
    %s20 = scalar_lea.sflag [#allocation4], 1
    %21 = vsyncpa %s20, 0
    loop: start=0, step=1, limit=4
    $region2: #{tpu_custom_call.1} parent=1 // loop_pre_header
      _
    $region3: #{tpu_custom_call.1} parent=1 // loop_header
      %s23 = sphi 0, %s27
      %p24 = scmp.ge.s32.totalorder %s23, 4
      %s33 = sphi 0, %s35
      %s36 = sphi 0, %s33
      %s37 = sphi 0, %s36
      %s53 = sphi 0, %s37
      %s59 = sphi 0, %s61
      %s62 = sphi 0, %s59
      %s63 = sphi 0, %s62
      %s79 = sphi 0, %s63
      %s85 = sphi 0, %s87
      %s88 = sphi 0, %s85
      %s89 = sphi 0, %s88
      %s105 = sphi 0, %s89
      %s111 = sphi 0, %s113
      %s114 = sphi 0, %s111
      %s115 = sphi 0, %s114
      %s131 = sphi 0, %s115
      %s135 = sphi 0, %s135
      %s137 = sphi 0, %s135
      %s138 = sphi 0, %s137
      %s152 = sphi 0, %s138
      %s156 = sphi 0, %s156
      %s158 = sphi 0, %s156
      %s159 = sphi 0, %s158
      %s173 = sphi 0, %s159
      %s177 = sphi 0, %s177
      %s179 = sphi 0, %s177
      %s180 = sphi 0, %s179
      %s194 = sphi 0, %s180
      %s198 = sphi 0, %s198
      %s200 = sphi 0, %s198
      %s201 = sphi 0, %s200
      %s215 = sphi 0, %s201
      %s221 = sphi 0, %s223
      %s224 = sphi 0, %s221
      %s225 = sphi 0, %s224
      %s241 = sphi 0, %s225
    $region4: #{tpu_custom_call.1} parent=1 // loop_header_branch
      %26 = sbr.rel (%p24) target = $region8
    $region5: #{tpu_custom_call.1} parent=1 // loop_body
      %s28 = ssub.s32 %s23, 1
      %s29 = ssub.s32 %s23, 2
      %s30 = sadd.s32 %s23, 1
      %s31 = ssub.s32 %s23, %s30
      %p32 = scmp.eq.s32.totalorder %s31, 0
      %s34 = sadd.s32 %s33, 1
      %s35 = scalar_select %p32, %s33, %s34
      %p38 = pneg %p32
      %p39 = scmp.eq.s32.totalorder %s23, 1
      %p40 = por %p38, %p39
      %p41 = scmp.ne.s32.totalorder %s33, %s36
      %p42 = scmp.eq.s32.totalorder %s23, 0
      %p43 = por %p41, %p42
      %p44 = scmp.ne.s32.totalorder %s33, %s36
      %p45 = scmp.eq.s32.totalorder %s28, 1
      %p46 = por %p44, %p45
      %p47 = scmp.ne.s32.totalorder %s36, %s37
      %p48 = scmp.eq.s32.totalorder %s28, 0
      %p49 = por %p47, %p48
      %p50 = scmp.ne.s32.totalorder %s36, %s37
      %p51 = scmp.eq.s32.totalorder %s29, 1
      %p52 = por %p50, %p51
      %p54 = scmp.ne.s32.totalorder %s37, %s53
      %p55 = scmp.eq.s32.totalorder %s29, 0
      %p56 = por %p54, %p55
      %s57 = ssub.s32 %s23, %s30
      %p58 = scmp.eq.s32.totalorder %s57, 0
      %s60 = sadd.s32 %s59, 1
      %s61 = scalar_select %p58, %s59, %s60
      %p64 = pneg %p58
      %p65 = scmp.eq.s32.totalorder %s23, 1
      %p66 = por %p64, %p65
      %p67 = scmp.ne.s32.totalorder %s59, %s62
      %p68 = scmp.eq.s32.totalorder %s23, 0
      %p69 = por %p67, %p68
      %p70 = scmp.ne.s32.totalorder %s59, %s62
      %p71 = scmp.eq.s32.totalorder %s28, 1
      %p72 = por %p70, %p71
      %p73 = scmp.ne.s32.totalorder %s62, %s63
      %p74 = scmp.eq.s32.totalorder %s28, 0
      %p75 = por %p73, %p74
      %p76 = scmp.ne.s32.totalorder %s62, %s63
      %p77 = scmp.eq.s32.totalorder %s29, 1
      %p78 = por %p76, %p77
      %p80 = scmp.ne.s32.totalorder %s63, %s79
      %p81 = scmp.eq.s32.totalorder %s29, 0
      %p82 = por %p80, %p81
      %s83 = ssub.s32 %s23, %s30
      %p84 = scmp.eq.s32.totalorder %s83, 0
      %s86 = sadd.s32 %s85, 1
      %s87 = scalar_select %p84, %s85, %s86
      %p90 = pneg %p84
      %p91 = scmp.eq.s32.totalorder %s23, 1
      %p92 = por %p90, %p91
      %p93 = scmp.ne.s32.totalorder %s85, %s88
      %p94 = scmp.eq.s32.totalorder %s23, 0
      %p95 = por %p93, %p94
      %p96 = scmp.ne.s32.totalorder %s85, %s88
      %p97 = scmp.eq.s32.totalorder %s28, 1
      %p98 = por %p96, %p97
      %p99 = scmp.ne.s32.totalorder %s88, %s89
      %p100 = scmp.eq.s32.totalorder %s28, 0
      %p101 = por %p99, %p100
      %p102 = scmp.ne.s32.totalorder %s88, %s89
      %p103 = scmp.eq.s32.totalorder %s29, 1
      %p104 = por %p102, %p103
      %p106 = scmp.ne.s32.totalorder %s89, %s105
      %p107 = scmp.eq.s32.totalorder %s29, 0
      %p108 = por %p106, %p107
      %s109 = ssub.s32 %s23, %s30
      %p110 = scmp.eq.s32.totalorder %s109, 0
      %s112 = sadd.s32 %s111, 1
      %s113 = scalar_select %p110, %s111, %s112
      %p116 = pneg %p110
      %p117 = scmp.eq.s32.totalorder %s23, 1
      %p118 = por %p116, %p117
      %p119 = scmp.ne.s32.totalorder %s111, %s114
      %p120 = scmp.eq.s32.totalorder %s23, 0
      %p121 = por %p119, %p120
      %p122 = scmp.ne.s32.totalorder %s111, %s114
      %p123 = scmp.eq.s32.totalorder %s28, 1
      %p124 = por %p122, %p123
      %p125 = scmp.ne.s32.totalorder %s114, %s115
      %p126 = scmp.eq.s32.totalorder %s28, 0
      %p127 = por %p125, %p126
      %p128 = scmp.ne.s32.totalorder %s114, %s115
      %p129 = scmp.eq.s32.totalorder %s29, 1
      %p130 = por %p128, %p129
      %p132 = scmp.ne.s32.totalorder %s115, %s131
      %p133 = scmp.eq.s32.totalorder %s29, 0
      %p134 = por %p132, %p133
      %s136 = sadd.s32 %s135, 1
      %p139 = scmp.eq.s32.totalorder %s23, 1
      %p140 = scmp.ne.s32.totalorder %s135, %s137
      %p141 = scmp.eq.s32.totalorder %s23, 0
      %p142 = por %p140, %p141
      %p143 = scmp.ne.s32.totalorder %s135, %s137
      %p144 = scmp.eq.s32.totalorder %s28, 1
      %p145 = por %p143, %p144
      %p146 = scmp.ne.s32.totalorder %s137, %s138
      %p147 = scmp.eq.s32.totalorder %s28, 0
      %p148 = por %p146, %p147
      %p149 = scmp.ne.s32.totalorder %s137, %s138
      %p150 = scmp.eq.s32.totalorder %s29, 1
      %p151 = por %p149, %p150
      %p153 = scmp.ne.s32.totalorder %s138, %s152
      %p154 = scmp.eq.s32.totalorder %s29, 0
      %p155 = por %p153, %p154
      %s157 = sadd.s32 %s156, 1
      %p160 = scmp.eq.s32.totalorder %s23, 1
      %p161 = scmp.ne.s32.totalorder %s156, %s158
      %p162 = scmp.eq.s32.totalorder %s23, 0
      %p163 = por %p161, %p162
      %p164 = scmp.ne.s32.totalorder %s156, %s158
      %p165 = scmp.eq.s32.totalorder %s28, 1
      %p166 = por %p164, %p165
      %p167 = scmp.ne.s32.totalorder %s158, %s159
      %p168 = scmp.eq.s32.totalorder %s28, 0
      %p169 = por %p167, %p168
      %p170 = scmp.ne.s32.totalorder %s158, %s159
      %p171 = scmp.eq.s32.totalorder %s29, 1
      %p172 = por %p170, %p171
      %p174 = scmp.ne.s32.totalorder %s159, %s173
      %p175 = scmp.eq.s32.totalorder %s29, 0
      %p176 = por %p174, %p175
      %s178 = sadd.s32 %s177, 1
      %p181 = scmp.eq.s32.totalorder %s23, 1
      %p182 = scmp.ne.s32.totalorder %s177, %s179
      %p183 = scmp.eq.s32.totalorder %s23, 0
      %p184 = por %p182, %p183
      %p185 = scmp.ne.s32.totalorder %s177, %s179
      %p186 = scmp.eq.s32.totalorder %s28, 1
      %p187 = por %p185, %p186
      %p188 = scmp.ne.s32.totalorder %s179, %s180
      %p189 = scmp.eq.s32.totalorder %s28, 0
      %p190 = por %p188, %p189
      %p191 = scmp.ne.s32.totalorder %s179, %s180
      %p192 = scmp.eq.s32.totalorder %s29, 1
      %p193 = por %p191, %p192
      %p195 = scmp.ne.s32.totalorder %s180, %s194
      %p196 = scmp.eq.s32.totalorder %s29, 0
      %p197 = por %p195, %p196
      %s199 = sadd.s32 %s198, 1
      %p202 = scmp.eq.s32.totalorder %s23, 1
      %p203 = scmp.ne.s32.totalorder %s198, %s200
      %p204 = scmp.eq.s32.totalorder %s23, 0
      %p205 = por %p203, %p204
      %p206 = scmp.ne.s32.totalorder %s198, %s200
      %p207 = scmp.eq.s32.totalorder %s28, 1
      %p208 = por %p206, %p207
      %p209 = scmp.ne.s32.totalorder %s200, %s201
      %p210 = scmp.eq.s32.totalorder %s28, 0
      %p211 = por %p209, %p210
      %p212 = scmp.ne.s32.totalorder %s200, %s201
      %p213 = scmp.eq.s32.totalorder %s29, 1
      %p214 = por %p212, %p213
      %p216 = scmp.ne.s32.totalorder %s201, %s215
      %p217 = scmp.eq.s32.totalorder %s29, 0
      %p218 = por %p216, %p217
      %s219 = ssub.s32 %s23, %s30
      %p220 = scmp.eq.s32.totalorder %s219, 0
      %s222 = sadd.s32 %s221, 1
      %s223 = scalar_select %p220, %s221, %s222
      %p226 = pneg %p220
      %p227 = scmp.eq.s32.totalorder %s23, 1
      %p228 = por %p226, %p227
      %p229 = scmp.ne.s32.totalorder %s221, %s224
      %p230 = scmp.eq.s32.totalorder %s23, 0
      %p231 = por %p229, %p230
      %p232 = scmp.ne.s32.totalorder %s221, %s224
      %p233 = scmp.eq.s32.totalorder %s28, 1
      %p234 = por %p232, %p233
      %p235 = scmp.ne.s32.totalorder %s224, %s225
      %p236 = scmp.eq.s32.totalorder %s28, 0
      %p237 = por %p235, %p236
      %p238 = scmp.ne.s32.totalorder %s224, %s225
      %p239 = scmp.eq.s32.totalorder %s29, 1
      %p240 = por %p238, %p239
      %p242 = scmp.ne.s32.totalorder %s225, %s241
      %p243 = scmp.eq.s32.totalorder %s29, 0
      %p244 = por %p242, %p243
      %p245 = scmp.le.s32.totalorder 1, %s23
      %p246 = scmp.lt.s32.totalorder %s23, 3
      %p247 = pnand %p245, %p246
      %p248 = pneg %p247
      // Predicated region
      $region9: #{tpu_custom_call.1} parent=5 // pred_check
        _
      $region10: #{tpu_custom_call.1} parent=5 // pred_check_branch
        %250 = sbr.rel (%p247) target = $region12
      $region11: #{tpu_custom_call.1} parent=5 // pred_region
        %s251 = ssub.s32 %s23, 1
        // Predicated region
        $region13: #{tpu_custom_call.1} parent=11 // pred_check
          %p252 = pneg %p148
        $region14: #{tpu_custom_call.1} parent=11 // pred_check_branch
          %254 = sbr.rel (%p252) target = $region16
        $region15: #{tpu_custom_call.1} parent=11 // pred_region
          _
        $region16: #{tpu_custom_call.1} parent=11 // pred_fallthru
          _
        // Predicated region
        $region17: #{tpu_custom_call.1} parent=11 // pred_check
          %p255 = pneg %p169
        $region18: #{tpu_custom_call.1} parent=11 // pred_check_branch
          %257 = sbr.rel (%p255) target = $region20
        $region19: #{tpu_custom_call.1} parent=11 // pred_region
          %s259 = ssub.s32 128, 128
          %260 = vsyncadd [#allocation6], %s259
          %s261 = sshll.u32 [#allocation7], 4
          %s262 = int_to_ptr.vmem [resolvable:$true] %s261
          %267 = dma.hbm_to_vmem [thread:$0]  %s5, 128, %s262, [#allocation6], 64, 64, 4
        $region20: #{tpu_custom_call.1} parent=11 // pred_fallthru
          _
        // Predicated region
        $region21: #{tpu_custom_call.1} parent=11 // pred_check
          %p268 = pneg %p190
        $region22: #{tpu_custom_call.1} parent=11 // pred_check_branch
          %270 = sbr.rel (%p268) target = $region24
        $region23: #{tpu_custom_call.1} parent=11 // pred_region
          _
        $region24: #{tpu_custom_call.1} parent=11 // pred_fallthru
          _
        // Predicated region
        $region25: #{tpu_custom_call.1} parent=11 // pred_check
          %p271 = pneg %p211
        $region26: #{tpu_custom_call.1} parent=11 // pred_check_branch
          %273 = sbr.rel (%p271) target = $region28
        $region27: #{tpu_custom_call.1} parent=11 // pred_region
          _
        $region28: #{tpu_custom_call.1} parent=11 // pred_fallthru
          _
      $region12: #{tpu_custom_call.1} parent=5 // pred_fallthru
        _
      %p274 = scmp.lt.s32.totalorder %s23, 2
      // Predicated region
      $region29: #{tpu_custom_call.1} parent=5 // pred_check
        %p275 = pneg %p274
      $region30: #{tpu_custom_call.1} parent=5 // pred_check_branch
        %277 = sbr.rel (%p275) target = $region32
      $region31: #{tpu_custom_call.1} parent=5 // pred_region
        // Predicated region
        $region33: #{tpu_custom_call.1} parent=31 // pred_check
          %p278 = pneg %p43
        $region34: #{tpu_custom_call.1} parent=31 // pred_check_branch
          %280 = sbr.rel (%p278) target = $region36
        $region35: #{tpu_custom_call.1} parent=31 // pred_region
          %p281 = scmp.lt.s32.totalorder %s23, 1
          %s282 = scalar_select %p281, %s23, 1
          %s283 = smul.addr %s282, 8
          %s284 = scalar_lea.vmem %s0, %s283
        $region36: #{tpu_custom_call.1} parent=31 // pred_fallthru
          _
        // Predicated region
        $region37: #{tpu_custom_call.1} parent=31 // pred_check
          %p285 = pneg %p69
        $region38: #{tpu_custom_call.1} parent=31 // pred_check_branch
          %287 = sbr.rel (%p285) target = $region40
        $region39: #{tpu_custom_call.1} parent=31 // pred_region
          %p288 = scmp.lt.s32.totalorder %s23, 1
          %s289 = scalar_select %p288, %s23, 1
          %s290 = smul.addr %s289, 4
          %s291 = scalar_lea.vmem %s1, %s290
        $region40: #{tpu_custom_call.1} parent=31 // pred_fallthru
          _
        // Predicated region
        $region41: #{tpu_custom_call.1} parent=31 // pred_check
          %p292 = pneg %p95
        $region42: #{tpu_custom_call.1} parent=31 // pred_check_branch
          %294 = sbr.rel (%p292) target = $region44
        $region43: #{tpu_custom_call.1} parent=31 // pred_region
          %s295 = sand.u32 %s85, 1
          %s296 = scalar_lea.sflag [#allocation3], %s295
          %s297 = sand.u32 %s85, 1
          %s298 = smul.addr %s297, 4
          %s299 = scalar_lea.vmem [#allocation2], %s298
          %s301 = ssub.s32 64, 64
          %302 = vsyncadd %s296, %s301
          %s303 = smul.addr %s23, 64
          %s304 = scalar_lea.hbm %s2, %s303
          %s306 = sshll.u32 %s299, 4
          %s307 = int_to_ptr.vmem [resolvable:$true] %s306
          %309 = dma.hbm_to_vmem [thread:$0]  %s304, 64, %s307, %s296
        $region44: #{tpu_custom_call.1} parent=31 // pred_fallthru
          _
        // Predicated region
        $region45: #{tpu_custom_call.1} parent=31 // pred_check
          %p310 = pneg %p121
        $region46: #{tpu_custom_call.1} parent=31 // pred_check_branch
          %312 = sbr.rel (%p310) target = $region48
        $region47: #{tpu_custom_call.1} parent=31 // pred_region
          %s313 = sand.u32 %s23, 1
          %s314 = scalar_lea.sflag [#allocation6], %s313
          %s315 = sand.u32 %s111, 1
          %s316 = smul.addr %s315, 4
          %s317 = scalar_lea.vmem [#allocation5], %s316
          %s319 = ssub.s32 64, 64
          %320 = vsyncadd %s314, %s319
          %s321 = smul.addr %s23, 64
          %s322 = scalar_lea.hbm %s3, %s321
          %s324 = sshll.u32 %s317, 4
          %s325 = int_to_ptr.vmem [resolvable:$true] %s324
          %327 = dma.hbm_to_vmem [thread:$0]  %s322, 64, %s325, %s314
        $region48: #{tpu_custom_call.1} parent=31 // pred_fallthru
          _
      $region32: #{tpu_custom_call.1} parent=5 // pred_fallthru
        _
      %p328 = scmp.le.s32.totalorder 1, %s23
      %p329 = scmp.lt.s32.totalorder %s23, 3
      %p330 = pnand %p328, %p329
      %p331 = pneg %p330
      // Predicated region
      $region49: #{tpu_custom_call.1} parent=5 // pred_check
        _
      $region50: #{tpu_custom_call.1} parent=5 // pred_check_branch
        %333 = sbr.rel (%p330) target = $region52
      $region51: #{tpu_custom_call.1} parent=5 // pred_region
        %s334 = ssub.s32 %s23, 1
        %s335 = sand.u32 %s88, 1
        %s336 = scalar_lea.sflag [#allocation3], %s335
        %s337 = sand.u32 %s88, 1
        %s338 = smul.addr %s337, 4
        %s339 = scalar_lea.vmem [#allocation2], %s338
        // Predicated region
        $region53: #{tpu_custom_call.1} parent=51 // pred_check
          %p340 = pneg %p101
        $region54: #{tpu_custom_call.1} parent=51 // pred_check_branch
          %342 = sbr.rel (%p340) target = $region56
        $region55: #{tpu_custom_call.1} parent=51 // pred_region
          %343 = dma.done %s336, 64
        $region56: #{tpu_custom_call.1} parent=51 // pred_fallthru
          _
        %s344 = sand.u32 %s28, 1
        %s345 = scalar_lea.sflag [#allocation6], %s344
        %s346 = sand.u32 %s114, 1
        %s347 = smul.addr %s346, 4
        %s348 = scalar_lea.vmem [#allocation5], %s347
        // Predicated region
        $region57: #{tpu_custom_call.1} parent=51 // pred_check
          %p349 = pneg %p127
        $region58: #{tpu_custom_call.1} parent=51 // pred_check_branch
          %351 = sbr.rel (%p349) target = $region60
        $region59: #{tpu_custom_call.1} parent=51 // pred_region
          %352 = dma.done %s345, 64
        $region60: #{tpu_custom_call.1} parent=51 // pred_fallthru
          _
        // Predicated region
        $region61: #{tpu_custom_call.1} parent=51 // pred_check
          %p353 = pneg %p169
        $region62: #{tpu_custom_call.1} parent=51 // pred_check_branch
          %355 = sbr.rel (%p353) target = $region64
        $region63: #{tpu_custom_call.1} parent=51 // pred_region
          %356 = dma.done [#allocation6], 128
        $region64: #{tpu_custom_call.1} parent=51 // pred_fallthru
          _
        %p357 = scmp.lt.s32.totalorder %s28, 1
        %s358 = scalar_select %p357, %s28, 1
        %s359 = smul.addr %s358, 8
        %s360 = scalar_lea.vmem %s0, %s359
        %p361 = pneg %p49
        %p362 = pneg %p46
        %p363 = scmp.lt.s32.totalorder %s28, 1
        %s364 = scalar_select %p363, %s28, 1
        %s365 = smul.addr %s364, 4
        %s366 = scalar_lea.vmem %s1, %s365
        %p367 = pneg %p75
        %p368 = pneg %p72
        %s369 = sand.u32 %s88, 1
        %s370 = scalar_lea.sflag [#allocation3], %s369
        %s371 = sand.u32 %s88, 1
        %s372 = smul.addr %s371, 4
        %s373 = scalar_lea.vmem [#allocation2], %s372
        %p374 = pneg %p101
        %p375 = pneg %p98
        %s376 = sand.u32 %s28, 1
        %s377 = scalar_lea.sflag [#allocation6], %s376
        %s378 = sand.u32 %s114, 1
        %s379 = smul.addr %s378, 4
        %s380 = scalar_lea.vmem [#allocation5], %s379
        %p381 = pneg %p127
        %p382 = pneg %p124
        %p383 = pneg %p148
        %p384 = pneg %p145
        %p385 = pneg %p169
        %p386 = pneg %p166
        %p387 = pneg %p190
        %p388 = pneg %p187
        %p389 = pneg %p211
        %p390 = pneg %p208
        %p391 = pneg %p237
        %p392 = pneg %p234
        %s393 = sand.u32 %s224, 1
        %s394 = scalar_lea.sflag [#allocation4], %s393
        %s395 = sand.u32 %s224, 1
        %s396 = smul.addr %s395, 8
        %s397 = scalar_lea.vmem [#allocation8], %s396
        %p398 = scmp.lt.s32.totalorder %s28, 1
        %s399 = scalar_select %p398, %s28, 1
        %s400 = smul.addr %s399, 8
        %s401 = scalar_lea.vmem %s0, %s400
        %p402 = scmp.lt.s32.totalorder %s28, 1
        %s403 = scalar_select %p402, %s28, 1
        %s404 = smul.addr %s403, 4
        %s405 = scalar_lea.vmem %s1, %s404
        %v406 = vld [vmem:[%s7] sm:$0xff]
        %v407 = vld [vmem:[%s7 + $0x8] sm:$0xff]
        %v408 = vld [vmem:[%s405] sm:$0xf]
        %v409 = vunpack.c.l.bf16 %v408
        %v410 = vmul.f32 %v409, %v409
        %vm411 = vcmask 130048
        %v412 = vsel %vm411, %v410, 0.0
        %413 = vadd.xlane.f32.xlu0 %v412
        %v414 = vpop.xlane.xlu0 %413
        %v415 = vmax.f32 %v414, 1e-24
        %v416 = vrsqrt.pop %v415
        %v417 = vmul.f32 %v409, %v416
        %v418 = vld [vmem:[%s339] sm:$0xf]
        %v419 = vunpack.c.l.bf16 %v418
        %v420 = vmul.f32 %v419, %v419
        %v421 = vsel %vm411, %v420, 0.0
        %422 = vadd.xlane.f32.xlu0 %v421
        %v423 = vpop.xlane.xlu0 %422
        %v424 = vmax.f32 %v423, 1e-24
        %v425 = vrsqrt.pop %v424
        %v426 = vmul.f32 %v419, %v425
        %v427 = vld [vmem:[%s348] sm:$0xf]
        %v428 = vunpack.c.l.bf16 %v427
        %v429 = vmul.f32 %v428, %v428
        %v430 = vsel %vm411, %v429, 0.0
        %431 = vadd.xlane.f32.xlu0 %v430
        %v432 = vpop.xlane.xlu0 %431
        %v433 = vmax.f32 %v432, 1e-24
        %v434 = vrsqrt.pop %v433
        %v435 = vmul.f32 %v428, %v434
        %v436 = vld [vmem:[%s4] sm:$0xf]
        %v437 = vld [vmem:[%s4 + $0x4] sm:$0xf]
        %v438 = vunpack.c.l.bf16 %v436
        %v439 = vunpack.c.l.bf16 %v437
        %441 = vset.pattern.permute.xlu0 0
        %442 = vperm.xlu0 %441, %v417
        %v443 = vpop.permute.xlu0 %442
        %v445 = vlaneseq
        %v446 = vshrl.u32 %v445, 7
        %v447 = vsub.s32 0, %v446
        %v448 = vrot.slane %v438, %v447
        %v449 = vmul.f32 %v443, %v448
        %v450 = vlaneseq
        %v451 = vshrl.u32 %v450, 7
        %v452 = vsub.s32 4, %v451
        %v453 = vrot.slane %v406, %v452
        %v454 = vadd.f32 %v453, %v449
        %455 = vset.pattern.permute.xlu0 1
        %456 = vperm.xlu0 %455, %v417
        %v457 = vpop.permute.xlu0 %456
        %v459 = vlaneseq
        %v460 = vshrl.u32 %v459, 7
        %v461 = vsub.s32 1, %v460
        %v462 = vrot.slane %v438, %v461
        %v463 = vmul.f32 %v457, %v462
        %v464 = vadd.f32 %v454, %v463
        %465 = vset.pattern.permute.xlu0 2
        %466 = vperm.xlu0 %465, %v417
        %v467 = vpop.permute.xlu0 %466
        %v469 = vlaneseq
        %v470 = vshrl.u32 %v469, 7
        %v471 = vsub.s32 2, %v470
        %v472 = vrot.slane %v438, %v471
        %v473 = vmul.f32 %v467, %v472
        %v474 = vadd.f32 %v464, %v473
        %475 = vset.pattern.permute.xlu0 3
        %476 = vperm.xlu0 %475, %v417
        %v477 = vpop.permute.xlu0 %476
        %v479 = vlaneseq
        %v480 = vshrl.u32 %v479, 7
        %v481 = vsub.s32 3, %v480
        %v482 = vrot.slane %v438, %v481
        %v483 = vmul.f32 %v477, %v482
        %v484 = vadd.f32 %v474, %v483
        %485 = vset.pattern.permute.xlu0 4
        %486 = vperm.xlu0 %485, %v417
        %v487 = vpop.permute.xlu0 %486
        %v489 = vlaneseq
        %v490 = vshrl.u32 %v489, 7
        %v491 = vsub.s32 4, %v490
        %v492 = vrot.slane %v438, %v491
        %v493 = vmul.f32 %v487, %v492
        %v494 = vadd.f32 %v484, %v493
        %495 = vset.pattern.permute.xlu0 5
        %496 = vperm.xlu0 %495, %v417
        %v497 = vpop.permute.xlu0 %496
        %v499 = vlaneseq
        %v500 = vshrl.u32 %v499, 7
        %v501 = vsub.s32 5, %v500
        %v502 = vrot.slane %v438, %v501
        %v503 = vmul.f32 %v497, %v502
        %v504 = vadd.f32 %v494, %v503
        %505 = vset.pattern.permute.xlu0 6
        %506 = vperm.xlu0 %505, %v417
        %v507 = vpop.permute.xlu0 %506
        %v509 = vlaneseq
        %v510 = vshrl.u32 %v509, 7
        %v511 = vsub.s32 6, %v510
        %v512 = vrot.slane %v438, %v511
        %v513 = vmul.f32 %v507, %v512
        %v514 = vadd.f32 %v504, %v513
        %515 = vset.pattern.permute.xlu0 7
        %516 = vperm.xlu0 %515, %v417
        %v517 = vpop.permute.xlu0 %516
        %v519 = vlaneseq
        %v520 = vshrl.u32 %v519, 7
        %v521 = vsub.s32 7, %v520
        %v522 = vrot.slane %v438, %v521
        %v523 = vmul.f32 %v517, %v522
        %v524 = vadd.f32 %v514, %v523
        %525 = vset.pattern.permute.xlu0 8
        %526 = vperm.xlu0 %525, %v417
        %v527 = vpop.permute.xlu0 %526
        %v529 = vlaneseq
        %v530 = vshrl.u32 %v529, 7
        %v531 = vsub.s32 0, %v530
        %v532 = vrot.slane %v439, %v531
        %v533 = vmul.f32 %v527, %v532
        %v534 = vadd.f32 %v524, %v533
        %535 = vset.pattern.permute.xlu0 9
        %536 = vperm.xlu0 %535, %v417
        %v537 = vpop.permute.xlu0 %536
        %v539 = vlaneseq
        %v540 = vshrl.u32 %v539, 7
        %v541 = vsub.s32 1, %v540
        %v542 = vrot.slane %v439, %v541
        %v543 = vmul.f32 %v537, %v542
        %v544 = vadd.f32 %v534, %v543
        %545 = vset.pattern.permute.xlu0 10
        %546 = vperm.xlu0 %545, %v417
        %v547 = vpop.permute.xlu0 %546
        %v549 = vlaneseq
        %v550 = vshrl.u32 %v549, 7
        %v551 = vsub.s32 2, %v550
        %v552 = vrot.slane %v439, %v551
        %v553 = vmul.f32 %v547, %v552
        %v554 = vadd.f32 %v544, %v553
        %555 = vset.pattern.permute.xlu0 11
        %556 = vperm.xlu0 %555, %v417
        %v557 = vpop.permute.xlu0 %556
        %v559 = vlaneseq
        %v560 = vshrl.u32 %v559, 7
        %v561 = vsub.s32 3, %v560
        %v562 = vrot.slane %v439, %v561
        %v563 = vmul.f32 %v557, %v562
        %v564 = vadd.f32 %v554, %v563
        %565 = vset.pattern.permute.xlu0 12
        %566 = vperm.xlu0 %565, %v417
        %v567 = vpop.permute.xlu0 %566
        %v569 = vlaneseq
        %v570 = vshrl.u32 %v569, 7
        %v571 = vsub.s32 4, %v570
        %v572 = vrot.slane %v439, %v571
        %v573 = vmul.f32 %v567, %v572
        %v574 = vadd.f32 %v564, %v573
        %575 = vset.pattern.permute.xlu0 13
        %576 = vperm.xlu0 %575, %v417
        %v577 = vpop.permute.xlu0 %576
        %v579 = vlaneseq
        %v580 = vshrl.u32 %v579, 7
        %v581 = vsub.s32 5, %v580
        %v582 = vrot.slane %v439, %v581
        %v583 = vmul.f32 %v577, %v582
        %v584 = vadd.f32 %v574, %v583
        %585 = vset.pattern.permute.xlu0 14
        %586 = vperm.xlu0 %585, %v417
        %v587 = vpop.permute.xlu0 %586
        %v589 = vlaneseq
        %v590 = vshrl.u32 %v589, 7
        %v591 = vsub.s32 6, %v590
        %v592 = vrot.slane %v439, %v591
        %v593 = vmul.f32 %v587, %v592
        %v594 = vadd.f32 %v584, %v593
        %595 = vset.pattern.permute.xlu0 15
        %596 = vperm.xlu0 %595, %v417
        %v597 = vpop.permute.xlu0 %596
        %v599 = vlaneseq
        %v600 = vshrl.u32 %v599, 7
        %v601 = vsub.s32 7, %v600
        %v602 = vrot.slane %v439, %v601
        %v603 = vmul.f32 %v597, %v602
        %v604 = vadd.f32 %v594, %v603
        %v605 = vld [vmem:[#allocation7] sm:$0xf]
        %v606 = vld [vmem:[#allocation7 + $0x4] sm:$0xf]
        %v607 = vunpack.c.l.bf16 %v605
        %v608 = vunpack.c.l.bf16 %v606
        %610 = vset.pattern.permute.xlu0 0
        %611 = vperm.xlu0 %610, %v426
        %v612 = vpop.permute.xlu0 %611
        %v614 = vlaneseq
        %v615 = vshrl.u32 %v614, 7
        %v616 = vsub.s32 0, %v615
        %v617 = vrot.slane %v607, %v616
        %v618 = vmul.f32 %v612, %v617
        %v619 = vadd.f32 %v604, %v618
        %620 = vset.pattern.permute.xlu0 1
        %621 = vperm.xlu0 %620, %v426
        %v622 = vpop.permute.xlu0 %621
        %v624 = vlaneseq
        %v625 = vshrl.u32 %v624, 7
        %v626 = vsub.s32 1, %v625
        %v627 = vrot.slane %v607, %v626
        %v628 = vmul.f32 %v622, %v627
        %v629 = vadd.f32 %v619, %v628
        %630 = vset.pattern.permute.xlu0 2
        %631 = vperm.xlu0 %630, %v426
        %v632 = vpop.permute.xlu0 %631
        %v634 = vlaneseq
        %v635 = vshrl.u32 %v634, 7
        %v636 = vsub.s32 2, %v635
        %v637 = vrot.slane %v607, %v636
        %v638 = vmul.f32 %v632, %v637
        %v639 = vadd.f32 %v629, %v638
        %640 = vset.pattern.permute.xlu0 3
        %641 = vperm.xlu0 %640, %v426
        %v642 = vpop.permute.xlu0 %641
        %v644 = vlaneseq
        %v645 = vshrl.u32 %v644, 7
        %v646 = vsub.s32 3, %v645
        %v647 = vrot.slane %v607, %v646
        %v648 = vmul.f32 %v642, %v647
        %v649 = vadd.f32 %v639, %v648
        %650 = vset.pattern.permute.xlu0 4
        %651 = vperm.xlu0 %650, %v426
        %v652 = vpop.permute.xlu0 %651
        %v654 = vlaneseq
        %v655 = vshrl.u32 %v654, 7
        %v656 = vsub.s32 4, %v655
        %v657 = vrot.slane %v607, %v656
        %v658 = vmul.f32 %v652, %v657
        %v659 = vadd.f32 %v649, %v658
        %660 = vset.pattern.permute.xlu0 5
        %661 = vperm.xlu0 %660, %v426
        %v662 = vpop.permute.xlu0 %661
        %v664 = vlaneseq
        %v665 = vshrl.u32 %v664, 7
        %v666 = vsub.s32 5, %v665
        %v667 = vrot.slane %v607, %v666
        %v668 = vmul.f32 %v662, %v667
        %v669 = vadd.f32 %v659, %v668
        %670 = vset.pattern.permute.xlu0 6
        %671 = vperm.xlu0 %670, %v426
        %v672 = vpop.permute.xlu0 %671
        %v674 = vlaneseq
        %v675 = vshrl.u32 %v674, 7
        %v676 = vsub.s32 6, %v675
        %v677 = vrot.slane %v607, %v676
        %v678 = vmul.f32 %v672, %v677
        %v679 = vadd.f32 %v669, %v678
        %680 = vset.pattern.permute.xlu0 7
        %681 = vperm.xlu0 %680, %v426
        %v682 = vpop.permute.xlu0 %681
        %v684 = vlaneseq
        %v685 = vshrl.u32 %v684, 7
        %v686 = vsub.s32 7, %v685
        %v687 = vrot.slane %v607, %v686
        %v688 = vmul.f32 %v682, %v687
        %v689 = vadd.f32 %v679, %v688
        %690 = vset.pattern.permute.xlu0 8
        %691 = vperm.xlu0 %690, %v426
        %v692 = vpop.permute.xlu0 %691
        %v694 = vlaneseq
        %v695 = vshrl.u32 %v694, 7
        %v696 = vsub.s32 0, %v695
        %v697 = vrot.slane %v608, %v696
        %v698 = vmul.f32 %v692, %v697
        %v699 = vadd.f32 %v689, %v698
        %700 = vset.pattern.permute.xlu0 9
        %701 = vperm.xlu0 %700, %v426
        %v702 = vpop.permute.xlu0 %701
        %v704 = vlaneseq
        %v705 = vshrl.u32 %v704, 7
        %v706 = vsub.s32 1, %v705
        %v707 = vrot.slane %v608, %v706
        %v708 = vmul.f32 %v702, %v707
        %v709 = vadd.f32 %v699, %v708
        %710 = vset.pattern.permute.xlu0 10
        %711 = vperm.xlu0 %710, %v426
        %v712 = vpop.permute.xlu0 %711
        %v714 = vlaneseq
        %v715 = vshrl.u32 %v714, 7
        %v716 = vsub.s32 2, %v715
        %v717 = vrot.slane %v608, %v716
        %v718 = vmul.f32 %v712, %v717
        %v719 = vadd.f32 %v709, %v718
        %720 = vset.pattern.permute.xlu0 11
        %721 = vperm.xlu0 %720, %v426
        %v722 = vpop.permute.xlu0 %721
        %v724 = vlaneseq
        %v725 = vshrl.u32 %v724, 7
        %v726 = vsub.s32 3, %v725
        %v727 = vrot.slane %v608, %v726
        %v728 = vmul.f32 %v722, %v727
        %v729 = vadd.f32 %v719, %v728
        %730 = vset.pattern.permute.xlu0 12
        %731 = vperm.xlu0 %730, %v426
        %v732 = vpop.permute.xlu0 %731
        %v734 = vlaneseq
        %v735 = vshrl.u32 %v734, 7
        %v736 = vsub.s32 4, %v735
        %v737 = vrot.slane %v608, %v736
        %v738 = vmul.f32 %v732, %v737
        %v739 = vadd.f32 %v729, %v738
        %740 = vset.pattern.permute.xlu0 13
        %741 = vperm.xlu0 %740, %v426
        %v742 = vpop.permute.xlu0 %741
        %v744 = vlaneseq
        %v745 = vshrl.u32 %v744, 7
        %v746 = vsub.s32 5, %v745
        %v747 = vrot.slane %v608, %v746
        %v748 = vmul.f32 %v742, %v747
        %v749 = vadd.f32 %v739, %v748
        %750 = vset.pattern.permute.xlu0 14
        %751 = vperm.xlu0 %750, %v426
        %v752 = vpop.permute.xlu0 %751
        %v754 = vlaneseq
        %v755 = vshrl.u32 %v754, 7
        %v756 = vsub.s32 6, %v755
        %v757 = vrot.slane %v608, %v756
        %v758 = vmul.f32 %v752, %v757
        %v759 = vadd.f32 %v749, %v758
        %760 = vset.pattern.permute.xlu0 15
        %761 = vperm.xlu0 %760, %v426
        %v762 = vpop.permute.xlu0 %761
        %v764 = vlaneseq
        %v765 = vshrl.u32 %v764, 7
        %v766 = vsub.s32 7, %v765
        %v767 = vrot.slane %v608, %v766
        %v768 = vmul.f32 %v762, %v767
        %v769 = vadd.f32 %v759, %v768
        %v770 = vld [vmem:[%s6] sm:$0xf]
        %v771 = vld [vmem:[%s6 + $0x4] sm:$0xf]
        %v772 = vunpack.c.l.bf16 %v770
        %v773 = vunpack.c.l.bf16 %v771
        %775 = vset.pattern.permute.xlu0 0
        %776 = vperm.xlu0 %775, %v435
        %v777 = vpop.permute.xlu0 %776
        %v779 = vlaneseq
        %v780 = vshrl.u32 %v779, 7
        %v781 = vsub.s32 0, %v780
        %v782 = vrot.slane %v772, %v781
        %v783 = vmul.f32 %v777, %v782
        %v784 = vadd.f32 %v769, %v783
        %785 = vset.pattern.permute.xlu0 1
        %786 = vperm.xlu0 %785, %v435
        %v787 = vpop.permute.xlu0 %786
        %v789 = vlaneseq
        %v790 = vshrl.u32 %v789, 7
        %v791 = vsub.s32 1, %v790
        %v792 = vrot.slane %v772, %v791
        %v793 = vmul.f32 %v787, %v792
        %v794 = vadd.f32 %v784, %v793
        %795 = vset.pattern.permute.xlu0 2
        %796 = vperm.xlu0 %795, %v435
        %v797 = vpop.permute.xlu0 %796
        %v799 = vlaneseq
        %v800 = vshrl.u32 %v799, 7
        %v801 = vsub.s32 2, %v800
        %v802 = vrot.slane %v772, %v801
        %v803 = vmul.f32 %v797, %v802
        %v804 = vadd.f32 %v794, %v803
        %805 = vset.pattern.permute.xlu0 3
        %806 = vperm.xlu0 %805, %v435
        %v807 = vpop.permute.xlu0 %806
        %v809 = vlaneseq
        %v810 = vshrl.u32 %v809, 7
        %v811 = vsub.s32 3, %v810
        %v812 = vrot.slane %v772, %v811
        %v813 = vmul.f32 %v807, %v812
        %v814 = vadd.f32 %v804, %v813
        %815 = vset.pattern.permute.xlu0 4
        %816 = vperm.xlu0 %815, %v435
        %v817 = vpop.permute.xlu0 %816
        %v819 = vlaneseq
        %v820 = vshrl.u32 %v819, 7
        %v821 = vsub.s32 4, %v820
        %v822 = vrot.slane %v772, %v821
        %v823 = vmul.f32 %v817, %v822
        %v824 = vadd.f32 %v814, %v823
        %825 = vset.pattern.permute.xlu0 5
        %826 = vperm.xlu0 %825, %v435
        %v827 = vpop.permute.xlu0 %826
        %v829 = vlaneseq
        %v830 = vshrl.u32 %v829, 7
        %v831 = vsub.s32 5, %v830
        %v832 = vrot.slane %v772, %v831
        %v833 = vmul.f32 %v827, %v832
        %v834 = vadd.f32 %v824, %v833
        %835 = vset.pattern.permute.xlu0 6
        %836 = vperm.xlu0 %835, %v435
        %v837 = vpop.permute.xlu0 %836
        %v839 = vlaneseq
        %v840 = vshrl.u32 %v839, 7
        %v841 = vsub.s32 6, %v840
        %v842 = vrot.slane %v772, %v841
        %v843 = vmul.f32 %v837, %v842
        %v844 = vadd.f32 %v834, %v843
        %845 = vset.pattern.permute.xlu0 7
        %846 = vperm.xlu0 %845, %v435
        %v847 = vpop.permute.xlu0 %846
        %v849 = vlaneseq
        %v850 = vshrl.u32 %v849, 7
        %v851 = vsub.s32 7, %v850
        %v852 = vrot.slane %v772, %v851
        %v853 = vmul.f32 %v847, %v852
        %v854 = vadd.f32 %v844, %v853
        %855 = vset.pattern.permute.xlu0 8
        %856 = vperm.xlu0 %855, %v435
        %v857 = vpop.permute.xlu0 %856
        %v859 = vlaneseq
        %v860 = vshrl.u32 %v859, 7
        %v861 = vsub.s32 0, %v860
        %v862 = vrot.slane %v773, %v861
        %v863 = vmul.f32 %v857, %v862
        %v864 = vadd.f32 %v854, %v863
        %865 = vset.pattern.permute.xlu0 9
        %866 = vperm.xlu0 %865, %v435
        %v867 = vpop.permute.xlu0 %866
        %v869 = vlaneseq
        %v870 = vshrl.u32 %v869, 7
        %v871 = vsub.s32 1, %v870
        %v872 = vrot.slane %v773, %v871
        %v873 = vmul.f32 %v867, %v872
        %v874 = vadd.f32 %v864, %v873
        %875 = vset.pattern.permute.xlu0 10
        %876 = vperm.xlu0 %875, %v435
        %v877 = vpop.permute.xlu0 %876
        %v879 = vlaneseq
        %v880 = vshrl.u32 %v879, 7
        %v881 = vsub.s32 2, %v880
        %v882 = vrot.slane %v773, %v881
        %v883 = vmul.f32 %v877, %v882
        %v884 = vadd.f32 %v874, %v883
        %885 = vset.pattern.permute.xlu0 11
        %886 = vperm.xlu0 %885, %v435
        %v887 = vpop.permute.xlu0 %886
        %v889 = vlaneseq
        %v890 = vshrl.u32 %v889, 7
        %v891 = vsub.s32 3, %v890
        %v892 = vrot.slane %v773, %v891
        %v893 = vmul.f32 %v887, %v892
        %v894 = vadd.f32 %v884, %v893
        %895 = vset.pattern.permute.xlu0 12
        %896 = vperm.xlu0 %895, %v435
        %v897 = vpop.permute.xlu0 %896
        %v899 = vlaneseq
        %v900 = vshrl.u32 %v899, 7
        %v901 = vsub.s32 4, %v900
        %v902 = vrot.slane %v773, %v901
        %v903 = vmul.f32 %v897, %v902
        %v904 = vadd.f32 %v894, %v903
        %905 = vset.pattern.permute.xlu0 13
        %906 = vperm.xlu0 %905, %v435
        %v907 = vpop.permute.xlu0 %906
        %v909 = vlaneseq
        %v910 = vshrl.u32 %v909, 7
        %v911 = vsub.s32 5, %v910
        %v912 = vrot.slane %v773, %v911
        %v913 = vmul.f32 %v907, %v912
        %v914 = vadd.f32 %v904, %v913
        %915 = vset.pattern.permute.xlu0 14
        %916 = vperm.xlu0 %915, %v435
        %v917 = vpop.permute.xlu0 %916
        %v919 = vlaneseq
        %v920 = vshrl.u32 %v919, 7
        %v921 = vsub.s32 6, %v920
        %v922 = vrot.slane %v773, %v921
        %v923 = vmul.f32 %v917, %v922
        %v924 = vadd.f32 %v914, %v923
        %925 = vset.pattern.permute.xlu0 15
        %926 = vperm.xlu0 %925, %v435
        %v927 = vpop.permute.xlu0 %926
        %v929 = vlaneseq
        %v930 = vshrl.u32 %v929, 7
        %v931 = vsub.s32 7, %v930
        %v932 = vrot.slane %v773, %v931
        %v933 = vmul.f32 %v927, %v932
        %v934 = vadd.f32 %v924, %v933
        %v935 = vlaneseq
        %v936 = vand.u32 %v935, 127
        %vm937 = vcmp.lt.s32.totalorder %v936, 32
        %v938 = vsel %vm937, 1, 0
        %vm939 = vcmp.eq.s32.totalorder %v938, 1
        %v940 = vsel %vm939, %v934, 0.0
        %941 = vadd.xlane.f32.xlu0 %v940
        %v942 = vpop.xlane.xlu0 %941
        %v943 = vmul.f32 %v942, 0.03125
        %v944 = vsub.f32 %v934, %v943
        %v945 = vsel %vm939, %v944, 0.0
        %v946 = vmul.f32 %v945, %v945
        %947 = vadd.xlane.f32.xlu0 %v946
        %v948 = vpop.xlane.xlu0 %947
        %v949 = vmul.f32 %v948, 0.03125
        %v950 = vadd.f32 %v949, 1e-05
        %v951 = vrsqrt.pop %v950
        %v952 = vmul.f32 %v945, %v951
        %v953 = vlaneseq
        %v954 = vshrl.u32 %v953, 7
        %v955 = vsub.s32 6, %v954
        %v956 = vrot.slane %v406, %v955
        %v957 = vmul.f32 %v952, %v956
        %v958 = vlaneseq
        %v959 = vshrl.u32 %v958, 7
        %v960 = vsub.s32 7, %v959
        %v961 = vrot.slane %v406, %v960
        %v962 = vadd.f32 %v957, %v961
        %v963 = vld [vmem:[%s401] sm:$0xff]
        %965 = vset.pattern.permute.xlu0 0
        %966 = vperm.xlu0 %965, %v963
        %v967 = vpop.permute.xlu0 %966
        %v969 = vlaneseq
        %v970 = vshrl.u32 %v969, 7
        %v971 = vsub.s32 0, %v970
        %v972 = vrot.slane %v406, %v971
        %v973 = vmul.f32 %v967, %v972
        %v974 = vlaneseq
        %v975 = vshrl.u32 %v974, 7
        %v976 = vsub.s32 5, %v975
        %v977 = vrot.slane %v406, %v976
        %v978 = vadd.f32 %v977, %v973
        %979 = vset.pattern.permute.xlu0 1
        %980 = vperm.xlu0 %979, %v963
        %v981 = vpop.permute.xlu0 %980
        %v983 = vlaneseq
        %v984 = vshrl.u32 %v983, 7
        %v985 = vsub.s32 1, %v984
        %v986 = vrot.slane %v406, %v985
        %v987 = vmul.f32 %v981, %v986
        %v988 = vadd.f32 %v978, %v987
        %989 = vset.pattern.permute.xlu0 2
        %990 = vperm.xlu0 %989, %v963
        %v991 = vpop.permute.xlu0 %990
        %v993 = vlaneseq
        %v994 = vshrl.u32 %v993, 7
        %v995 = vsub.s32 2, %v994
        %v996 = vrot.slane %v406, %v995
        %v997 = vmul.f32 %v991, %v996
        %v998 = vadd.f32 %v988, %v997
        %999 = vset.pattern.permute.xlu0 3
        %1000 = vperm.xlu0 %999, %v963
        %v1001 = vpop.permute.xlu0 %1000
        %v1003 = vlaneseq
        %v1004 = vshrl.u32 %v1003, 7
        %v1005 = vsub.s32 3, %v1004
        %v1006 = vrot.slane %v406, %v1005
        %v1007 = vmul.f32 %v1001, %v1006
        %v1008 = vadd.f32 %v998, %v1007
        %v1009 = vsel %vm939, %v1008, 0.0
        %1010 = vadd.xlane.f32.xlu0 %v1009
        %v1011 = vpop.xlane.xlu0 %1010
        %v1012 = vmul.f32 %v1011, 0.03125
        %v1013 = vsub.f32 %v1008, %v1012
        %v1014 = vsel %vm939, %v1013, 0.0
        %v1015 = vmul.f32 %v1014, %v1014
        %1016 = vadd.xlane.f32.xlu0 %v1015
        %v1017 = vpop.xlane.xlu0 %1016
        %v1018 = vmul.f32 %v1017, 0.03125
        %v1019 = vadd.f32 %v1018, 1e-05
        %v1020 = vrsqrt.pop %v1019
        %v1021 = vmul.f32 %v1014, %v1020
        %v1022 = vlaneseq
        %v1023 = vshrl.u32 %v1022, 7
        %v1024 = vsub.s32 0, %v1023
        %v1025 = vrot.slane %v407, %v1024
        %v1026 = vmul.f32 %v1021, %v1025
        %v1027 = vlaneseq
        %v1028 = vshrl.u32 %v1027, 7
        %v1029 = vsub.s32 1, %v1028
        %v1030 = vrot.slane %v407, %v1029
        %v1031 = vadd.f32 %v1026, %v1030
        %v1032 = vadd.f32 %v962, %v1031
        %1033 = vst [vmem:[%s397] sm:$0xff] %v1032
        %s1034 = sand.u32 %s224, 1
        %s1035 = scalar_lea.sflag [#allocation4], %s1034
        %s1036 = sand.u32 %s224, 1
        %s1037 = smul.addr %s1036, 8
        %s1038 = scalar_lea.vmem [#allocation8], %s1037
        // Predicated region
        $region65: #{tpu_custom_call.1} parent=51 // pred_check
          %p1039 = pneg %p234
        $region66: #{tpu_custom_call.1} parent=51 // pred_check_branch
          %1041 = sbr.rel (%p1039) target = $region68
        $region67: #{tpu_custom_call.1} parent=51 // pred_region
          %s1043 = ssub.s32 128, 128
          %1044 = vsyncadd %s1035, %s1043
          %s1045 = smul.addr %s28, 128
          %s1046 = scalar_lea.hbm %s8, %s1045
          %s1048 = sshll.u32 %s1038, 4
          %s1049 = int_to_ptr.vmem [resolvable:$true] %s1048
          %1051 = dma.vmem_to_hbm [thread:$0]  %s1049, 128, %s1046, %s1035
        $region68: #{tpu_custom_call.1} parent=51 // pred_fallthru
          _
      $region52: #{tpu_custom_call.1} parent=5 // pred_fallthru
        _
      %p1052 = scmp.le.s32.totalorder 2, %s23
      // Predicated region
      $region69: #{tpu_custom_call.1} parent=5 // pred_check
        %p1053 = pneg %p1052
      $region70: #{tpu_custom_call.1} parent=5 // pred_check_branch
        %1055 = sbr.rel (%p1053) target = $region72
      $region71: #{tpu_custom_call.1} parent=5 // pred_region
        %s1056 = ssub.s32 %s23, 2
        // Predicated region
        $region73: #{tpu_custom_call.1} parent=71 // pred_check
          %p1057 = pneg %p240
        $region74: #{tpu_custom_call.1} parent=71 // pred_check_branch
          %1059 = sbr.rel (%p1057) target = $region76
        $region75: #{tpu_custom_call.1} parent=71 // pred_region
          %s1060 = sand.u32 %s225, 1
          %s1061 = scalar_lea.sflag [#allocation4], %s1060
          %s1062 = sand.u32 %s225, 1
          %s1063 = smul.addr %s1062, 8
          %s1064 = scalar_lea.vmem [#allocation8], %s1063
          %1065 = dma.done %s1061, 128
        $region76: #{tpu_custom_call.1} parent=71 // pred_fallthru
          _
      $region72: #{tpu_custom_call.1} parent=5 // pred_fallthru
        _
    $region6: #{tpu_custom_call.1} parent=1 // loop_footer
      %s27 = sadd.s32 1, %s23
    $region7: #{tpu_custom_call.1} parent=1 // loop_footer_branch
      %22 = sbr.rel target = $region3
    $region8: #{tpu_custom_call.1} parent=1 // loop_exit
      _
    %1066 = vsyncpa [#allocation3], 1
    %s1067 = scalar_lea.sflag [#allocation3], 1
    %1068 = vsyncpa %s1067, 1
    %1069 = vsyncpa [#allocation6], 1
    %s1070 = scalar_lea.sflag [#allocation6], 1
    %1071 = vsyncpa %s1070, 1
    %1072 = vsyncpa [#allocation4], 1
    %s1073 = scalar_lea.sflag [#allocation4], 1
    %1074 = vsyncpa %s1073, 1

// kernel: tpu_custom_call.1
$region0: #{tpu_custom_call.1}
  #allocation0 [shape = 'u32[]', space=smem, size = 0x4, offset = 0x4, fixed_abs, tag = 'smem constant byte address 0x4 - core index']
  #allocation1 [shape = 'u32[144,128]{1,0:T(1,128)}', space=vmem, size = 0x12000, scoped, tag = 'internal scratch']
  %s0 = inlined_call_operand.vmem [shape: f32[16,4], index: 0, kind: input, shape index: {}]
  %s1 = inlined_call_operand.vmem [shape: bf16[16,16], index: 1, kind: input, shape index: {}]
  %s2 = inlined_call_operand.hbm [shape: bf16[16,16], index: 2, kind: input, shape index: {}]
  %s3 = inlined_call_operand.hbm [shape: bf16[16,16], index: 3, kind: input, shape index: {}]
  %s4 = inlined_call_operand.vmem [shape: bf16[16,128], index: 4, kind: input, shape index: {}]
  %s5 = inlined_call_operand.hbm [shape: bf16[16,128], index: 5, kind: input, shape index: {}]
  %s6 = inlined_call_operand.vmem [shape: bf16[16,128], index: 6, kind: input, shape index: {}]
  %s7 = inlined_call_operand.vmem [shape: f32[16,128], index: 7, kind: input, shape index: {}]
  %s8 = inlined_call_operand.hbm [shape: f32[16,128], index: 8, kind: output, shape index: {}]
  %s9 = sld [smem:[#allocation0]]
  $region77: #{tpu_custom_call.1} parent=0
    _
  %s11 = ssub.s32 1, %s9
  %s12 = scalar_select 0, %s11, %s9
  $region1: #{tpu_custom_call.1} parent=0
    #allocation2 [shape = 'u8[4096]{0}', space=vmem, size = 0x1000, scoped, tag = 'input window, operand 2']
    #allocation3 [shape = 's32[2]{0}', space=sflag, size = 0x8, scoped, tag = 'scoped memory for tpu_custom_call.1']
    #allocation4 [shape = 's32[2]{0}', space=sflag, size = 0x8, scoped, tag = 'scoped memory for tpu_custom_call.1']
    #allocation5 [shape = 'u8[4096]{0}', space=vmem, size = 0x1000, scoped, tag = 'input window, operand 3']
    #allocation6 [shape = 's32[2]{0}', space=sflag, size = 0x8, scoped, tag = 'scoped memory for tpu_custom_call.1']
    #allocation7 [shape = 'u8[4096]{0}', space=vmem, size = 0x1000, scoped, tag = 'input window, operand 5, single buffered']
    #allocation8 [shape = 'u8[8192]{0}', space=vmem, size = 0x2000, scoped, tag = 'output window, operand 0']
    %13 = vsyncpa [#allocation3], 0
    %s14 = scalar_lea.sflag [#allocation3], 1
    %15 = vsyncpa %s14, 0
    %16 = vsyncpa [#allocation6], 0
    %s17 = scalar_lea.sflag [#allocation6], 1
    %18 = vsyncpa %s17, 0
    %19 = vsyncpa [#allocation4], 0
    %s20 = scalar_lea.sflag [#allocation4], 1
    %21 = vsyncpa %s20, 0
    loop: start=0, step=1, limit=4
    $region2: #{tpu_custom_call.1} parent=1 // loop_pre_header
      _
    $region3: #{tpu_custom_call.1} parent=1 // loop_header
      %s23 = sphi 0, %s27
      %p24 = scmp.ge.s32.totalorder %s23, 4
      %s33 = sphi 0, %s35
      %s36 = sphi 0, %s33
      %s37 = sphi 0, %s36
      %s53 = sphi 0, %s37
      %s59 = sphi 0, %s61
      %s62 = sphi 0, %s59
      %s63 = sphi 0, %s62
      %s79 = sphi 0, %s63
      %s85 = sphi 0, %s87
      %s88 = sphi 0, %s85
      %s89 = sphi 0, %s88
      %s105 = sphi 0, %s89
      %s111 = sphi 0, %s113
      %s114 = sphi 0, %s111
      %s115 = sphi 0, %s114
      %s131 = sphi 0, %s115
      %s135 = sphi 0, %s135
      %s137 = sphi 0, %s135
      %s138 = sphi 0, %s137
      %s152 = sphi 0, %s138
      %s156 = sphi 0, %s156
      %s158 = sphi 0, %s156
      %s159 = sphi 0, %s158
      %s173 = sphi 0, %s159
      %s177 = sphi 0, %s177
      %s179 = sphi 0, %s177
      %s180 = sphi 0, %s179
      %s194 = sphi 0, %s180
      %s198 = sphi 0, %s198
      %s200 = sphi 0, %s198
      %s201 = sphi 0, %s200
      %s215 = sphi 0, %s201
      %s221 = sphi 0, %s223
      %s224 = sphi 0, %s221
      %s225 = sphi 0, %s224
      %s241 = sphi 0, %s225
    $region4: #{tpu_custom_call.1} parent=1 // loop_header_branch
      %26 = sbr.rel (%p24) target = $region8
    $region5: #{tpu_custom_call.1} parent=1 // loop_body
      %s28 = ssub.s32 %s23, 1
      %s29 = ssub.s32 %s23, 2
      %s30 = sadd.s32 %s23, 1
      %s31 = ssub.s32 %s23, %s30
      %p32 = scmp.eq.s32.totalorder %s31, 0
      %s34 = sadd.s32 %s33, 1
      %s35 = scalar_select %p32, %s33, %s34
      %p38 = pneg %p32
      %p39 = scmp.eq.s32.totalorder %s23, 1
      %p40 = por %p38, %p39
      %p41 = scmp.ne.s32.totalorder %s33, %s36
      %p42 = scmp.eq.s32.totalorder %s23, 0
      %p43 = por %p41, %p42
      %p44 = scmp.ne.s32.totalorder %s33, %s36
      %p45 = scmp.eq.s32.totalorder %s28, 1
      %p46 = por %p44, %p45
      %p47 = scmp.ne.s32.totalorder %s36, %s37
      %p48 = scmp.eq.s32.totalorder %s28, 0
      %p49 = por %p47, %p48
      %p50 = scmp.ne.s32.totalorder %s36, %s37
      %p51 = scmp.eq.s32.totalorder %s29, 1
      %p52 = por %p50, %p51
      %p54 = scmp.ne.s32.totalorder %s37, %s53
      %p55 = scmp.eq.s32.totalorder %s29, 0
      %p56 = por %p54, %p55
      %s57 = ssub.s32 %s23, %s30
      %p58 = scmp.eq.s32.totalorder %s57, 0
      %s60 = sadd.s32 %s59, 1
      %s61 = scalar_select %p58, %s59, %s60
      %p64 = pneg %p58
      %p65 = scmp.eq.s32.totalorder %s23, 1
      %p66 = por %p64, %p65
      %p67 = scmp.ne.s32.totalorder %s59, %s62
      %p68 = scmp.eq.s32.totalorder %s23, 0
      %p69 = por %p67, %p68
      %p70 = scmp.ne.s32.totalorder %s59, %s62
      %p71 = scmp.eq.s32.totalorder %s28, 1
      %p72 = por %p70, %p71
      %p73 = scmp.ne.s32.totalorder %s62, %s63
      %p74 = scmp.eq.s32.totalorder %s28, 0
      %p75 = por %p73, %p74
      %p76 = scmp.ne.s32.totalorder %s62, %s63
      %p77 = scmp.eq.s32.totalorder %s29, 1
      %p78 = por %p76, %p77
      %p80 = scmp.ne.s32.totalorder %s63, %s79
      %p81 = scmp.eq.s32.totalorder %s29, 0
      %p82 = por %p80, %p81
      %s83 = ssub.s32 %s23, %s30
      %p84 = scmp.eq.s32.totalorder %s83, 0
      %s86 = sadd.s32 %s85, 1
      %s87 = scalar_select %p84, %s85, %s86
      %p90 = pneg %p84
      %p91 = scmp.eq.s32.totalorder %s23, 1
      %p92 = por %p90, %p91
      %p93 = scmp.ne.s32.totalorder %s85, %s88
      %p94 = scmp.eq.s32.totalorder %s23, 0
      %p95 = por %p93, %p94
      %p96 = scmp.ne.s32.totalorder %s85, %s88
      %p97 = scmp.eq.s32.totalorder %s28, 1
      %p98 = por %p96, %p97
      %p99 = scmp.ne.s32.totalorder %s88, %s89
      %p100 = scmp.eq.s32.totalorder %s28, 0
      %p101 = por %p99, %p100
      %p102 = scmp.ne.s32.totalorder %s88, %s89
      %p103 = scmp.eq.s32.totalorder %s29, 1
      %p104 = por %p102, %p103
      %p106 = scmp.ne.s32.totalorder %s89, %s105
      %p107 = scmp.eq.s32.totalorder %s29, 0
      %p108 = por %p106, %p107
      %s109 = ssub.s32 %s23, %s30
      %p110 = scmp.eq.s32.totalorder %s109, 0
      %s112 = sadd.s32 %s111, 1
      %s113 = scalar_select %p110, %s111, %s112
      %p116 = pneg %p110
      %p117 = scmp.eq.s32.totalorder %s23, 1
      %p118 = por %p116, %p117
      %p119 = scmp.ne.s32.totalorder %s111, %s114
      %p120 = scmp.eq.s32.totalorder %s23, 0
      %p121 = por %p119, %p120
      %p122 = scmp.ne.s32.totalorder %s111, %s114
      %p123 = scmp.eq.s32.totalorder %s28, 1
      %p124 = por %p122, %p123
      %p125 = scmp.ne.s32.totalorder %s114, %s115
      %p126 = scmp.eq.s32.totalorder %s28, 0
      %p127 = por %p125, %p126
      %p128 = scmp.ne.s32.totalorder %s114, %s115
      %p129 = scmp.eq.s32.totalorder %s29, 1
      %p130 = por %p128, %p129
      %p132 = scmp.ne.s32.totalorder %s115, %s131
      %p133 = scmp.eq.s32.totalorder %s29, 0
      %p134 = por %p132, %p133
      %s136 = sadd.s32 %s135, 1
      %p139 = scmp.eq.s32.totalorder %s23, 1
      %p140 = scmp.ne.s32.totalorder %s135, %s137
      %p141 = scmp.eq.s32.totalorder %s23, 0
      %p142 = por %p140, %p141
      %p143 = scmp.ne.s32.totalorder %s135, %s137
      %p144 = scmp.eq.s32.totalorder %s28, 1
      %p145 = por %p143, %p144
      %p146 = scmp.ne.s32.totalorder %s137, %s138
      %p147 = scmp.eq.s32.totalorder %s28, 0
      %p148 = por %p146, %p147
      %p149 = scmp.ne.s32.totalorder %s137, %s138
      %p150 = scmp.eq.s32.totalorder %s29, 1
      %p151 = por %p149, %p150
      %p153 = scmp.ne.s32.totalorder %s138, %s152
      %p154 = scmp.eq.s32.totalorder %s29, 0
      %p155 = por %p153, %p154
      %s157 = sadd.s32 %s156, 1
      %p160 = scmp.eq.s32.totalorder %s23, 1
      %p161 = scmp.ne.s32.totalorder %s156, %s158
      %p162 = scmp.eq.s32.totalorder %s23, 0
      %p163 = por %p161, %p162
      %p164 = scmp.ne.s32.totalorder %s156, %s158
      %p165 = scmp.eq.s32.totalorder %s28, 1
      %p166 = por %p164, %p165
      %p167 = scmp.ne.s32.totalorder %s158, %s159
      %p168 = scmp.eq.s32.totalorder %s28, 0
      %p169 = por %p167, %p168
      %p170 = scmp.ne.s32.totalorder %s158, %s159
      %p171 = scmp.eq.s32.totalorder %s29, 1
      %p172 = por %p170, %p171
      %p174 = scmp.ne.s32.totalorder %s159, %s173
      %p175 = scmp.eq.s32.totalorder %s29, 0
      %p176 = por %p174, %p175
      %s178 = sadd.s32 %s177, 1
      %p181 = scmp.eq.s32.totalorder %s23, 1
      %p182 = scmp.ne.s32.totalorder %s177, %s179
      %p183 = scmp.eq.s32.totalorder %s23, 0
      %p184 = por %p182, %p183
      %p185 = scmp.ne.s32.totalorder %s177, %s179
      %p186 = scmp.eq.s32.totalorder %s28, 1
      %p187 = por %p185, %p186
      %p188 = scmp.ne.s32.totalorder %s179, %s180
      %p189 = scmp.eq.s32.totalorder %s28, 0
      %p190 = por %p188, %p189
      %p191 = scmp.ne.s32.totalorder %s179, %s180
      %p192 = scmp.eq.s32.totalorder %s29, 1
      %p193 = por %p191, %p192
      %p195 = scmp.ne.s32.totalorder %s180, %s194
      %p196 = scmp.eq.s32.totalorder %s29, 0
      %p197 = por %p195, %p196
      %s199 = sadd.s32 %s198, 1
      %p202 = scmp.eq.s32.totalorder %s23, 1
      %p203 = scmp.ne.s32.totalorder %s198, %s200
      %p204 = scmp.eq.s32.totalorder %s23, 0
      %p205 = por %p203, %p204
      %p206 = scmp.ne.s32.totalorder %s198, %s200
      %p207 = scmp.eq.s32.totalorder %s28, 1
      %p208 = por %p206, %p207
      %p209 = scmp.ne.s32.totalorder %s200, %s201
      %p210 = scmp.eq.s32.totalorder %s28, 0
      %p211 = por %p209, %p210
      %p212 = scmp.ne.s32.totalorder %s200, %s201
      %p213 = scmp.eq.s32.totalorder %s29, 1
      %p214 = por %p212, %p213
      %p216 = scmp.ne.s32.totalorder %s201, %s215
      %p217 = scmp.eq.s32.totalorder %s29, 0
      %p218 = por %p216, %p217
      %s219 = ssub.s32 %s23, %s30
      %p220 = scmp.eq.s32.totalorder %s219, 0
      %s222 = sadd.s32 %s221, 1
      %s223 = scalar_select %p220, %s221, %s222
      %p226 = pneg %p220
      %p227 = scmp.eq.s32.totalorder %s23, 1
      %p228 = por %p226, %p227
      %p229 = scmp.ne.s32.totalorder %s221, %s224
      %p230 = scmp.eq.s32.totalorder %s23, 0
      %p231 = por %p229, %p230
      %p232 = scmp.ne.s32.totalorder %s221, %s224
      %p233 = scmp.eq.s32.totalorder %s28, 1
      %p234 = por %p232, %p233
      %p235 = scmp.ne.s32.totalorder %s224, %s225
      %p236 = scmp.eq.s32.totalorder %s28, 0
      %p237 = por %p235, %p236
      %p238 = scmp.ne.s32.totalorder %s224, %s225
      %p239 = scmp.eq.s32.totalorder %s29, 1
      %p240 = por %p238, %p239
      %p242 = scmp.ne.s32.totalorder %s225, %s241
      %p243 = scmp.eq.s32.totalorder %s29, 0
      %p244 = por %p242, %p243
      %p245 = scmp.le.s32.totalorder 1, %s23
      %p246 = scmp.lt.s32.totalorder %s23, 3
      %p247 = pnand %p245, %p246
      %p248 = pneg %p247
      // Predicated region
      $region9: #{tpu_custom_call.1} parent=5 // pred_check
        _
      $region10: #{tpu_custom_call.1} parent=5 // pred_check_branch
        %250 = sbr.rel (%p247) target = $region12
      $region11: #{tpu_custom_call.1} parent=5 // pred_region
        %s251 = ssub.s32 %s23, 1
        // Predicated region
        $region13: #{tpu_custom_call.1} parent=11 // pred_check
          %p252 = pneg %p148
        $region14: #{tpu_custom_call.1} parent=11 // pred_check_branch
          %254 = sbr.rel (%p252) target = $region16
        $region15: #{tpu_custom_call.1} parent=11 // pred_region
          _
        $region16: #{tpu_custom_call.1} parent=11 // pred_fallthru
          _
        // Predicated region
        $region17: #{tpu_custom_call.1} parent=11 // pred_check
          %p255 = pneg %p169
        $region18: #{tpu_custom_call.1} parent=11 // pred_check_branch
          %257 = sbr.rel (%p255) target = $region20
        $region19: #{tpu_custom_call.1} parent=11 // pred_region
          %s259 = ssub.s32 128, 128
          %260 = vsyncadd [#allocation6], %s259
          %s261 = sshll.u32 [#allocation7], 4
          %s262 = int_to_ptr.vmem [resolvable:$true] %s261
          %267 = dma.hbm_to_vmem [thread:$0]  %s5, 128, %s262, [#allocation6], 64, 64, 4
        $region20: #{tpu_custom_call.1} parent=11 // pred_fallthru
          _
        // Predicated region
        $region21: #{tpu_custom_call.1} parent=11 // pred_check
          %p268 = pneg %p190
        $region22: #{tpu_custom_call.1} parent=11 // pred_check_branch
          %270 = sbr.rel (%p268) target = $region24
        $region23: #{tpu_custom_call.1} parent=11 // pred_region
          _
        $region24: #{tpu_custom_call.1} parent=11 // pred_fallthru
          _
        // Predicated region
        $region25: #{tpu_custom_call.1} parent=11 // pred_check
          %p271 = pneg %p211
        $region26: #{tpu_custom_call.1} parent=11 // pred_check_branch
          %273 = sbr.rel (%p271) target = $region28
        $region27: #{tpu_custom_call.1} parent=11 // pred_region
          _
        $region28: #{tpu_custom_call.1} parent=11 // pred_fallthru
          _
      $region12: #{tpu_custom_call.1} parent=5 // pred_fallthru
        _
      %p274 = scmp.lt.s32.totalorder %s23, 2
      // Predicated region
      $region29: #{tpu_custom_call.1} parent=5 // pred_check
        %p275 = pneg %p274
      $region30: #{tpu_custom_call.1} parent=5 // pred_check_branch
        %277 = sbr.rel (%p275) target = $region32
      $region31: #{tpu_custom_call.1} parent=5 // pred_region
        // Predicated region
        $region33: #{tpu_custom_call.1} parent=31 // pred_check
          %p278 = pneg %p43
        $region34: #{tpu_custom_call.1} parent=31 // pred_check_branch
          %280 = sbr.rel (%p278) target = $region36
        $region35: #{tpu_custom_call.1} parent=31 // pred_region
          %p281 = scmp.lt.s32.totalorder %s23, 1
          %s282 = scalar_select %p281, %s23, 1
          %s283 = smul.addr %s282, 8
          %s284 = scalar_lea.vmem %s0, %s283
        $region36: #{tpu_custom_call.1} parent=31 // pred_fallthru
          _
        // Predicated region
        $region37: #{tpu_custom_call.1} parent=31 // pred_check
          %p285 = pneg %p69
        $region38: #{tpu_custom_call.1} parent=31 // pred_check_branch
          %287 = sbr.rel (%p285) target = $region40
        $region39: #{tpu_custom_call.1} parent=31 // pred_region
          %p288 = scmp.lt.s32.totalorder %s23, 1
          %s289 = scalar_select %p288, %s23, 1
          %s290 = smul.addr %s289, 4
          %s291 = scalar_lea.vmem %s1, %s290
        $region40: #{tpu_custom_call.1} parent=31 // pred_fallthru
          _
        // Predicated region
        $region41: #{tpu_custom_call.1} parent=31 // pred_check
          %p292 = pneg %p95
        $region42: #{tpu_custom_call.1} parent=31 // pred_check_branch
          %294 = sbr.rel (%p292) target = $region44
        $region43: #{tpu_custom_call.1} parent=31 // pred_region
          %s295 = sand.u32 %s85, 1
          %s296 = scalar_lea.sflag [#allocation3], %s295
          %s297 = sand.u32 %s85, 1
          %s298 = smul.addr %s297, 4
          %s299 = scalar_lea.vmem [#allocation2], %s298
          %s301 = ssub.s32 64, 64
          %302 = vsyncadd %s296, %s301
          %s303 = smul.addr %s23, 64
          %s304 = scalar_lea.hbm %s2, %s303
          %s306 = sshll.u32 %s299, 4
          %s307 = int_to_ptr.vmem [resolvable:$true] %s306
          %309 = dma.hbm_to_vmem [thread:$0]  %s304, 64, %s307, %s296
        $region44: #{tpu_custom_call.1} parent=31 // pred_fallthru
          _
        // Predicated region
        $region45: #{tpu_custom_call.1} parent=31 // pred_check
          %p310 = pneg %p121
        $region46: #{tpu_custom_call.1} parent=31 // pred_check_branch
          %312 = sbr.rel (%p310) target = $region48
        $region47: #{tpu_custom_call.1} parent=31 // pred_region
          %s313 = sand.u32 %s23, 1
          %s314 = scalar_lea.sflag [#allocation6], %s313
          %s315 = sand.u32 %s111, 1
          %s316 = smul.addr %s315, 4
          %s317 = scalar_lea.vmem [#allocation5], %s316
          %s319 = ssub.s32 64, 64
          %320 = vsyncadd %s314, %s319
          %s321 = smul.addr %s23, 64
          %s322 = scalar_lea.hbm %s3, %s321
          %s324 = sshll.u32 %s317, 4
          %s325 = int_to_ptr.vmem [resolvable:$true] %s324
          %327 = dma.hbm_to_vmem [thread:$0]  %s322, 64, %s325, %s314
        $region48: #{tpu_custom_call.1} parent=31 // pred_fallthru
          _
      $region32: #{tpu_custom_call.1} parent=5 // pred_fallthru
        _
      %p328 = scmp.le.s32.totalorder 1, %s23
      %p329 = scmp.lt.s32.totalorder %s23, 3
      %p330 = pnand %p328, %p329
      %p331 = pneg %p330
      // Predicated region
      $region49: #{tpu_custom_call.1} parent=5 // pred_check
        _
      $region50: #{tpu_custom_call.1} parent=5 // pred_check_branch
        %333 = sbr.rel (%p330) target = $region52
      $region51: #{tpu_custom_call.1} parent=5 // pred_region
        %s334 = ssub.s32 %s23, 1
        %s335 = sand.u32 %s88, 1
        %s336 = scalar_lea.sflag [#allocation3], %s335
        %s337 = sand.u32 %s88, 1
        %s338 = smul.addr %s337, 4
        %s339 = scalar_lea.vmem [#allocation2], %s338
        // Predicated region
        $region53: #{tpu_custom_call.1} parent=51 // pred_check
          %p340 = pneg %p101
        $region54: #{tpu_custom_call.1} parent=51 // pred_check_branch
          %342 = sbr.rel (%p340) target = $region56
        $region55: #{tpu_custom_call.1} parent=51 // pred_region
          %343 = dma.done %s336, 64
        $region56: #{tpu_custom_call.1} parent=51 // pred_fallthru
          _
        %s344 = sand.u32 %s28, 1
        %s345 = scalar_lea.sflag [#allocation6], %s344
        %s346 = sand.u32 %s114, 1
        %s347 = smul.addr %s346, 4
        %s348 = scalar_lea.vmem [#allocation5], %s347
        // Predicated region
        $region57: #{tpu_custom_call.1} parent=51 // pred_check
          %p349 = pneg %p127
        $region58: #{tpu_custom_call.1} parent=51 // pred_check_branch
          %351 = sbr.rel (%p349) target = $region60
        $region59: #{tpu_custom_call.1} parent=51 // pred_region
          %352 = dma.done %s345, 64
        $region60: #{tpu_custom_call.1} parent=51 // pred_fallthru
          _
        // Predicated region
        $region61: #{tpu_custom_call.1} parent=51 // pred_check
          %p353 = pneg %p169
        $region62: #{tpu_custom_call.1} parent=51 // pred_check_branch
          %355 = sbr.rel (%p353) target = $region64
        $region63: #{tpu_custom_call.1} parent=51 // pred_region
          %356 = dma.done [#allocation6], 128
        $region64: #{tpu_custom_call.1} parent=51 // pred_fallthru
          _
        %p357 = scmp.lt.s32.totalorder %s28, 1
        %s358 = scalar_select %p357, %s28, 1
        %s359 = smul.addr %s358, 8
        %s360 = scalar_lea.vmem %s0, %s359
        %p361 = pneg %p49
        %p362 = pneg %p46
        %p363 = scmp.lt.s32.totalorder %s28, 1
        %s364 = scalar_select %p363, %s28, 1
        %s365 = smul.addr %s364, 4
        %s366 = scalar_lea.vmem %s1, %s365
        %p367 = pneg %p75
        %p368 = pneg %p72
        %s369 = sand.u32 %s88, 1
        %s370 = scalar_lea.sflag [#allocation3], %s369
        %s371 = sand.u32 %s88, 1
        %s372 = smul.addr %s371, 4
        %s373 = scalar_lea.vmem [#allocation2], %s372
        %p374 = pneg %p101
        %p375 = pneg %p98
        %s376 = sand.u32 %s28, 1
        %s377 = scalar_lea.sflag [#allocation6], %s376
        %s378 = sand.u32 %s114, 1
        %s379 = smul.addr %s378, 4
        %s380 = scalar_lea.vmem [#allocation5], %s379
        %p381 = pneg %p127
        %p382 = pneg %p124
        %p383 = pneg %p148
        %p384 = pneg %p145
        %p385 = pneg %p169
        %p386 = pneg %p166
        %p387 = pneg %p190
        %p388 = pneg %p187
        %p389 = pneg %p211
        %p390 = pneg %p208
        %p391 = pneg %p237
        %p392 = pneg %p234
        %s393 = sand.u32 %s224, 1
        %s394 = scalar_lea.sflag [#allocation4], %s393
        %s395 = sand.u32 %s224, 1
        %s396 = smul.addr %s395, 8
        %s397 = scalar_lea.vmem [#allocation8], %s396
        %p398 = scmp.lt.s32.totalorder %s28, 1
        %s399 = scalar_select %p398, %s28, 1
        %s400 = smul.addr %s399, 8
        %s401 = scalar_lea.vmem %s0, %s400
        %p402 = scmp.lt.s32.totalorder %s28, 1
        %s403 = scalar_select %p402, %s28, 1
        %s404 = smul.addr %s403, 4
        %s405 = scalar_lea.vmem %s1, %s404
        %v406 = vld [vmem:[%s7] sm:$0xff]
        %v407 = vld [vmem:[%s7 + $0x8] sm:$0xff]
        %v408 = vld [vmem:[%s405] sm:$0xf]
        %v409 = vunpack.c.l.bf16 %v408
        %v410 = vmul.f32 %v409, %v409
        %vm411 = vcmask 130048
        %v412 = vsel %vm411, %v410, 0.0
        %413 = vadd.xlane.f32.xlu0 %v412
        %v414 = vpop.xlane.xlu0 %413
        %v415 = vmax.f32 %v414, 1e-24
        %v416 = vrsqrt.pop %v415
        %v417 = vmul.f32 %v409, %v416
        %v418 = vld [vmem:[%s339] sm:$0xf]
        %v419 = vunpack.c.l.bf16 %v418
        %v420 = vmul.f32 %v419, %v419
        %v421 = vsel %vm411, %v420, 0.0
        %422 = vadd.xlane.f32.xlu0 %v421
        %v423 = vpop.xlane.xlu0 %422
        %v424 = vmax.f32 %v423, 1e-24
        %v425 = vrsqrt.pop %v424
        %v426 = vmul.f32 %v419, %v425
        %v427 = vld [vmem:[%s348] sm:$0xf]
        %v428 = vunpack.c.l.bf16 %v427
        %v429 = vmul.f32 %v428, %v428
        %v430 = vsel %vm411, %v429, 0.0
        %431 = vadd.xlane.f32.xlu0 %v430
        %v432 = vpop.xlane.xlu0 %431
        %v433 = vmax.f32 %v432, 1e-24
        %v434 = vrsqrt.pop %v433
        %v435 = vmul.f32 %v428, %v434
        %v436 = vld [vmem:[%s4] sm:$0xf]
        %v437 = vld [vmem:[%s4 + $0x4] sm:$0xf]
        %v438 = vunpack.c.l.bf16 %v436
        %v439 = vunpack.c.l.bf16 %v437
        %441 = vset.pattern.permute.xlu0 0
        %442 = vperm.xlu0 %441, %v417
        %v443 = vpop.permute.xlu0 %442
        %v445 = vlaneseq
        %v446 = vshrl.u32 %v445, 7
        %v447 = vsub.s32 0, %v446
        %v448 = vrot.slane %v438, %v447
        %v449 = vmul.f32 %v443, %v448
        %v450 = vlaneseq
        %v451 = vshrl.u32 %v450, 7
        %v452 = vsub.s32 4, %v451
        %v453 = vrot.slane %v406, %v452
        %v454 = vadd.f32 %v453, %v449
        %455 = vset.pattern.permute.xlu0 1
        %456 = vperm.xlu0 %455, %v417
        %v457 = vpop.permute.xlu0 %456
        %v459 = vlaneseq
        %v460 = vshrl.u32 %v459, 7
        %v461 = vsub.s32 1, %v460
        %v462 = vrot.slane %v438, %v461
        %v463 = vmul.f32 %v457, %v462
        %v464 = vadd.f32 %v454, %v463
        %465 = vset.pattern.permute.xlu0 2
        %466 = vperm.xlu0 %465, %v417
        %v467 = vpop.permute.xlu0 %466
        %v469 = vlaneseq
        %v470 = vshrl.u32 %v469, 7
        %v471 = vsub.s32 2, %v470
        %v472 = vrot.slane %v438, %v471
        %v473 = vmul.f32 %v467, %v472
        %v474 = vadd.f32 %v464, %v473
        %475 = vset.pattern.permute.xlu0 3
        %476 = vperm.xlu0 %475, %v417
        %v477 = vpop.permute.xlu0 %476
        %v479 = vlaneseq
        %v480 = vshrl.u32 %v479, 7
        %v481 = vsub.s32 3, %v480
        %v482 = vrot.slane %v438, %v481
        %v483 = vmul.f32 %v477, %v482
        %v484 = vadd.f32 %v474, %v483
        %485 = vset.pattern.permute.xlu0 4
        %486 = vperm.xlu0 %485, %v417
        %v487 = vpop.permute.xlu0 %486
        %v489 = vlaneseq
        %v490 = vshrl.u32 %v489, 7
        %v491 = vsub.s32 4, %v490
        %v492 = vrot.slane %v438, %v491
        %v493 = vmul.f32 %v487, %v492
        %v494 = vadd.f32 %v484, %v493
        %495 = vset.pattern.permute.xlu0 5
        %496 = vperm.xlu0 %495, %v417
        %v497 = vpop.permute.xlu0 %496
        %v499 = vlaneseq
        %v500 = vshrl.u32 %v499, 7
        %v501 = vsub.s32 5, %v500
        %v502 = vrot.slane %v438, %v501
        %v503 = vmul.f32 %v497, %v502
        %v504 = vadd.f32 %v494, %v503
        %505 = vset.pattern.permute.xlu0 6
        %506 = vperm.xlu0 %505, %v417
        %v507 = vpop.permute.xlu0 %506
        %v509 = vlaneseq
        %v510 = vshrl.u32 %v509, 7
        %v511 = vsub.s32 6, %v510
        %v512 = vrot.slane %v438, %v511
        %v513 = vmul.f32 %v507, %v512
        %v514 = vadd.f32 %v504, %v513
        %515 = vset.pattern.permute.xlu0 7
        %516 = vperm.xlu0 %515, %v417
        %v517 = vpop.permute.xlu0 %516
        %v519 = vlaneseq
        %v520 = vshrl.u32 %v519, 7
        %v521 = vsub.s32 7, %v520
        %v522 = vrot.slane %v438, %v521
        %v523 = vmul.f32 %v517, %v522
        %v524 = vadd.f32 %v514, %v523
        %525 = vset.pattern.permute.xlu0 8
        %526 = vperm.xlu0 %525, %v417
        %v527 = vpop.permute.xlu0 %526
        %v529 = vlaneseq
        %v530 = vshrl.u32 %v529, 7
        %v531 = vsub.s32 0, %v530
        %v532 = vrot.slane %v439, %v531
        %v533 = vmul.f32 %v527, %v532
        %v534 = vadd.f32 %v524, %v533
        %535 = vset.pattern.permute.xlu0 9
        %536 = vperm.xlu0 %535, %v417
        %v537 = vpop.permute.xlu0 %536
        %v539 = vlaneseq
        %v540 = vshrl.u32 %v539, 7
        %v541 = vsub.s32 1, %v540
        %v542 = vrot.slane %v439, %v541
        %v543 = vmul.f32 %v537, %v542
        %v544 = vadd.f32 %v534, %v543
        %545 = vset.pattern.permute.xlu0 10
        %546 = vperm.xlu0 %545, %v417
        %v547 = vpop.permute.xlu0 %546
        %v549 = vlaneseq
        %v550 = vshrl.u32 %v549, 7
        %v551 = vsub.s32 2, %v550
        %v552 = vrot.slane %v439, %v551
        %v553 = vmul.f32 %v547, %v552
        %v554 = vadd.f32 %v544, %v553
        %555 = vset.pattern.permute.xlu0 11
        %556 = vperm.xlu0 %555, %v417
        %v557 = vpop.permute.xlu0 %556
        %v559 = vlaneseq
        %v560 = vshrl.u32 %v559, 7
        %v561 = vsub.s32 3, %v560
        %v562 = vrot.slane %v439, %v561
        %v563 = vmul.f32 %v557, %v562
        %v564 = vadd.f32 %v554, %v563
        %565 = vset.pattern.permute.xlu0 12
        %566 = vperm.xlu0 %565, %v417
        %v567 = vpop.permute.xlu0 %566
        %v569 = vlaneseq
        %v570 = vshrl.u32 %v569, 7
        %v571 = vsub.s32 4, %v570
        %v572 = vrot.slane %v439, %v571
        %v573 = vmul.f32 %v567, %v572
        %v574 = vadd.f32 %v564, %v573
        %575 = vset.pattern.permute.xlu0 13
        %576 = vperm.xlu0 %575, %v417
        %v577 = vpop.permute.xlu0 %576
        %v579 = vlaneseq
        %v580 = vshrl.u32 %v579, 7
        %v581 = vsub.s32 5, %v580
        %v582 = vrot.slane %v439, %v581
        %v583 = vmul.f32 %v577, %v582
        %v584 = vadd.f32 %v574, %v583
        %585 = vset.pattern.permute.xlu0 14
        %586 = vperm.xlu0 %585, %v417
        %v587 = vpop.permute.xlu0 %586
        %v589 = vlaneseq
        %v590 = vshrl.u32 %v589, 7
        %v591 = vsub.s32 6, %v590
        %v592 = vrot.slane %v439, %v591
        %v593 = vmul.f32 %v587, %v592
        %v594 = vadd.f32 %v584, %v593
        %595 = vset.pattern.permute.xlu0 15
        %596 = vperm.xlu0 %595, %v417
        %v597 = vpop.permute.xlu0 %596
        %v599 = vlaneseq
        %v600 = vshrl.u32 %v599, 7
        %v601 = vsub.s32 7, %v600
        %v602 = vrot.slane %v439, %v601
        %v603 = vmul.f32 %v597, %v602
        %v604 = vadd.f32 %v594, %v603
        %v605 = vld [vmem:[#allocation7] sm:$0xf]
        %v606 = vld [vmem:[#allocation7 + $0x4] sm:$0xf]
        %v607 = vunpack.c.l.bf16 %v605
        %v608 = vunpack.c.l.bf16 %v606
        %610 = vset.pattern.permute.xlu0 0
        %611 = vperm.xlu0 %610, %v426
        %v612 = vpop.permute.xlu0 %611
        %v614 = vlaneseq
        %v615 = vshrl.u32 %v614, 7
        %v616 = vsub.s32 0, %v615
        %v617 = vrot.slane %v607, %v616
        %v618 = vmul.f32 %v612, %v617
        %v619 = vadd.f32 %v604, %v618
        %620 = vset.pattern.permute.xlu0 1
        %621 = vperm.xlu0 %620, %v426
        %v622 = vpop.permute.xlu0 %621
        %v624 = vlaneseq
        %v625 = vshrl.u32 %v624, 7
        %v626 = vsub.s32 1, %v625
        %v627 = vrot.slane %v607, %v626
        %v628 = vmul.f32 %v622, %v627
        %v629 = vadd.f32 %v619, %v628
        %630 = vset.pattern.permute.xlu0 2
        %631 = vperm.xlu0 %630, %v426
        %v632 = vpop.permute.xlu0 %631
        %v634 = vlaneseq
        %v635 = vshrl.u32 %v634, 7
        %v636 = vsub.s32 2, %v635
        %v637 = vrot.slane %v607, %v636
        %v638 = vmul.f32 %v632, %v637
        %v639 = vadd.f32 %v629, %v638
        %640 = vset.pattern.permute.xlu0 3
        %641 = vperm.xlu0 %640, %v426
        %v642 = vpop.permute.xlu0 %641
        %v644 = vlaneseq
        %v645 = vshrl.u32 %v644, 7
        %v646 = vsub.s32 3, %v645
        %v647 = vrot.slane %v607, %v646
        %v648 = vmul.f32 %v642, %v647
        %v649 = vadd.f32 %v639, %v648
        %650 = vset.pattern.permute.xlu0 4
        %651 = vperm.xlu0 %650, %v426
        %v652 = vpop.permute.xlu0 %651
        %v654 = vlaneseq
        %v655 = vshrl.u32 %v654, 7
        %v656 = vsub.s32 4, %v655
        %v657 = vrot.slane %v607, %v656
        %v658 = vmul.f32 %v652, %v657
        %v659 = vadd.f32 %v649, %v658
        %660 = vset.pattern.permute.xlu0 5
        %661 = vperm.xlu0 %660, %v426
        %v662 = vpop.permute.xlu0 %661
        %v664 = vlaneseq
        %v665 = vshrl.u32 %v664, 7
        %v666 = vsub.s32 5, %v665
        %v667 = vrot.slane %v607, %v666
        %v668 = vmul.f32 %v662, %v667
        %v669 = vadd.f32 %v659, %v668
        %670 = vset.pattern.permute.xlu0 6
        %671 = vperm.xlu0 %670, %v426
        %v672 = vpop.permute.xlu0 %671
        %v674 = vlaneseq
        %v675 = vshrl.u32 %v674, 7
        %v676 = vsub.s32 6, %v675
        %v677 = vrot.slane %v607, %v676
        %v678 = vmul.f32 %v672, %v677
        %v679 = vadd.f32 %v669, %v678
        %680 = vset.pattern.permute.xlu0 7
        %681 = vperm.xlu0 %680, %v426
        %v682 = vpop.permute.xlu0 %681
        %v684 = vlaneseq
        %v685 = vshrl.u32 %v684, 7
        %v686 = vsub.s32 7, %v685
        %v687 = vrot.slane %v607, %v686
        %v688 = vmul.f32 %v682, %v687
        %v689 = vadd.f32 %v679, %v688
        %690 = vset.pattern.permute.xlu0 8
        %691 = vperm.xlu0 %690, %v426
        %v692 = vpop.permute.xlu0 %691
        %v694 = vlaneseq
        %v695 = vshrl.u32 %v694, 7
        %v696 = vsub.s32 0, %v695
        %v697 = vrot.slane %v608, %v696
        %v698 = vmul.f32 %v692, %v697
        %v699 = vadd.f32 %v689, %v698
        %700 = vset.pattern.permute.xlu0 9
        %701 = vperm.xlu0 %700, %v426
        %v702 = vpop.permute.xlu0 %701
        %v704 = vlaneseq
        %v705 = vshrl.u32 %v704, 7
        %v706 = vsub.s32 1, %v705
        %v707 = vrot.slane %v608, %v706
        %v708 = vmul.f32 %v702, %v707
        %v709 = vadd.f32 %v699, %v708
        %710 = vset.pattern.permute.xlu0 10
        %711 = vperm.xlu0 %710, %v426
        %v712 = vpop.permute.xlu0 %711
        %v714 = vlaneseq
        %v715 = vshrl.u32 %v714, 7
        %v716 = vsub.s32 2, %v715
        %v717 = vrot.slane %v608, %v716
        %v718 = vmul.f32 %v712, %v717
        %v719 = vadd.f32 %v709, %v718
        %720 = vset.pattern.permute.xlu0 11
        %721 = vperm.xlu0 %720, %v426
        %v722 = vpop.permute.xlu0 %721
        %v724 = vlaneseq
        %v725 = vshrl.u32 %v724, 7
        %v726 = vsub.s32 3, %v725
        %v727 = vrot.slane %v608, %v726
        %v728 = vmul.f32 %v722, %v727
        %v729 = vadd.f32 %v719, %v728
        %730 = vset.pattern.permute.xlu0 12
        %731 = vperm.xlu0 %730, %v426
        %v732 = vpop.permute.xlu0 %731
        %v734 = vlaneseq
        %v735 = vshrl.u32 %v734, 7
        %v736 = vsub.s32 4, %v735
        %v737 = vrot.slane %v608, %v736
        %v738 = vmul.f32 %v732, %v737
        %v739 = vadd.f32 %v729, %v738
        %740 = vset.pattern.permute.xlu0 13
        %741 = vperm.xlu0 %740, %v426
        %v742 = vpop.permute.xlu0 %741
        %v744 = vlaneseq
        %v745 = vshrl.u32 %v744, 7
        %v746 = vsub.s32 5, %v745
        %v747 = vrot.slane %v608, %v746
        %v748 = vmul.f32 %v742, %v747
        %v749 = vadd.f32 %v739, %v748
        %750 = vset.pattern.permute.xlu0 14
        %751 = vperm.xlu0 %750, %v426
        %v752 = vpop.permute.xlu0 %751
        %v754 = vlaneseq
        %v755 = vshrl.u32 %v754, 7
        %v756 = vsub.s32 6, %v755
        %v757 = vrot.slane %v608, %v756
        %v758 = vmul.f32 %v752, %v757
        %v759 = vadd.f32 %v749, %v758
        %760 = vset.pattern.permute.xlu0 15
        %761 = vperm.xlu0 %760, %v426
        %v762 = vpop.permute.xlu0 %761
        %v764 = vlaneseq
        %v765 = vshrl.u32 %v764, 7
        %v766 = vsub.s32 7, %v765
        %v767 = vrot.slane %v608, %v766
        %v768 = vmul.f32 %v762, %v767
        %v769 = vadd.f32 %v759, %v768
        %v770 = vld [vmem:[%s6] sm:$0xf]
        %v771 = vld [vmem:[%s6 + $0x4] sm:$0xf]
        %v772 = vunpack.c.l.bf16 %v770
        %v773 = vunpack.c.l.bf16 %v771
        %775 = vset.pattern.permute.xlu0 0
        %776 = vperm.xlu0 %775, %v435
        %v777 = vpop.permute.xlu0 %776
        %v779 = vlaneseq
        %v780 = vshrl.u32 %v779, 7
        %v781 = vsub.s32 0, %v780
        %v782 = vrot.slane %v772, %v781
        %v783 = vmul.f32 %v777, %v782
        %v784 = vadd.f32 %v769, %v783
        %785 = vset.pattern.permute.xlu0 1
        %786 = vperm.xlu0 %785, %v435
        %v787 = vpop.permute.xlu0 %786
        %v789 = vlaneseq
        %v790 = vshrl.u32 %v789, 7
        %v791 = vsub.s32 1, %v790
        %v792 = vrot.slane %v772, %v791
        %v793 = vmul.f32 %v787, %v792
        %v794 = vadd.f32 %v784, %v793
        %795 = vset.pattern.permute.xlu0 2
        %796 = vperm.xlu0 %795, %v435
        %v797 = vpop.permute.xlu0 %796
        %v799 = vlaneseq
        %v800 = vshrl.u32 %v799, 7
        %v801 = vsub.s32 2, %v800
        %v802 = vrot.slane %v772, %v801
        %v803 = vmul.f32 %v797, %v802
        %v804 = vadd.f32 %v794, %v803
        %805 = vset.pattern.permute.xlu0 3
        %806 = vperm.xlu0 %805, %v435
        %v807 = vpop.permute.xlu0 %806
        %v809 = vlaneseq
        %v810 = vshrl.u32 %v809, 7
        %v811 = vsub.s32 3, %v810
        %v812 = vrot.slane %v772, %v811
        %v813 = vmul.f32 %v807, %v812
        %v814 = vadd.f32 %v804, %v813
        %815 = vset.pattern.permute.xlu0 4
        %816 = vperm.xlu0 %815, %v435
        %v817 = vpop.permute.xlu0 %816
        %v819 = vlaneseq
        %v820 = vshrl.u32 %v819, 7
        %v821 = vsub.s32 4, %v820
        %v822 = vrot.slane %v772, %v821
        %v823 = vmul.f32 %v817, %v822
        %v824 = vadd.f32 %v814, %v823
        %825 = vset.pattern.permute.xlu0 5
        %826 = vperm.xlu0 %825, %v435
        %v827 = vpop.permute.xlu0 %826
        %v829 = vlaneseq
        %v830 = vshrl.u32 %v829, 7
        %v831 = vsub.s32 5, %v830
        %v832 = vrot.slane %v772, %v831
        %v833 = vmul.f32 %v827, %v832
        %v834 = vadd.f32 %v824, %v833
        %835 = vset.pattern.permute.xlu0 6
        %836 = vperm.xlu0 %835, %v435
        %v837 = vpop.permute.xlu0 %836
        %v839 = vlaneseq
        %v840 = vshrl.u32 %v839, 7
        %v841 = vsub.s32 6, %v840
        %v842 = vrot.slane %v772, %v841
        %v843 = vmul.f32 %v837, %v842
        %v844 = vadd.f32 %v834, %v843
        %845 = vset.pattern.permute.xlu0 7
        %846 = vperm.xlu0 %845, %v435
        %v847 = vpop.permute.xlu0 %846
        %v849 = vlaneseq
        %v850 = vshrl.u32 %v849, 7
        %v851 = vsub.s32 7, %v850
        %v852 = vrot.slane %v772, %v851
        %v853 = vmul.f32 %v847, %v852
        %v854 = vadd.f32 %v844, %v853
        %855 = vset.pattern.permute.xlu0 8
        %856 = vperm.xlu0 %855, %v435
        %v857 = vpop.permute.xlu0 %856
        %v859 = vlaneseq
        %v860 = vshrl.u32 %v859, 7
        %v861 = vsub.s32 0, %v860
        %v862 = vrot.slane %v773, %v861
        %v863 = vmul.f32 %v857, %v862
        %v864 = vadd.f32 %v854, %v863
        %865 = vset.pattern.permute.xlu0 9
        %866 = vperm.xlu0 %865, %v435
        %v867 = vpop.permute.xlu0 %866
        %v869 = vlaneseq
        %v870 = vshrl.u32 %v869, 7
        %v871 = vsub.s32 1, %v870
        %v872 = vrot.slane %v773, %v871
        %v873 = vmul.f32 %v867, %v872
        %v874 = vadd.f32 %v864, %v873
        %875 = vset.pattern.permute.xlu0 10
        %876 = vperm.xlu0 %875, %v435
        %v877 = vpop.permute.xlu0 %876
        %v879 = vlaneseq
        %v880 = vshrl.u32 %v879, 7
        %v881 = vsub.s32 2, %v880
        %v882 = vrot.slane %v773, %v881
        %v883 = vmul.f32 %v877, %v882
        %v884 = vadd.f32 %v874, %v883
        %885 = vset.pattern.permute.xlu0 11
        %886 = vperm.xlu0 %885, %v435
        %v887 = vpop.permute.xlu0 %886
        %v889 = vlaneseq
        %v890 = vshrl.u32 %v889, 7
        %v891 = vsub.s32 3, %v890
        %v892 = vrot.slane %v773, %v891
        %v893 = vmul.f32 %v887, %v892
        %v894 = vadd.f32 %v884, %v893
        %895 = vset.pattern.permute.xlu0 12
        %896 = vperm.xlu0 %895, %v435
        %v897 = vpop.permute.xlu0 %896
        %v899 = vlaneseq
        %v900 = vshrl.u32 %v899, 7
        %v901 = vsub.s32 4, %v900
        %v902 = vrot.slane %v773, %v901
        %v903 = vmul.f32 %v897, %v902
        %v904 = vadd.f32 %v894, %v903
        %905 = vset.pattern.permute.xlu0 13
        %906 = vperm.xlu0 %905, %v435
        %v907 = vpop.permute.xlu0 %906
        %v909 = vlaneseq
        %v910 = vshrl.u32 %v909, 7
        %v911 = vsub.s32 5, %v910
        %v912 = vrot.slane %v773, %v911
        %v913 = vmul.f32 %v907, %v912
        %v914 = vadd.f32 %v904, %v913
        %915 = vset.pattern.permute.xlu0 14
        %916 = vperm.xlu0 %915, %v435
        %v917 = vpop.permute.xlu0 %916
        %v919 = vlaneseq
        %v920 = vshrl.u32 %v919, 7
        %v921 = vsub.s32 6, %v920
        %v922 = vrot.slane %v773, %v921
        %v923 = vmul.f32 %v917, %v922
        %v924 = vadd.f32 %v914, %v923
        %925 = vset.pattern.permute.xlu0 15
        %926 = vperm.xlu0 %925, %v435
        %v927 = vpop.permute.xlu0 %926
        %v929 = vlaneseq
        %v930 = vshrl.u32 %v929, 7
        %v931 = vsub.s32 7, %v930
        %v932 = vrot.slane %v773, %v931
        %v933 = vmul.f32 %v927, %v932
        %v934 = vadd.f32 %v924, %v933
        %v935 = vlaneseq
        %v936 = vand.u32 %v935, 127
        %vm937 = vcmp.lt.s32.totalorder %v936, 32
        %v938 = vsel %vm937, 1, 0
        %vm939 = vcmp.eq.s32.totalorder %v938, 1
        %v940 = vsel %vm939, %v934, 0.0
        %941 = vadd.xlane.f32.xlu0 %v940
        %v942 = vpop.xlane.xlu0 %941
        %v943 = vmul.f32 %v942, 0.03125
        %v944 = vsub.f32 %v934, %v943
        %v945 = vsel %vm939, %v944, 0.0
        %v946 = vmul.f32 %v945, %v945
        %947 = vadd.xlane.f32.xlu0 %v946
        %v948 = vpop.xlane.xlu0 %947
        %v949 = vmul.f32 %v948, 0.03125
        %v950 = vadd.f32 %v949, 1e-05
        %v951 = vrsqrt.pop %v950
        %v952 = vmul.f32 %v945, %v951
        %v953 = vlaneseq
        %v954 = vshrl.u32 %v953, 7
        %v955 = vsub.s32 6, %v954
        %v956 = vrot.slane %v406, %v955
        %v957 = vmul.f32 %v952, %v956
        %v958 = vlaneseq
        %v959 = vshrl.u32 %v958, 7
        %v960 = vsub.s32 7, %v959
        %v961 = vrot.slane %v406, %v960
        %v962 = vadd.f32 %v957, %v961
        %v963 = vld [vmem:[%s401] sm:$0xff]
        %965 = vset.pattern.permute.xlu0 0
        %966 = vperm.xlu0 %965, %v963
        %v967 = vpop.permute.xlu0 %966
        %v969 = vlaneseq
        %v970 = vshrl.u32 %v969, 7
        %v971 = vsub.s32 0, %v970
        %v972 = vrot.slane %v406, %v971
        %v973 = vmul.f32 %v967, %v972
        %v974 = vlaneseq
        %v975 = vshrl.u32 %v974, 7
        %v976 = vsub.s32 5, %v975
        %v977 = vrot.slane %v406, %v976
        %v978 = vadd.f32 %v977, %v973
        %979 = vset.pattern.permute.xlu0 1
        %980 = vperm.xlu0 %979, %v963
        %v981 = vpop.permute.xlu0 %980
        %v983 = vlaneseq
        %v984 = vshrl.u32 %v983, 7
        %v985 = vsub.s32 1, %v984
        %v986 = vrot.slane %v406, %v985
        %v987 = vmul.f32 %v981, %v986
        %v988 = vadd.f32 %v978, %v987
        %989 = vset.pattern.permute.xlu0 2
        %990 = vperm.xlu0 %989, %v963
        %v991 = vpop.permute.xlu0 %990
        %v993 = vlaneseq
        %v994 = vshrl.u32 %v993, 7
        %v995 = vsub.s32 2, %v994
        %v996 = vrot.slane %v406, %v995
        %v997 = vmul.f32 %v991, %v996
        %v998 = vadd.f32 %v988, %v997
        %999 = vset.pattern.permute.xlu0 3
        %1000 = vperm.xlu0 %999, %v963
        %v1001 = vpop.permute.xlu0 %1000
        %v1003 = vlaneseq
        %v1004 = vshrl.u32 %v1003, 7
        %v1005 = vsub.s32 3, %v1004
        %v1006 = vrot.slane %v406, %v1005
        %v1007 = vmul.f32 %v1001, %v1006
        %v1008 = vadd.f32 %v998, %v1007
        %v1009 = vsel %vm939, %v1008, 0.0
        %1010 = vadd.xlane.f32.xlu0 %v1009
        %v1011 = vpop.xlane.xlu0 %1010
        %v1012 = vmul.f32 %v1011, 0.03125
        %v1013 = vsub.f32 %v1008, %v1012
        %v1014 = vsel %vm939, %v1013, 0.0
        %v1015 = vmul.f32 %v1014, %v1014
        %1016 = vadd.xlane.f32.xlu0 %v1015
        %v1017 = vpop.xlane.xlu0 %1016
        %v1018 = vmul.f32 %v1017, 0.03125
        %v1019 = vadd.f32 %v1018, 1e-05
        %v1020 = vrsqrt.pop %v1019
        %v1021 = vmul.f32 %v1014, %v1020
        %v1022 = vlaneseq
        %v1023 = vshrl.u32 %v1022, 7
        %v1024 = vsub.s32 0, %v1023
        %v1025 = vrot.slane %v407, %v1024
        %v1026 = vmul.f32 %v1021, %v1025
        %v1027 = vlaneseq
        %v1028 = vshrl.u32 %v1027, 7
        %v1029 = vsub.s32 1, %v1028
        %v1030 = vrot.slane %v407, %v1029
        %v1031 = vadd.f32 %v1026, %v1030
        %v1032 = vadd.f32 %v962, %v1031
        %1033 = vst [vmem:[%s397] sm:$0xff] %v1032
        %s1034 = sand.u32 %s224, 1
        %s1035 = scalar_lea.sflag [#allocation4], %s1034
        %s1036 = sand.u32 %s224, 1
        %s1037 = smul.addr %s1036, 8
        %s1038 = scalar_lea.vmem [#allocation8], %s1037
        // Predicated region
        $region65: #{tpu_custom_call.1} parent=51 // pred_check
          %p1039 = pneg %p234
        $region66: #{tpu_custom_call.1} parent=51 // pred_check_branch
          %1041 = sbr.rel (%p1039) target = $region68
        $region67: #{tpu_custom_call.1} parent=51 // pred_region
          %s1043 = ssub.s32 128, 128
          %1044 = vsyncadd %s1035, %s1043
          %s1045 = smul.addr %s28, 128
          %s1046 = scalar_lea.hbm %s8, %s1045
          %s1048 = sshll.u32 %s1038, 4
          %s1049 = int_to_ptr.vmem [resolvable:$true] %s1048
          %1051 = dma.vmem_to_hbm [thread:$0]  %s1049, 128, %s1046, %s1035
        $region68: #{tpu_custom_call.1} parent=51 // pred_fallthru
          _
      $region52: #{tpu_custom_call.1} parent=5 // pred_fallthru
        _
      %p1052 = scmp.le.s32.totalorder 2, %s23
      // Predicated region
      $region69: #{tpu_custom_call.1} parent=5 // pred_check
        %p1053 = pneg %p1052
      $region70: #{tpu_custom_call.1} parent=5 // pred_check_branch
        %1055 = sbr.rel (%p1053) target = $region72
      $region71: #{tpu_custom_call.1} parent=5 // pred_region
        %s1056 = ssub.s32 %s23, 2
        // Predicated region
        $region73: #{tpu_custom_call.1} parent=71 // pred_check
          %p1057 = pneg %p240
        $region74: #{tpu_custom_call.1} parent=71 // pred_check_branch
          %1059 = sbr.rel (%p1057) target = $region76
        $region75: #{tpu_custom_call.1} parent=71 // pred_region
          %s1060 = sand.u32 %s225, 1
          %s1061 = scalar_lea.sflag [#allocation4], %s1060
          %s1062 = sand.u32 %s225, 1
          %s1063 = smul.addr %s1062, 8
          %s1064 = scalar_lea.vmem [#allocation8], %s1063
          %1065 = dma.done %s1061, 128
        $region76: #{tpu_custom_call.1} parent=71 // pred_fallthru
          _
      $region72: #{tpu_custom_call.1} parent=5 // pred_fallthru
        _
    $region6: #{tpu_custom_call.1} parent=1 // loop_footer
      %s27 = sadd.s32 1, %s23
    $region7: #{tpu_custom_call.1} parent=1 // loop_footer_branch
      %22 = sbr.rel target = $region3
    $region8: #{tpu_custom_call.1} parent=1 // loop_exit
      _
    %1066 = vsyncpa [#allocation3], 1
    %s1067 = scalar_lea.sflag [#allocation3], 1
    %1068 = vsyncpa %s1067, 1
    %1069 = vsyncpa [#allocation6], 1
    %s1070 = scalar_lea.sflag [#allocation6], 1
    %1071 = vsyncpa %s1070, 1
    %1072 = vsyncpa [#allocation4], 1
    %s1073 = scalar_lea.sflag [#allocation4], 1
    %1074 = vsyncpa %s1073, 1

</llo_original>
